<compile_context>
chip_gen: v7x
topology: tpu7x:2x2x1
jax: 0.10.0
libtpu: 0.0.40
codegen_flags: <defaults>
</compile_context>

<pallas_src>
import math

import jax
import jax.numpy as jnp
from jax.experimental import pallas as pl
from jax.experimental.pallas import tpu as pltpu

IMAGENET_MEAN = jnp.array([0.485, 0.456, 0.406], jnp.float32)
IMAGENET_STD = jnp.array([0.229, 0.224, 0.225], jnp.float32)


def _round_up(x, m):
    return (x + m - 1) // m * m


def _choose_tm(mp):
    """Largest M tile that still leaves >=2 blocks on the parallel M axis."""
    for cand in (512, 256, 128):
        if mp % cand == 0 and mp // cand >= 2:
            return cand
    return mp


# ----------------------------------------------------------------------------
# Pallas kernels
# ----------------------------------------------------------------------------
def _make_matmul_kernel(relu: bool, has_res: bool):
    """Single-shot matmul (full K in VMEM) with fused bias, residual add, ReLU."""

    def kernel(x_ref, w_ref, b_ref, *rest):
        if has_res:
            r_ref, o_ref = rest
        else:
            (o_ref,) = rest
        acc = jnp.dot(x_ref[...], w_ref[...],
                      preferred_element_type=jnp.float32)   # MXU, f32 accumulate
        y = acc + b_ref[...]                                 # f32 epilogue (v5e-safe)
        if has_res:
            y = y + r_ref[...].astype(jnp.float32)
        if relu:
            y = jnp.maximum(y, 0.0)
        o_ref[...] = y.astype(o_ref.dtype)

    return kernel


def pallas_matmul_fused(x, w_padded, bias_padded, n_real, residual=None,
                        relu=False, out_dtype=jnp.bfloat16):
    """out[:M, :n_real] = act( x @ w_padded + bias [+ residual] ).

    x:           (M, K)       bf16 (or f32) activation / patch matrix
    w_padded:    (Kp, Np)     bf16, pre-padded, BN scale already folded in
    bias_padded: (1, Np)      f32 (BN shift)
    residual:    (M, n_real)  optional
    Single K tile -> no accumulator scratch, no K grid axis; lane-dense Np output.
    """
    M, K = x.shape
    Kp, Np = w_padded.shape
    assert K <= Kp and Np % 128 == 0
    Mp = _round_up(M, 16)
    tm = _choose_tm(Mp)
    tn = 128

    xp = jnp.pad(x, ((0, Mp - M), (0, Kp - K)))
    args = [xp, w_padded, bias_padded]
    in_specs = [
        pl.BlockSpec((tm, Kp), lambda i, j: (i, 0)),
        pl.BlockSpec((Kp, tn), lambda i, j: (0, j)),
        pl.BlockSpec((1, tn), lambda i, j: (0, j)),
    ]
    has_res = residual is not None
    res_bytes = 0
    if has_res:
        rp = jnp.pad(residual, ((0, Mp - M), (0, Np - residual.shape[1])))
        args.append(rp)
        in_specs.append(pl.BlockSpec((tm, tn), lambda i, j: (i, j)))
        res_bytes = rp.size * rp.dtype.itemsize

    cost = pl.CostEstimate(
        flops=2 * Mp * Np * Kp,
        transcendentals=0,
        bytes_accessed=int(xp.size * xp.dtype.itemsize
                           + w_padded.size * w_padded.dtype.itemsize
                           + bias_padded.size * 4
                           + Mp * Np * jnp.dtype(out_dtype).itemsize
                           + res_bytes),
    )

    out = pl.pallas_call(
        _make_matmul_kernel(relu, has_res),
        out_shape=jax.ShapeDtypeStruct((Mp, Np), out_dtype),
        grid_spec=pltpu.PrefetchScalarGridSpec(
            num_scalar_prefetch=0,
            grid=(Mp // tm, Np // tn),
            in_specs=in_specs,
            out_specs=pl.BlockSpec((tm, tn), lambda i, j: (i, j)),
        ),
        compiler_params=pltpu.CompilerParams(
            dimension_semantics=("parallel", "parallel")),
        cost_estimate=cost,
    )(*args)
    return out[:M, :n_real]


def _window_max_kernel(p_ref, o_ref):
    o_ref[...] = jnp.max(p_ref[...], axis=0)


def pallas_window_max(stacked):
    """stacked: (T, M, C) -> (M, C) elementwise max over the window axis."""
    T, M, C = stacked.shape
    tm = 128
    Mp, Cp = _round_up(M, tm), _round_up(C, 128)
    pp = jnp.pad(stacked, ((0, 0), (0, Mp - M), (0, Cp - C)))
    cost = pl.CostEstimate(
        flops=T * Mp * Cp, transcendentals=0,
        bytes_accessed=int(pp.size * pp.dtype.itemsize
                           + Mp * Cp * pp.dtype.itemsize))
    out = pl.pallas_call(
        _window_max_kernel,
        out_shape=jax.ShapeDtypeStruct((Mp, Cp), stacked.dtype),
        grid_spec=pltpu.PrefetchScalarGridSpec(
            num_scalar_prefetch=0,
            grid=(Mp // tm,),
            in_specs=[pl.BlockSpec((T, tm, Cp), lambda i: (0, i, 0))],
            out_specs=pl.BlockSpec((tm, Cp), lambda i: (i, 0)),
        ),
        compiler_params=pltpu.CompilerParams(dimension_semantics=("parallel",)),
        cost_estimate=cost,
    )(pp)
    return out[:M, :C]


# ----------------------------------------------------------------------------
# JAX glue: im2col, separable maxpool, interpolation matrices
# ----------------------------------------------------------------------------
def im2col(x, kh, kw, stride, pad):
    """x: (B, H, W, C) NHWC -> (B*Ho*Wo, kh*kw*C), Ho, Wo."""
    B, H, W, C = x.shape
    xp = jnp.pad(x, ((0, 0), (pad, pad), (pad, pad), (0, 0)))
    Hp, Wp = H + 2 * pad, W + 2 * pad
    Ho = (Hp - kh) // stride + 1
    Wo = (Wp - kw) // stride + 1
    taps = []
    for i in range(kh):
        for j in range(kw):
            taps.append(xp[:, i:i + stride * Ho:stride, j:j + stride * Wo:stride, :])
    patches = jnp.stack(taps, axis=-2)              # (B, Ho, Wo, kh*kw, C)
    return patches.reshape(B * Ho * Wo, kh * kw * C), Ho, Wo


def conv_bn(x, prep, stride, pad, residual=None, relu=False):
    """Conv (no bias) + eval-mode BN + optional residual + optional ReLU (NHWC, bf16)."""
    B = x.shape[0]
    kh, kw, cout = prep["kh"], prep["kw"], prep["cout"]
    cols, Ho, Wo = im2col(x, kh, kw, stride, pad)
    res = residual.reshape(B * Ho * Wo, cout) if residual is not None else None
    y = pallas_matmul_fused(cols, prep["w"], prep["b"], n_real=cout,
                            residual=res, relu=relu, out_dtype=jnp.bfloat16)
    return y.reshape(B, Ho, Wo, cout)


def maxpool_3x3_s2(x):
    """3x3 maxpool, stride 2, padding 1 (-inf padding), separable, NHWC."""
    B, H, W, C = x.shape
    xp = jnp.pad(x, ((0, 0), (1, 1), (1, 1), (0, 0)), constant_values=-jnp.inf)
    Hp, Wp = H + 2, W + 2
    Ho = (Hp - 3) // 2 + 1
    Wo = (Wp - 3) // 2 + 1
    # pass 1: max over 3 rows (stride 2 in H)
    rviews = [xp[:, i:i + 2 * Ho:2, :, :] for i in range(3)]
    rows = jnp.stack(rviews, axis=0).reshape(3, B * Ho * Wp, C)
    rmax = pallas_window_max(rows).reshape(B, Ho, Wp, C)
    # pass 2: max over 3 cols (stride 2 in W)
    cviews = [rmax[:, :, j:j + 2 * Wo:2, :] for j in range(3)]
    colsv = jnp.stack(cviews, axis=0).reshape(3, B * Ho * Wo, C)
    out = pallas_window_max(colsv).reshape(B, Ho, Wo, C)
    return out


def interp_matrix(out_size, in_size):
    """Row-stochastic matrix for 1D linear interpolation with align_corners=True."""
    if in_size == 1:
        return jnp.ones((out_size, 1), jnp.float32)
    if out_size == 1:
        m = jnp.zeros((1, in_size), jnp.float32)
        return m.at[0, 0].set(1.0)
    src = jnp.arange(out_size, dtype=jnp.float32) * (in_size - 1) / (out_size - 1)
    lo = jnp.clip(jnp.floor(src).astype(jnp.int32), 0, in_size - 2)
    frac = src - lo.astype(jnp.float32)
    m = jnp.zeros((out_size, in_size), jnp.float32)
    m = m.at[jnp.arange(out_size), lo].add(1.0 - frac)
    m = m.at[jnp.arange(out_size), lo + 1].add(frac)
    return m


def upsample_and_concat(latents):
    """Bilinear (align_corners=True) upsample of all pyramid levels to the level-0
    spatial size and channel concat, as ONE lane-dense Pallas matmul."""
    B, H0, W0, _ = latents[0].shape
    pieces = [latents[0].astype(jnp.float32)]       # level 0: interpolation is identity
    if len(latents) > 1:
        a_list, x_blocks, chans = [], [], []
        for lat in latents[1:]:
            _, Hl, Wl, Cl = lat.shape
            m_l = jnp.kron(interp_matrix(H0, Hl), interp_matrix(W0, Wl))   # (P, Ql)
            a_list.append(jnp.kron(jnp.eye(B, dtype=jnp.float32), m_l))    # (B*P, B*Ql)
            x_blocks.append(lat.reshape(B * Hl * Wl, Cl))
            chans.append(Cl)
        k_tot = sum(a.shape[1] for a in a_list)
        c_tot = sum(chans)
        a_big = jnp.concatenate(a_list, axis=1).astype(jnp.bfloat16)       # (B*P, k_tot)
        x_big = jnp.zeros((k_tot, c_tot), jnp.bfloat16)                    # block-diagonal
        ro = co = 0
        for xb, cl in zip(x_blocks, chans):
            x_big = x_big.at[ro:ro + xb.shape[0], co:co + cl].set(xb)
            ro += xb.shape[0]
            co += cl
        kp = _round_up(k_tot, 16)
        np_ = _round_up(c_tot, 128)
        x_big = jnp.pad(x_big, ((0, kp - k_tot), (0, np_ - c_tot)))
        zero_bias = jnp.zeros((1, np_), jnp.float32)
        up = pallas_matmul_fused(a_big, x_big, zero_bias, n_real=c_tot,
                                 relu=False, out_dtype=jnp.float32)
        pieces.append(up.reshape(B, H0, W0, c_tot))
    return jnp.concatenate(pieces, axis=-1)          # (B, H0, W0, latent_size), f32


# ----------------------------------------------------------------------------
# Deterministic parameter initialization (synthetic backbone, eval-mode BN folded)
# ----------------------------------------------------------------------------
def init_conv(key, kh, kw, cin, cout):
    fan_in = kh * kw * cin
    w = jax.random.normal(key, (kh, kw, cin, cout), jnp.float32)
    return w / math.sqrt(float(fan_in))


def init_bn(key, c, eps=1e-5):
    k1, k2, k3, k4 = jax.random.split(key, 4)
    gamma = 1.0 + 0.1 * jax.random.normal(k1, (c,), jnp.float32)
    beta = 0.1 * jax.random.normal(k2, (c,), jnp.float32)
    mean = 0.1 * jax.random.normal(k3, (c,), jnp.float32)
    var = 1.0 + 0.1 * jax.random.uniform(k4, (c,), jnp.float32)
    scale = gamma * jax.lax.rsqrt(var + eps)
    shift = beta - mean * scale
    return scale, shift


def prep_conv_bn(w, scale, shift):
    """Fold BN scale into the weights, reshape to a matmul matrix, pad once, bf16."""
    kh, kw, cin, cout = w.shape
    wmat = (w * scale[None, None, None, :]).reshape(kh * kw * cin, cout)
    K = kh * kw * cin
    Kp = _round_up(K, 16)
    Np = _round_up(cout, 128)
    wp = jnp.pad(wmat, ((0, Kp - K), (0, Np - cout))).astype(jnp.bfloat16)
    bp = jnp.pad(shift.reshape(1, cout).astype(jnp.float32), ((0, 0), (0, Np - cout)))
    return {"w": wp, "b": bp, "kh": kh, "kw": kw, "cin": cin, "cout": cout}


def init_encoder_params(key, base=16, blocks=(2, 2, 2)):
    """ResNet18-style backbone (conv1 + layer1..3 basic blocks), base width `base`."""
    keys = iter(jax.random.split(key, 256))

    def make_conv_bn(kh, kw, cin, cout):
        w = init_conv(next(keys), kh, kw, cin, cout)
        scale, shift = init_bn(next(keys), cout)
        return prep_conv_bn(w, scale, shift)

    params = {"conv1": make_conv_bn(7, 7, 3, base), "layers": []}
    in_c = base
    layer_cfg = [(base, 1, blocks[0]), (2 * base, 2, blocks[1]), (4 * base, 2, blocks[2])]
    for out_c, stride, nblk in layer_cfg:
        blks = []
        for bi in range(nblk):
            s = stride if bi == 0 else 1
            blk = {
                "stride": s,
                "conv1": make_conv_bn(3, 3, in_c, out_c),
                "conv2": make_conv_bn(3, 3, out_c, out_c),
            }
            if s != 1 or in_c != out_c:
                blk["ds"] = make_conv_bn(1, 1, in_c, out_c)
            blks.append(blk)
            in_c = out_c
        params["layers"].append(blks)
    params["latent_size"] = base + base + 2 * base + 4 * base
    return params


# ----------------------------------------------------------------------------
# Forward pass (mirrors ResNetEncoder.forward, num_layers=4, use_first_pool=True)
# ----------------------------------------------------------------------------
def basic_block(x, blk):
    s = blk["stride"]
    identity = x
    out = conv_bn(x, blk["conv1"], stride=s, pad=1, relu=True)
    if "ds" in blk:
        identity = conv_bn(x, blk["ds"], stride=s, pad=0, relu=False)
    return conv_bn(out, blk["conv2"], stride=1, pad=1, residual=identity, relu=True)


def run_layer(x, blocks):
    for blk in blocks:
        x = basic_block(x, blk)
    return x


def resnet_encoder_forward(params, x, num_layers=4, use_first_pool=True):
    """
    x: (B, H, W, 3) image (also accepts NCHW, like maybe_permute).
    returns: latent (B, latent_size, H/2, W/2) [NCHW, f32], latent_scaling (2,)
    """
    if x.ndim == 4 and x.shape[-1] != 3 and x.shape[1] == 3:
        x = jnp.transpose(x, (0, 2, 3, 1))
    # TODO(synk): 5-D multi-view reshape and feature_scale != 1.0 ('area') paths
    #             are not exercised (module defaults used).
    x = (x.astype(jnp.float32) - IMAGENET_MEAN) / IMAGENET_STD
    x = x.astype(jnp.bfloat16)          # quantize AFTER normalization (bf16 MXU inputs)

    x = conv_bn(x, params["conv1"], stride=2, pad=3, relu=True)
    latents = [x]
    if num_layers > 1:
        if use_first_pool:
            x = maxpool_3x3_s2(x)
        x = run_layer(x, params["layers"][0])
        latents.append(x)
    if num_layers > 2:
        x = run_layer(x, params["layers"][1])
        latents.append(x)
    if num_layers > 3:
        x = run_layer(x, params["layers"][2])
        latents.append(x)
    # TODO(synk): num_layers > 4 (resnet layer4) not included in this synthetic backbone.

    latent = upsample_and_concat(latents)           # (B, H0, W0, latent_size), f32
    latent = jnp.transpose(latent, (0, 3, 1, 2))    # -> NCHW like the PyTorch module

    latent_scaling = jnp.array([latent.shape[-1], latent.shape[-2]], jnp.float32)
    latent_scaling = latent_scaling / (latent_scaling - 1.0) * 2.0
    return latent, latent_scaling


if __name__ == "__main__":
    B, H, W = 2, 32, 32
    x = jax.random.uniform(jax.random.PRNGKey(0), (B, H, W, 3), dtype=jnp.float32)
    params = init_encoder_params(jax.random.PRNGKey(1), base=16)

    fwd = jax.jit(lambda inp: resnet_encoder_forward(params, inp))
    latent, latent_scaling = fwd(x)
    latent = jax.block_until_ready(latent)

    expected = (B, params["latent_size"], H // 2, W // 2)
    assert latent.shape == expected, f"got {latent.shape}, want {expected}"
    assert latent.dtype == jnp.float32
    assert bool(jnp.all(jnp.isfinite(latent)))
    print("KERNEL_OK")
</pallas_src>

<mosaic_0001>
module attributes {stable_mosaic.version = 11 : i64} {
  func.func private @main(%arg0: i32) attributes {dimension_semantics = [#tpu.dimension_semantics<core_parallel>], iteration_bounds = array<i64: 2>, tpu.core_type = #tpu.core_type<sc_scalar_subcore>, window_params = []} {
    return
  }
}

module attributes {stable_mosaic.version = 11 : i64} {
  func.func private @main(%arg0: i32) attributes {dimension_semantics = [#tpu.dimension_semantics<core_parallel>], iteration_bounds = array<i64: 2>, tpu.core_type = #tpu.core_type<sc_scalar_subcore>, window_params = []} {
    return
  }
}

module attributes {stable_mosaic.version = 11 : i64} {
  func.func @kernel(%arg0: i32, %arg1: i32, %arg2: memref<256x160xbf16, #tpu.memory_space<vmem>>, %arg3: memref<160x128xbf16, #tpu.memory_space<vmem>>, %arg4: memref<1x128xf32, #tpu.memory_space<vmem>>, %arg5: memref<256x128xbf16, #tpu.memory_space<vmem>>) attributes {dimension_semantics = [#tpu.dimension_semantics<parallel>, #tpu.dimension_semantics<parallel>], iteration_bounds = array<i64: 2, 1>, scalar_prefetch = 0 : i64, scratch_operands = 0 : i64, tpu.core_type = #tpu.core_type<tc>, window_params = [{transform_indices = @transform_0, window_bounds = array<i64: 256, 160>}, {transform_indices = @transform_1, window_bounds = array<i64: 160, 128>}, {transform_indices = @transform_2, window_bounds = array<i64: 1, 128>}, {transform_indices = @transform_3, window_bounds = array<i64: 256, 128>}]} {
    %c0 = arith.constant 0 : index
    %c0_0 = arith.constant 0 : index
    %0 = vector.load %arg2[%c0, %c0_0] : memref<256x160xbf16, #tpu.memory_space<vmem>>, vector<256x160xbf16>
    %c0_1 = arith.constant 0 : index
    %c0_2 = arith.constant 0 : index
    %1 = vector.load %arg3[%c0_1, %c0_2] : memref<160x128xbf16, #tpu.memory_space<vmem>>, vector<160x128xbf16>
    %cst = arith.constant dense<0.000000e+00> : vector<256x128xf32>
    %2 = tpu.matmul %0, %1, %cst {dimension_numbers = #tpu.dot_dimension_numbers<[1], [0], [0], [1], [0, 0, 1, 1], [], []>} : vector<256x160xbf16>, vector<160x128xbf16>, vector<256x128xf32> -> vector<256x128xf32>
    %c0_3 = arith.constant 0 : index
    %c0_4 = arith.constant 0 : index
    %3 = vector.load %arg4[%c0_3, %c0_4] : memref<1x128xf32, #tpu.memory_space<vmem>>, vector<1x128xf32>
    %4 = vector.broadcast %3 : vector<1x128xf32> to vector<256x128xf32>
    %5 = arith.addf %2, %4 : vector<256x128xf32>
    %cst_5 = arith.constant 0.000000e+00 : f32
    %6 = vector.broadcast %cst_5 : f32 to vector<256x128xf32>
    %7 = arith.maximumf %5, %6 : vector<256x128xf32>
    %8 = arith.truncf %7 : vector<256x128xf32> to vector<256x128xbf16>
    %c0_6 = arith.constant 0 : index
    %c0_7 = arith.constant 0 : index
    %9 = vector.load %arg5[%c0_6, %c0_7] : memref<256x128xbf16, #tpu.memory_space<vmem>>, vector<256x128xbf16>
    tpu.vector_store %arg5[%c0_6, %c0_7], %8 {strides = array<i32>} : memref<256x128xbf16, #tpu.memory_space<vmem>>, vector<256x128xbf16>,
    return
  }
  func.func @transform_0(%arg0: i32, %arg1: i32) -> (i32, i32) {
    %c0_i32 = arith.constant 0 : i32
    %c0_i32_0 = arith.constant 0 : i32
    return %arg0, %c0_i32 : i32, i32
  }
  func.func @transform_1(%arg0: i32, %arg1: i32) -> (i32, i32) {
    %c0_i32 = arith.constant 0 : i32
    %c0_i32_0 = arith.constant 0 : i32
    return %c0_i32, %arg1 : i32, i32
  }
  func.func @transform_2(%arg0: i32, %arg1: i32) -> (i32, i32) {
    %c0_i32 = arith.constant 0 : i32
    %c0_i32_0 = arith.constant 0 : i32
    return %c0_i32, %arg1 : i32, i32
  }
  func.func @transform_3(%arg0: i32, %arg1: i32) -> (i32, i32) {
    %c0_i32 = arith.constant 0 : i32
    return %arg0, %arg1 : i32, i32
  }
}

module attributes {stable_mosaic.version = 11 : i64} {
  func.func @_window_max_kernel(%arg0: i32, %arg1: memref<3x128x128xbf16, #tpu.memory_space<vmem>>, %arg2: memref<128x128xbf16, #tpu.memory_space<vmem>>) attributes {dimension_semantics = [#tpu.dimension_semantics<parallel>], iteration_bounds = array<i64: 3>, scalar_prefetch = 0 : i64, scratch_operands = 0 : i64, tpu.core_type = #tpu.core_type<tc>, window_params = [{transform_indices = @transform_0, window_bounds = array<i64: 3, 128, 128>}, {transform_indices = @transform_1, window_bounds = array<i64: 128, 128>}]} {
    %c0 = arith.constant 0 : index
    %c0_0 = arith.constant 0 : index
    %c0_1 = arith.constant 0 : index
    %0 = vector.load %arg1[%c0, %c0_0, %c0_1] : memref<3x128x128xbf16, #tpu.memory_space<vmem>>, vector<3x128x128xbf16>
    %cst = arith.constant dense<0xFF80> : vector<128x128xbf16>
    %1 = vector.multi_reduction <maximumf>, %0, %cst [0] : vector<3x128x128xbf16> to vector<128x128xbf16>
    %c0_2 = arith.constant 0 : index
    %c0_3 = arith.constant 0 : index
    %2 = vector.load %arg2[%c0_2, %c0_3] : memref<128x128xbf16, #tpu.memory_space<vmem>>, vector<128x128xbf16>
    tpu.vector_store %arg2[%c0_2, %c0_3], %1 {strides = array<i32>} : memref<128x128xbf16, #tpu.memory_space<vmem>>, vector<128x128xbf16>,
    return
  }
  func.func @transform_0(%arg0: i32) -> (i32, i32, i32) {
    %c0_i32 = arith.constant 0 : i32
    %c0_i32_0 = arith.constant 0 : i32
    %c0_i32_1 = arith.constant 0 : i32
    return %c0_i32, %arg0, %c0_i32_0 : i32, i32, i32
  }
  func.func @transform_1(%arg0: i32) -> (i32, i32) {
    %c0_i32 = arith.constant 0 : i32
    %c0_i32_0 = arith.constant 0 : i32
    return %arg0, %c0_i32 : i32, i32
  }
}

module attributes {stable_mosaic.version = 11 : i64} {
  func.func @_window_max_kernel(%arg0: i32, %arg1: memref<3x128x128xbf16, #tpu.memory_space<vmem>>, %arg2: memref<128x128xbf16, #tpu.memory_space<vmem>>) attributes {dimension_semantics = [#tpu.dimension_semantics<parallel>], iteration_bounds = array<i64: 1>, scalar_prefetch = 0 : i64, scratch_operands = 0 : i64, tpu.core_type = #tpu.core_type<tc>, window_params = [{transform_indices = @transform_0, window_bounds = array<i64: 3, 128, 128>}, {transform_indices = @transform_1, window_bounds = array<i64: 128, 128>}]} {
    %c0 = arith.constant 0 : index
    %c0_0 = arith.constant 0 : index
    %c0_1 = arith.constant 0 : index
    %0 = vector.load %arg1[%c0, %c0_0, %c0_1] : memref<3x128x128xbf16, #tpu.memory_space<vmem>>, vector<3x128x128xbf16>
    %cst = arith.constant dense<0xFF80> : vector<128x128xbf16>
    %1 = vector.multi_reduction <maximumf>, %0, %cst [0] : vector<3x128x128xbf16> to vector<128x128xbf16>
    %c0_2 = arith.constant 0 : index
    %c0_3 = arith.constant 0 : index
    %2 = vector.load %arg2[%c0_2, %c0_3] : memref<128x128xbf16, #tpu.memory_space<vmem>>, vector<128x128xbf16>
    tpu.vector_store %arg2[%c0_2, %c0_3], %1 {strides = array<i32>} : memref<128x128xbf16, #tpu.memory_space<vmem>>, vector<128x128xbf16>,
    return
  }
  func.func @transform_0(%arg0: i32) -> (i32, i32, i32) {
    %c0_i32 = arith.constant 0 : i32
    %c0_i32_0 = arith.constant 0 : i32
    %c0_i32_1 = arith.constant 0 : i32
    return %c0_i32, %arg0, %c0_i32_0 : i32, i32, i32
  }
  func.func @transform_1(%arg0: i32) -> (i32, i32) {
    %c0_i32 = arith.constant 0 : i32
    %c0_i32_0 = arith.constant 0 : i32
    return %arg0, %c0_i32 : i32, i32
  }
}

module attributes {stable_mosaic.version = 11 : i64} {
  func.func @kernel(%arg0: i32, %arg1: i32, %arg2: memref<128x144xbf16, #tpu.memory_space<vmem>>, %arg3: memref<144x128xbf16, #tpu.memory_space<vmem>>, %arg4: memref<1x128xf32, #tpu.memory_space<vmem>>, %arg5: memref<128x128xbf16, #tpu.memory_space<vmem>>) attributes {dimension_semantics = [#tpu.dimension_semantics<parallel>, #tpu.dimension_semantics<parallel>], iteration_bounds = array<i64: 1, 1>, scalar_prefetch = 0 : i64, scratch_operands = 0 : i64, tpu.core_type = #tpu.core_type<tc>, window_params = [{transform_indices = @transform_0, window_bounds = array<i64: 128, 144>}, {transform_indices = @transform_1, window_bounds = array<i64: 144, 128>}, {transform_indices = @transform_2, window_bounds = array<i64: 1, 128>}, {transform_indices = @transform_3, window_bounds = array<i64: 128, 128>}]} {
    %c0 = arith.constant 0 : index
    %c0_0 = arith.constant 0 : index
    %0 = vector.load %arg2[%c0, %c0_0] : memref<128x144xbf16, #tpu.memory_space<vmem>>, vector<128x144xbf16>
    %c0_1 = arith.constant 0 : index
    %c0_2 = arith.constant 0 : index
    %1 = vector.load %arg3[%c0_1, %c0_2] : memref<144x128xbf16, #tpu.memory_space<vmem>>, vector<144x128xbf16>
    %cst = arith.constant dense<0.000000e+00> : vector<128x128xf32>
    %2 = tpu.matmul %0, %1, %cst {dimension_numbers = #tpu.dot_dimension_numbers<[1], [0], [0], [1], [0, 0, 1, 1], [], []>} : vector<128x144xbf16>, vector<144x128xbf16>, vector<128x128xf32> -> vector<128x128xf32>
    %c0_3 = arith.constant 0 : index
    %c0_4 = arith.constant 0 : index
    %3 = vector.load %arg4[%c0_3, %c0_4] : memref<1x128xf32, #tpu.memory_space<vmem>>, vector<1x128xf32>
    %4 = vector.broadcast %3 : vector<1x128xf32> to vector<128x128xf32>
    %5 = arith.addf %2, %4 : vector<128x128xf32>
    %cst_5 = arith.constant 0.000000e+00 : f32
    %6 = vector.broadcast %cst_5 : f32 to vector<128x128xf32>
    %7 = arith.maximumf %5, %6 : vector<128x128xf32>
    %8 = arith.truncf %7 : vector<128x128xf32> to vector<128x128xbf16>
    %c0_6 = arith.constant 0 : index
    %c0_7 = arith.constant 0 : index
    %9 = vector.load %arg5[%c0_6, %c0_7] : memref<128x128xbf16, #tpu.memory_space<vmem>>, vector<128x128xbf16>
    tpu.vector_store %arg5[%c0_6, %c0_7], %8 {strides = array<i32>} : memref<128x128xbf16, #tpu.memory_space<vmem>>, vector<128x128xbf16>,
    return
  }
  func.func @transform_0(%arg0: i32, %arg1: i32) -> (i32, i32) {
    %c0_i32 = arith.constant 0 : i32
    %c0_i32_0 = arith.constant 0 : i32
    return %arg0, %c0_i32 : i32, i32
  }
  func.func @transform_1(%arg0: i32, %arg1: i32) -> (i32, i32) {
    %c0_i32 = arith.constant 0 : i32
    %c0_i32_0 = arith.constant 0 : i32
    return %c0_i32, %arg1 : i32, i32
  }
  func.func @transform_2(%arg0: i32, %arg1: i32) -> (i32, i32) {
    %c0_i32 = arith.constant 0 : i32
    %c0_i32_0 = arith.constant 0 : i32
    return %c0_i32, %arg1 : i32, i32
  }
  func.func @transform_3(%arg0: i32, %arg1: i32) -> (i32, i32) {
    %c0_i32 = arith.constant 0 : i32
    return %arg0, %arg1 : i32, i32
  }
}

module attributes {stable_mosaic.version = 11 : i64} {
  func.func @kernel(%arg0: i32, %arg1: i32, %arg2: memref<128x144xbf16, #tpu.memory_space<vmem>>, %arg3: memref<144x128xbf16, #tpu.memory_space<vmem>>, %arg4: memref<1x128xf32, #tpu.memory_space<vmem>>, %arg5: memref<128x128xbf16, #tpu.memory_space<vmem>>, %arg6: memref<128x128xbf16, #tpu.memory_space<vmem>>) attributes {dimension_semantics = [#tpu.dimension_semantics<parallel>, #tpu.dimension_semantics<parallel>], iteration_bounds = array<i64: 1, 1>, scalar_prefetch = 0 : i64, scratch_operands = 0 : i64, tpu.core_type = #tpu.core_type<tc>, window_params = [{transform_indices = @transform_0, window_bounds = array<i64: 128, 144>}, {transform_indices = @transform_1, window_bounds = array<i64: 144, 128>}, {transform_indices = @transform_2, window_bounds = array<i64: 1, 128>}, {transform_indices = @transform_3, window_bounds = array<i64: 128, 128>}, {transform_indices = @transform_4, window_bounds = array<i64: 128, 128>}]} {
    %c0 = arith.constant 0 : index
    %c0_0 = arith.constant 0 : index
    %0 = vector.load %arg2[%c0, %c0_0] : memref<128x144xbf16, #tpu.memory_space<vmem>>, vector<128x144xbf16>
    %c0_1 = arith.constant 0 : index
    %c0_2 = arith.constant 0 : index
    %1 = vector.load %arg3[%c0_1, %c0_2] : memref<144x128xbf16, #tpu.memory_space<vmem>>, vector<144x128xbf16>
    %cst = arith.constant dense<0.000000e+00> : vector<128x128xf32>
    %2 = tpu.matmul %0, %1, %cst {dimension_numbers = #tpu.dot_dimension_numbers<[1], [0], [0], [1], [0, 0, 1, 1], [], []>} : vector<128x144xbf16>, vector<144x128xbf16>, vector<128x128xf32> -> vector<128x128xf32>
    %c0_3 = arith.constant 0 : index
    %c0_4 = arith.constant 0 : index
    %3 = vector.load %arg4[%c0_3, %c0_4] : memref<1x128xf32, #tpu.memory_space<vmem>>, vector<1x128xf32>
    %4 = vector.broadcast %3 : vector<1x128xf32> to vector<128x128xf32>
    %5 = arith.addf %2, %4 : vector<128x128xf32>
    %c0_5 = arith.constant 0 : index
    %c0_6 = arith.constant 0 : index
    %6 = vector.load %arg5[%c0_5, %c0_6] : memref<128x128xbf16, #tpu.memory_space<vmem>>, vector<128x128xbf16>
    %7 = arith.extf %6 : vector<128x128xbf16> to vector<128x128xf32>
    %8 = arith.addf %5, %7 : vector<128x128xf32>
    %cst_7 = arith.constant 0.000000e+00 : f32
    %9 = vector.broadcast %cst_7 : f32 to vector<128x128xf32>
    %10 = arith.maximumf %8, %9 : vector<128x128xf32>
    %11 = arith.truncf %10 : vector<128x128xf32> to vector<128x128xbf16>
    %c0_8 = arith.constant 0 : index
    %c0_9 = arith.constant 0 : index
    %12 = vector.load %arg6[%c0_8, %c0_9] : memref<128x128xbf16, #tpu.memory_space<vmem>>, vector<128x128xbf16>
    tpu.vector_store %arg6[%c0_8, %c0_9], %11 {strides = array<i32>} : memref<128x128xbf16, #tpu.memory_space<vmem>>, vector<128x128xbf16>,
    return
  }
  func.func @transform_0(%arg0: i32, %arg1: i32) -> (i32, i32) {
    %c0_i32 = arith.constant 0 : i32
    %c0_i32_0 = arith.constant 0 : i32
    return %arg0, %c0_i32 : i32, i32
  }
  func.func @transform_1(%arg0: i32, %arg1: i32) -> (i32, i32) {
    %c0_i32 = arith.constant 0 : i32
    %c0_i32_0 = arith.constant 0 : i32
    return %c0_i32, %arg1 : i32, i32
  }
  func.func @transform_2(%arg0: i32, %arg1: i32) -> (i32, i32) {
    %c0_i32 = arith.constant 0 : i32
    %c0_i32_0 = arith.constant 0 : i32
    return %c0_i32, %arg1 : i32, i32
  }
  func.func @transform_3(%arg0: i32, %arg1: i32) -> (i32, i32) {
    %c0_i32 = arith.constant 0 : i32
    return %arg0, %arg1 : i32, i32
  }
  func.func @transform_4(%arg0: i32, %arg1: i32) -> (i32, i32) {
    %c0_i32 = arith.constant 0 : i32
    return %arg0, %arg1 : i32, i32
  }
}

module attributes {stable_mosaic.version = 11 : i64} {
  func.func @kernel(%arg0: i32, %arg1: i32, %arg2: memref<32x144xbf16, #tpu.memory_space<vmem>>, %arg3: memref<144x128xbf16, #tpu.memory_space<vmem>>, %arg4: memref<1x128xf32, #tpu.memory_space<vmem>>, %arg5: memref<32x128xbf16, #tpu.memory_space<vmem>>) attributes {dimension_semantics = [#tpu.dimension_semantics<parallel>, #tpu.dimension_semantics<parallel>], iteration_bounds = array<i64: 1, 1>, scalar_prefetch = 0 : i64, scratch_operands = 0 : i64, tpu.core_type = #tpu.core_type<tc>, window_params = [{transform_indices = @transform_0, window_bounds = array<i64: 32, 144>}, {transform_indices = @transform_1, window_bounds = array<i64: 144, 128>}, {transform_indices = @transform_2, window_bounds = array<i64: 1, 128>}, {transform_indices = @transform_3, window_bounds = array<i64: 32, 128>}]} {
    %c0 = arith.constant 0 : index
    %c0_0 = arith.constant 0 : index
    %0 = vector.load %arg2[%c0, %c0_0] : memref<32x144xbf16, #tpu.memory_space<vmem>>, vector<32x144xbf16>
    %c0_1 = arith.constant 0 : index
    %c0_2 = arith.constant 0 : index
    %1 = vector.load %arg3[%c0_1, %c0_2] : memref<144x128xbf16, #tpu.memory_space<vmem>>, vector<144x128xbf16>
    %cst = arith.constant dense<0.000000e+00> : vector<32x128xf32>
    %2 = tpu.matmul %0, %1, %cst {dimension_numbers = #tpu.dot_dimension_numbers<[1], [0], [0], [1], [0, 0, 1, 1], [], []>} : vector<32x144xbf16>, vector<144x128xbf16>, vector<32x128xf32> -> vector<32x128xf32>
    %c0_3 = arith.constant 0 : index
    %c0_4 = arith.constant 0 : index
    %3 = vector.load %arg4[%c0_3, %c0_4] : memref<1x128xf32, #tpu.memory_space<vmem>>, vector<1x128xf32>
    %4 = vector.broadcast %3 : vector<1x128xf32> to vector<32x128xf32>
    %5 = arith.addf %2, %4 : vector<32x128xf32>
    %cst_5 = arith.constant 0.000000e+00 : f32
    %6 = vector.broadcast %cst_5 : f32 to vector<32x128xf32>
    %7 = arith.maximumf %5, %6 : vector<32x128xf32>
    %8 = arith.truncf %7 : vector<32x128xf32> to vector<32x128xbf16>
    %c0_6 = arith.constant 0 : index
    %c0_7 = arith.constant 0 : index
    %9 = vector.load %arg5[%c0_6, %c0_7] : memref<32x128xbf16, #tpu.memory_space<vmem>>, vector<32x128xbf16>
    tpu.vector_store %arg5[%c0_6, %c0_7], %8 {strides = array<i32>} : memref<32x128xbf16, #tpu.memory_space<vmem>>, vector<32x128xbf16>,
    return
  }
  func.func @transform_0(%arg0: i32, %arg1: i32) -> (i32, i32) {
    %c0_i32 = arith.constant 0 : i32
    %c0_i32_0 = arith.constant 0 : i32
    return %arg0, %c0_i32 : i32, i32
  }
  func.func @transform_1(%arg0: i32, %arg1: i32) -> (i32, i32) {
    %c0_i32 = arith.constant 0 : i32
    %c0_i32_0 = arith.constant 0 : i32
    return %c0_i32, %arg1 : i32, i32
  }
  func.func @transform_2(%arg0: i32, %arg1: i32) -> (i32, i32) {
    %c0_i32 = arith.constant 0 : i32
    %c0_i32_0 = arith.constant 0 : i32
    return %c0_i32, %arg1 : i32, i32
  }
  func.func @transform_3(%arg0: i32, %arg1: i32) -> (i32, i32) {
    %c0_i32 = arith.constant 0 : i32
    return %arg0, %arg1 : i32, i32
  }
}

module attributes {stable_mosaic.version = 11 : i64} {
  func.func @kernel(%arg0: i32, %arg1: i32, %arg2: memref<32x288xbf16, #tpu.memory_space<vmem>>, %arg3: memref<288x128xbf16, #tpu.memory_space<vmem>>, %arg4: memref<1x128xf32, #tpu.memory_space<vmem>>, %arg5: memref<32x128xbf16, #tpu.memory_space<vmem>>, %arg6: memref<32x128xbf16, #tpu.memory_space<vmem>>) attributes {dimension_semantics = [#tpu.dimension_semantics<parallel>, #tpu.dimension_semantics<parallel>], iteration_bounds = array<i64: 1, 1>, scalar_prefetch = 0 : i64, scratch_operands = 0 : i64, tpu.core_type = #tpu.core_type<tc>, window_params = [{transform_indices = @transform_0, window_bounds = array<i64: 32, 288>}, {transform_indices = @transform_1, window_bounds = array<i64: 288, 128>}, {transform_indices = @transform_2, window_bounds = array<i64: 1, 128>}, {transform_indices = @transform_3, window_bounds = array<i64: 32, 128>}, {transform_indices = @transform_4, window_bounds = array<i64: 32, 128>}]} {
    %c0 = arith.constant 0 : index
    %c0_0 = arith.constant 0 : index
    %0 = vector.load %arg2[%c0, %c0_0] : memref<32x288xbf16, #tpu.memory_space<vmem>>, vector<32x288xbf16>
    %c0_1 = arith.constant 0 : index
    %c0_2 = arith.constant 0 : index
    %1 = vector.load %arg3[%c0_1, %c0_2] : memref<288x128xbf16, #tpu.memory_space<vmem>>, vector<288x128xbf16>
    %cst = arith.constant dense<0.000000e+00> : vector<32x128xf32>
    %2 = tpu.matmul %0, %1, %cst {dimension_numbers = #tpu.dot_dimension_numbers<[1], [0], [0], [1], [0, 0, 1, 1], [], []>} : vector<32x288xbf16>, vector<288x128xbf16>, vector<32x128xf32> -> vector<32x128xf32>
    %c0_3 = arith.constant 0 : index
    %c0_4 = arith.constant 0 : index
    %3 = vector.load %arg4[%c0_3, %c0_4] : memref<1x128xf32, #tpu.memory_space<vmem>>, vector<1x128xf32>
    %4 = vector.broadcast %3 : vector<1x128xf32> to vector<32x128xf32>
    %5 = arith.addf %2, %4 : vector<32x128xf32>
    %c0_5 = arith.constant 0 : index
    %c0_6 = arith.constant 0 : index
    %6 = vector.load %arg5[%c0_5, %c0_6] : memref<32x128xbf16, #tpu.memory_space<vmem>>, vector<32x128xbf16>
    %7 = arith.extf %6 : vector<32x128xbf16> to vector<32x128xf32>
    %8 = arith.addf %5, %7 : vector<32x128xf32>
    %cst_7 = arith.constant 0.000000e+00 : f32
    %9 = vector.broadcast %cst_7 : f32 to vector<32x128xf32>
    %10 = arith.maximumf %8, %9 : vector<32x128xf32>
    %11 = arith.truncf %10 : vector<32x128xf32> to vector<32x128xbf16>
    %c0_8 = arith.constant 0 : index
    %c0_9 = arith.constant 0 : index
    %12 = vector.load %arg6[%c0_8, %c0_9] : memref<32x128xbf16, #tpu.memory_space<vmem>>, vector<32x128xbf16>
    tpu.vector_store %arg6[%c0_8, %c0_9], %11 {strides = array<i32>} : memref<32x128xbf16, #tpu.memory_space<vmem>>, vector<32x128xbf16>,
    return
  }
  func.func @transform_0(%arg0: i32, %arg1: i32) -> (i32, i32) {
    %c0_i32 = arith.constant 0 : i32
    %c0_i32_0 = arith.constant 0 : i32
    return %arg0, %c0_i32 : i32, i32
  }
  func.func @transform_1(%arg0: i32, %arg1: i32) -> (i32, i32) {
    %c0_i32 = arith.constant 0 : i32
    %c0_i32_0 = arith.constant 0 : i32
    return %c0_i32, %arg1 : i32, i32
  }
  func.func @transform_2(%arg0: i32, %arg1: i32) -> (i32, i32) {
    %c0_i32 = arith.constant 0 : i32
    %c0_i32_0 = arith.constant 0 : i32
    return %c0_i32, %arg1 : i32, i32
  }
  func.func @transform_3(%arg0: i32, %arg1: i32) -> (i32, i32) {
    %c0_i32 = arith.constant 0 : i32
    return %arg0, %arg1 : i32, i32
  }
  func.func @transform_4(%arg0: i32, %arg1: i32) -> (i32, i32) {
    %c0_i32 = arith.constant 0 : i32
    return %arg0, %arg1 : i32, i32
  }
}

module attributes {stable_mosaic.version = 11 : i64} {
  func.func @kernel(%arg0: i32, %arg1: i32, %arg2: memref<32x16xbf16, #tpu.memory_space<vmem>>, %arg3: memref<16x128xbf16, #tpu.memory_space<vmem>>, %arg4: memref<1x128xf32, #tpu.memory_space<vmem>>, %arg5: memref<32x128xbf16, #tpu.memory_space<vmem>>) attributes {dimension_semantics = [#tpu.dimension_semantics<parallel>, #tpu.dimension_semantics<parallel>], iteration_bounds = array<i64: 1, 1>, scalar_prefetch = 0 : i64, scratch_operands = 0 : i64, tpu.core_type = #tpu.core_type<tc>, window_params = [{transform_indices = @transform_0, window_bounds = array<i64: 32, 16>}, {transform_indices = @transform_1, window_bounds = array<i64: 16, 128>}, {transform_indices = @transform_2, window_bounds = array<i64: 1, 128>}, {transform_indices = @transform_3, window_bounds = array<i64: 32, 128>}]} {
    %c0 = arith.constant 0 : index
    %c0_0 = arith.constant 0 : index
    %0 = vector.load %arg2[%c0, %c0_0] : memref<32x16xbf16, #tpu.memory_space<vmem>>, vector<32x16xbf16>
    %c0_1 = arith.constant 0 : index
    %c0_2 = arith.constant 0 : index
    %1 = vector.load %arg3[%c0_1, %c0_2] : memref<16x128xbf16, #tpu.memory_space<vmem>>, vector<16x128xbf16>
    %cst = arith.constant dense<0.000000e+00> : vector<32x128xf32>
    %2 = tpu.matmul %0, %1, %cst {dimension_numbers = #tpu.dot_dimension_numbers<[1], [0], [0], [1], [0, 0, 1, 1], [], []>} : vector<32x16xbf16>, vector<16x128xbf16>, vector<32x128xf32> -> vector<32x128xf32>
    %c0_3 = arith.constant 0 : index
    %c0_4 = arith.constant 0 : index
    %3 = vector.load %arg4[%c0_3, %c0_4] : memref<1x128xf32, #tpu.memory_space<vmem>>, vector<1x128xf32>
    %4 = vector.broadcast %3 : vector<1x128xf32> to vector<32x128xf32>
    %5 = arith.addf %2, %4 : vector<32x128xf32>
    %6 = arith.truncf %5 : vector<32x128xf32> to vector<32x128xbf16>
    %c0_5 = arith.constant 0 : index
    %c0_6 = arith.constant 0 : index
    %7 = vector.load %arg5[%c0_5, %c0_6] : memref<32x128xbf16, #tpu.memory_space<vmem>>, vector<32x128xbf16>
    tpu.vector_store %arg5[%c0_5, %c0_6], %6 {strides = array<i32>} : memref<32x128xbf16, #tpu.memory_space<vmem>>, vector<32x128xbf16>,
    return
  }
  func.func @transform_0(%arg0: i32, %arg1: i32) -> (i32, i32) {
    %c0_i32 = arith.constant 0 : i32
    %c0_i32_0 = arith.constant 0 : i32
    return %arg0, %c0_i32 : i32, i32
  }
  func.func @transform_1(%arg0: i32, %arg1: i32) -> (i32, i32) {
    %c0_i32 = arith.constant 0 : i32
    %c0_i32_0 = arith.constant 0 : i32
    return %c0_i32, %arg1 : i32, i32
  }
  func.func @transform_2(%arg0: i32, %arg1: i32) -> (i32, i32) {
    %c0_i32 = arith.constant 0 : i32
    %c0_i32_0 = arith.constant 0 : i32
    return %c0_i32, %arg1 : i32, i32
  }
  func.func @transform_3(%arg0: i32, %arg1: i32) -> (i32, i32) {
    %c0_i32 = arith.constant 0 : i32
    return %arg0, %arg1 : i32, i32
  }
}

module attributes {stable_mosaic.version = 11 : i64} {
  func.func @kernel(%arg0: i32, %arg1: i32, %arg2: memref<32x288xbf16, #tpu.memory_space<vmem>>, %arg3: memref<288x128xbf16, #tpu.memory_space<vmem>>, %arg4: memref<1x128xf32, #tpu.memory_space<vmem>>, %arg5: memref<32x128xbf16, #tpu.memory_space<vmem>>) attributes {dimension_semantics = [#tpu.dimension_semantics<parallel>, #tpu.dimension_semantics<parallel>], iteration_bounds = array<i64: 1, 1>, scalar_prefetch = 0 : i64, scratch_operands = 0 : i64, tpu.core_type = #tpu.core_type<tc>, window_params = [{transform_indices = @transform_0, window_bounds = array<i64: 32, 288>}, {transform_indices = @transform_1, window_bounds = array<i64: 288, 128>}, {transform_indices = @transform_2, window_bounds = array<i64: 1, 128>}, {transform_indices = @transform_3, window_bounds = array<i64: 32, 128>}]} {
    %c0 = arith.constant 0 : index
    %c0_0 = arith.constant 0 : index
    %0 = vector.load %arg2[%c0, %c0_0] : memref<32x288xbf16, #tpu.memory_space<vmem>>, vector<32x288xbf16>
    %c0_1 = arith.constant 0 : index
    %c0_2 = arith.constant 0 : index
    %1 = vector.load %arg3[%c0_1, %c0_2] : memref<288x128xbf16, #tpu.memory_space<vmem>>, vector<288x128xbf16>
    %cst = arith.constant dense<0.000000e+00> : vector<32x128xf32>
    %2 = tpu.matmul %0, %1, %cst {dimension_numbers = #tpu.dot_dimension_numbers<[1], [0], [0], [1], [0, 0, 1, 1], [], []>} : vector<32x288xbf16>, vector<288x128xbf16>, vector<32x128xf32> -> vector<32x128xf32>
    %c0_3 = arith.constant 0 : index
    %c0_4 = arith.constant 0 : index
    %3 = vector.load %arg4[%c0_3, %c0_4] : memref<1x128xf32, #tpu.memory_space<vmem>>, vector<1x128xf32>
    %4 = vector.broadcast %3 : vector<1x128xf32> to vector<32x128xf32>
    %5 = arith.addf %2, %4 : vector<32x128xf32>
    %cst_5 = arith.constant 0.000000e+00 : f32
    %6 = vector.broadcast %cst_5 : f32 to vector<32x128xf32>
    %7 = arith.maximumf %5, %6 : vector<32x128xf32>
    %8 = arith.truncf %7 : vector<32x128xf32> to vector<32x128xbf16>
    %c0_6 = arith.constant 0 : index
    %c0_7 = arith.constant 0 : index
    %9 = vector.load %arg5[%c0_6, %c0_7] : memref<32x128xbf16, #tpu.memory_space<vmem>>, vector<32x128xbf16>
    tpu.vector_store %arg5[%c0_6, %c0_7], %8 {strides = array<i32>} : memref<32x128xbf16, #tpu.memory_space<vmem>>, vector<32x128xbf16>,
    return
  }
  func.func @transform_0(%arg0: i32, %arg1: i32) -> (i32, i32) {
    %c0_i32 = arith.constant 0 : i32
    %c0_i32_0 = arith.constant 0 : i32
    return %arg0, %c0_i32 : i32, i32
  }
  func.func @transform_1(%arg0: i32, %arg1: i32) -> (i32, i32) {
    %c0_i32 = arith.constant 0 : i32
    %c0_i32_0 = arith.constant 0 : i32
    return %c0_i32, %arg1 : i32, i32
  }
  func.func @transform_2(%arg0: i32, %arg1: i32) -> (i32, i32) {
    %c0_i32 = arith.constant 0 : i32
    %c0_i32_0 = arith.constant 0 : i32
    return %c0_i32, %arg1 : i32, i32
  }
  func.func @transform_3(%arg0: i32, %arg1: i32) -> (i32, i32) {
    %c0_i32 = arith.constant 0 : i32
    return %arg0, %arg1 : i32, i32
  }
}

module attributes {stable_mosaic.version = 11 : i64} {
  func.func @kernel(%arg0: i32, %arg1: i32, %arg2: memref<16x288xbf16, #tpu.memory_space<vmem>>, %arg3: memref<288x128xbf16, #tpu.memory_space<vmem>>, %arg4: memref<1x128xf32, #tpu.memory_space<vmem>>, %arg5: memref<16x128xbf16, #tpu.memory_space<vmem>>) attributes {dimension_semantics = [#tpu.dimension_semantics<parallel>, #tpu.dimension_semantics<parallel>], iteration_bounds = array<i64: 1, 1>, scalar_prefetch = 0 : i64, scratch_operands = 0 : i64, tpu.core_type = #tpu.core_type<tc>, window_params = [{transform_indices = @transform_0, window_bounds = array<i64: 16, 288>}, {transform_indices = @transform_1, window_bounds = array<i64: 288, 128>}, {transform_indices = @transform_2, window_bounds = array<i64: 1, 128>}, {transform_indices = @transform_3, window_bounds = array<i64: 16, 128>}]} {
    %c0 = arith.constant 0 : index
    %c0_0 = arith.constant 0 : index
    %0 = vector.load %arg2[%c0, %c0_0] : memref<16x288xbf16, #tpu.memory_space<vmem>>, vector<16x288xbf16>
    %c0_1 = arith.constant 0 : index
    %c0_2 = arith.constant 0 : index
    %1 = vector.load %arg3[%c0_1, %c0_2] : memref<288x128xbf16, #tpu.memory_space<vmem>>, vector<288x128xbf16>
    %cst = arith.constant dense<0.000000e+00> : vector<16x128xf32>
    %2 = tpu.matmul %0, %1, %cst {dimension_numbers = #tpu.dot_dimension_numbers<[1], [0], [0], [1], [0, 0, 1, 1], [], []>} : vector<16x288xbf16>, vector<288x128xbf16>, vector<16x128xf32> -> vector<16x128xf32>
    %c0_3 = arith.constant 0 : index
    %c0_4 = arith.constant 0 : index
    %3 = vector.load %arg4[%c0_3, %c0_4] : memref<1x128xf32, #tpu.memory_space<vmem>>, vector<1x128xf32>
    %4 = vector.broadcast %3 : vector<1x128xf32> to vector<16x128xf32>
    %5 = arith.addf %2, %4 : vector<16x128xf32>
    %cst_5 = arith.constant 0.000000e+00 : f32
    %6 = vector.broadcast %cst_5 : f32 to vector<16x128xf32>
    %7 = arith.maximumf %5, %6 : vector<16x128xf32>
    %8 = arith.truncf %7 : vector<16x128xf32> to vector<16x128xbf16>
    %c0_6 = arith.constant 0 : index
    %c0_7 = arith.constant 0 : index
    %9 = vector.load %arg5[%c0_6, %c0_7] : memref<16x128xbf16, #tpu.memory_space<vmem>>, vector<16x128xbf16>
    tpu.vector_store %arg5[%c0_6, %c0_7], %8 {strides = array<i32>} : memref<16x128xbf16, #tpu.memory_space<vmem>>, vector<16x128xbf16>,
    return
  }
  func.func @transform_0(%arg0: i32, %arg1: i32) -> (i32, i32) {
    %c0_i32 = arith.constant 0 : i32
    %c0_i32_0 = arith.constant 0 : i32
    return %arg0, %c0_i32 : i32, i32
  }
  func.func @transform_1(%arg0: i32, %arg1: i32) -> (i32, i32) {
    %c0_i32 = arith.constant 0 : i32
    %c0_i32_0 = arith.constant 0 : i32
    return %c0_i32, %arg1 : i32, i32
  }
  func.func @transform_2(%arg0: i32, %arg1: i32) -> (i32, i32) {
    %c0_i32 = arith.constant 0 : i32
    %c0_i32_0 = arith.constant 0 : i32
    return %c0_i32, %arg1 : i32, i32
  }
  func.func @transform_3(%arg0: i32, %arg1: i32) -> (i32, i32) {
    %c0_i32 = arith.constant 0 : i32
    return %arg0, %arg1 : i32, i32
  }
}

module attributes {stable_mosaic.version = 11 : i64} {
  func.func @kernel(%arg0: i32, %arg1: i32, %arg2: memref<16x576xbf16, #tpu.memory_space<vmem>>, %arg3: memref<576x128xbf16, #tpu.memory_space<vmem>>, %arg4: memref<1x128xf32, #tpu.memory_space<vmem>>, %arg5: memref<16x128xbf16, #tpu.memory_space<vmem>>) attributes {dimension_semantics = [#tpu.dimension_semantics<parallel>, #tpu.dimension_semantics<parallel>], iteration_bounds = array<i64: 1, 1>, scalar_prefetch = 0 : i64, scratch_operands = 0 : i64, tpu.core_type = #tpu.core_type<tc>, window_params = [{transform_indices = @transform_0, window_bounds = array<i64: 16, 576>}, {transform_indices = @transform_1, window_bounds = array<i64: 576, 128>}, {transform_indices = @transform_2, window_bounds = array<i64: 1, 128>}, {transform_indices = @transform_3, window_bounds = array<i64: 16, 128>}]} {
    %c0 = arith.constant 0 : index
    %c0_0 = arith.constant 0 : index
    %0 = vector.load %arg2[%c0, %c0_0] : memref<16x576xbf16, #tpu.memory_space<vmem>>, vector<16x576xbf16>
    %c0_1 = arith.constant 0 : index
    %c0_2 = arith.constant 0 : index
    %1 = vector.load %arg3[%c0_1, %c0_2] : memref<576x128xbf16, #tpu.memory_space<vmem>>, vector<576x128xbf16>
    %cst = arith.constant dense<0.000000e+00> : vector<16x128xf32>
    %2 = tpu.matmul %0, %1, %cst {dimension_numbers = #tpu.dot_dimension_numbers<[1], [0], [0], [1], [0, 0, 1, 1], [], []>} : vector<16x576xbf16>, vector<576x128xbf16>, vector<16x128xf32> -> vector<16x128xf32>
    %c0_3 = arith.constant 0 : index
    %c0_4 = arith.constant 0 : index
    %3 = vector.load %arg4[%c0_3, %c0_4] : memref<1x128xf32, #tpu.memory_space<vmem>>, vector<1x128xf32>
    %4 = vector.broadcast %3 : vector<1x128xf32> to vector<16x128xf32>
    %5 = arith.addf %2, %4 : vector<16x128xf32>
    %cst_5 = arith.constant 0.000000e+00 : f32
    %6 = vector.broadcast %cst_5 : f32 to vector<16x128xf32>
    %7 = arith.maximumf %5, %6 : vector<16x128xf32>
    %8 = arith.truncf %7 : vector<16x128xf32> to vector<16x128xbf16>
    %c0_6 = arith.constant 0 : index
    %c0_7 = arith.constant 0 : index
    %9 = vector.load %arg5[%c0_6, %c0_7] : memref<16x128xbf16, #tpu.memory_space<vmem>>, vector<16x128xbf16>
    tpu.vector_store %arg5[%c0_6, %c0_7], %8 {strides = array<i32>} : memref<16x128xbf16, #tpu.memory_space<vmem>>, vector<16x128xbf16>,
    return
  }
  func.func @transform_0(%arg0: i32, %arg1: i32) -> (i32, i32) {
    %c0_i32 = arith.constant 0 : i32
    %c0_i32_0 = arith.constant 0 : i32
    return %arg0, %c0_i32 : i32, i32
  }
  func.func @transform_1(%arg0: i32, %arg1: i32) -> (i32, i32) {
    %c0_i32 = arith.constant 0 : i32
    %c0_i32_0 = arith.constant 0 : i32
    return %c0_i32, %arg1 : i32, i32
  }
  func.func @transform_2(%arg0: i32, %arg1: i32) -> (i32, i32) {
    %c0_i32 = arith.constant 0 : i32
    %c0_i32_0 = arith.constant 0 : i32
    return %c0_i32, %arg1 : i32, i32
  }
  func.func @transform_3(%arg0: i32, %arg1: i32) -> (i32, i32) {
    %c0_i32 = arith.constant 0 : i32
    return %arg0, %arg1 : i32, i32
  }
}

module attributes {stable_mosaic.version = 11 : i64} {
  func.func @kernel(%arg0: i32, %arg1: i32, %arg2: memref<16x32xbf16, #tpu.memory_space<vmem>>, %arg3: memref<32x128xbf16, #tpu.memory_space<vmem>>, %arg4: memref<1x128xf32, #tpu.memory_space<vmem>>, %arg5: memref<16x128xbf16, #tpu.memory_space<vmem>>) attributes {dimension_semantics = [#tpu.dimension_semantics<parallel>, #tpu.dimension_semantics<parallel>], iteration_bounds = array<i64: 1, 1>, scalar_prefetch = 0 : i64, scratch_operands = 0 : i64, tpu.core_type = #tpu.core_type<tc>, window_params = [{transform_indices = @transform_0, window_bounds = array<i64: 16, 32>}, {transform_indices = @transform_1, window_bounds = array<i64: 32, 128>}, {transform_indices = @transform_2, window_bounds = array<i64: 1, 128>}, {transform_indices = @transform_3, window_bounds = array<i64: 16, 128>}]} {
    %c0 = arith.constant 0 : index
    %c0_0 = arith.constant 0 : index
    %0 = vector.load %arg2[%c0, %c0_0] : memref<16x32xbf16, #tpu.memory_space<vmem>>, vector<16x32xbf16>
    %c0_1 = arith.constant 0 : index
    %c0_2 = arith.constant 0 : index
    %1 = vector.load %arg3[%c0_1, %c0_2] : memref<32x128xbf16, #tpu.memory_space<vmem>>, vector<32x128xbf16>
    %cst = arith.constant dense<0.000000e+00> : vector<16x128xf32>
    %2 = tpu.matmul %0, %1, %cst {dimension_numbers = #tpu.dot_dimension_numbers<[1], [0], [0], [1], [0, 0, 1, 1], [], []>} : vector<16x32xbf16>, vector<32x128xbf16>, vector<16x128xf32> -> vector<16x128xf32>
    %c0_3 = arith.constant 0 : index
    %c0_4 = arith.constant 0 : index
    %3 = vector.load %arg4[%c0_3, %c0_4] : memref<1x128xf32, #tpu.memory_space<vmem>>, vector<1x128xf32>
    %4 = vector.broadcast %3 : vector<1x128xf32> to vector<16x128xf32>
    %5 = arith.addf %2, %4 : vector<16x128xf32>
    %6 = arith.truncf %5 : vector<16x128xf32> to vector<16x128xbf16>
    %c0_5 = arith.constant 0 : index
    %c0_6 = arith.constant 0 : index
    %7 = vector.load %arg5[%c0_5, %c0_6] : memref<16x128xbf16, #tpu.memory_space<vmem>>, vector<16x128xbf16>
    tpu.vector_store %arg5[%c0_5, %c0_6], %6 {strides = array<i32>} : memref<16x128xbf16, #tpu.memory_space<vmem>>, vector<16x128xbf16>,
    return
  }
  func.func @transform_0(%arg0: i32, %arg1: i32) -> (i32, i32) {
    %c0_i32 = arith.constant 0 : i32
    %c0_i32_0 = arith.constant 0 : i32
    return %arg0, %c0_i32 : i32, i32
  }
  func.func @transform_1(%arg0: i32, %arg1: i32) -> (i32, i32) {
    %c0_i32 = arith.constant 0 : i32
    %c0_i32_0 = arith.constant 0 : i32
    return %c0_i32, %arg1 : i32, i32
  }
  func.func @transform_2(%arg0: i32, %arg1: i32) -> (i32, i32) {
    %c0_i32 = arith.constant 0 : i32
    %c0_i32_0 = arith.constant 0 : i32
    return %c0_i32, %arg1 : i32, i32
  }
  func.func @transform_3(%arg0: i32, %arg1: i32) -> (i32, i32) {
    %c0_i32 = arith.constant 0 : i32
    return %arg0, %arg1 : i32, i32
  }
}

module attributes {stable_mosaic.version = 11 : i64} {
  func.func @kernel(%arg0: i32, %arg1: i32, %arg2: memref<16x576xbf16, #tpu.memory_space<vmem>>, %arg3: memref<576x128xbf16, #tpu.memory_space<vmem>>, %arg4: memref<1x128xf32, #tpu.memory_space<vmem>>, %arg5: memref<16x128xbf16, #tpu.memory_space<vmem>>, %arg6: memref<16x128xbf16, #tpu.memory_space<vmem>>) attributes {dimension_semantics = [#tpu.dimension_semantics<parallel>, #tpu.dimension_semantics<parallel>], iteration_bounds = array<i64: 1, 1>, scalar_prefetch = 0 : i64, scratch_operands = 0 : i64, tpu.core_type = #tpu.core_type<tc>, window_params = [{transform_indices = @transform_0, window_bounds = array<i64: 16, 576>}, {transform_indices = @transform_1, window_bounds = array<i64: 576, 128>}, {transform_indices = @transform_2, window_bounds = array<i64: 1, 128>}, {transform_indices = @transform_3, window_bounds = array<i64: 16, 128>}, {transform_indices = @transform_4, window_bounds = array<i64: 16, 128>}]} {
    %c0 = arith.constant 0 : index
    %c0_0 = arith.constant 0 : index
    %0 = vector.load %arg2[%c0, %c0_0] : memref<16x576xbf16, #tpu.memory_space<vmem>>, vector<16x576xbf16>
    %c0_1 = arith.constant 0 : index
    %c0_2 = arith.constant 0 : index
    %1 = vector.load %arg3[%c0_1, %c0_2] : memref<576x128xbf16, #tpu.memory_space<vmem>>, vector<576x128xbf16>
    %cst = arith.constant dense<0.000000e+00> : vector<16x128xf32>
    %2 = tpu.matmul %0, %1, %cst {dimension_numbers = #tpu.dot_dimension_numbers<[1], [0], [0], [1], [0, 0, 1, 1], [], []>} : vector<16x576xbf16>, vector<576x128xbf16>, vector<16x128xf32> -> vector<16x128xf32>
    %c0_3 = arith.constant 0 : index
    %c0_4 = arith.constant 0 : index
    %3 = vector.load %arg4[%c0_3, %c0_4] : memref<1x128xf32, #tpu.memory_space<vmem>>, vector<1x128xf32>
    %4 = vector.broadcast %3 : vector<1x128xf32> to vector<16x128xf32>
    %5 = arith.addf %2, %4 : vector<16x128xf32>
    %c0_5 = arith.constant 0 : index
    %c0_6 = arith.constant 0 : index
    %6 = vector.load %arg5[%c0_5, %c0_6] : memref<16x128xbf16, #tpu.memory_space<vmem>>, vector<16x128xbf16>
    %7 = arith.extf %6 : vector<16x128xbf16> to vector<16x128xf32>
    %8 = arith.addf %5, %7 : vector<16x128xf32>
    %cst_7 = arith.constant 0.000000e+00 : f32
    %9 = vector.broadcast %cst_7 : f32 to vector<16x128xf32>
    %10 = arith.maximumf %8, %9 : vector<16x128xf32>
    %11 = arith.truncf %10 : vector<16x128xf32> to vector<16x128xbf16>
    %c0_8 = arith.constant 0 : index
    %c0_9 = arith.constant 0 : index
    %12 = vector.load %arg6[%c0_8, %c0_9] : memref<16x128xbf16, #tpu.memory_space<vmem>>, vector<16x128xbf16>
    tpu.vector_store %arg6[%c0_8, %c0_9], %11 {strides = array<i32>} : memref<16x128xbf16, #tpu.memory_space<vmem>>, vector<16x128xbf16>,
    return
  }
  func.func @transform_0(%arg0: i32, %arg1: i32) -> (i32, i32) {
    %c0_i32 = arith.constant 0 : i32
    %c0_i32_0 = arith.constant 0 : i32
    return %arg0, %c0_i32 : i32, i32
  }
  func.func @transform_1(%arg0: i32, %arg1: i32) -> (i32, i32) {
    %c0_i32 = arith.constant 0 : i32
    %c0_i32_0 = arith.constant 0 : i32
    return %c0_i32, %arg1 : i32, i32
  }
  func.func @transform_2(%arg0: i32, %arg1: i32) -> (i32, i32) {
    %c0_i32 = arith.constant 0 : i32
    %c0_i32_0 = arith.constant 0 : i32
    return %c0_i32, %arg1 : i32, i32
  }
  func.func @transform_3(%arg0: i32, %arg1: i32) -> (i32, i32) {
    %c0_i32 = arith.constant 0 : i32
    return %arg0, %arg1 : i32, i32
  }
  func.func @transform_4(%arg0: i32, %arg1: i32) -> (i32, i32) {
    %c0_i32 = arith.constant 0 : i32
    return %arg0, %arg1 : i32, i32
  }
}

module attributes {stable_mosaic.version = 11 : i64} {
  func.func @kernel(%arg0: i32, %arg1: i32, %arg2: memref<256x176xbf16, #tpu.memory_space<vmem>>, %arg3: memref<176x128xbf16, #tpu.memory_space<vmem>>, %arg4: memref<1x128xf32, #tpu.memory_space<vmem>>, %arg5: memref<256x128xf32, #tpu.memory_space<vmem>>) attributes {dimension_semantics = [#tpu.dimension_semantics<parallel>, #tpu.dimension_semantics<parallel>], iteration_bounds = array<i64: 2, 1>, scalar_prefetch = 0 : i64, scratch_operands = 0 : i64, tpu.core_type = #tpu.core_type<tc>, window_params = [{transform_indices = @transform_0, window_bounds = array<i64: 256, 176>}, {transform_indices = @transform_1, window_bounds = array<i64: 176, 128>}, {transform_indices = @transform_2, window_bounds = array<i64: 1, 128>}, {transform_indices = @transform_3, window_bounds = array<i64: 256, 128>}]} {
    %c0 = arith.constant 0 : index
    %c0_0 = arith.constant 0 : index
    %0 = vector.load %arg2[%c0, %c0_0] : memref<256x176xbf16, #tpu.memory_space<vmem>>, vector<256x176xbf16>
    %c0_1 = arith.constant 0 : index
    %c0_2 = arith.constant 0 : index
    %1 = vector.load %arg3[%c0_1, %c0_2] : memref<176x128xbf16, #tpu.memory_space<vmem>>, vector<176x128xbf16>
    %cst = arith.constant dense<0.000000e+00> : vector<256x128xf32>
    %2 = tpu.matmul %0, %1, %cst {dimension_numbers = #tpu.dot_dimension_numbers<[1], [0], [0], [1], [0, 0, 1, 1], [], []>} : vector<256x176xbf16>, vector<176x128xbf16>, vector<256x128xf32> -> vector<256x128xf32>
    %c0_3 = arith.constant 0 : index
    %c0_4 = arith.constant 0 : index
    %3 = vector.load %arg4[%c0_3, %c0_4] : memref<1x128xf32, #tpu.memory_space<vmem>>, vector<1x128xf32>
    %4 = vector.broadcast %3 : vector<1x128xf32> to vector<256x128xf32>
    %5 = arith.addf %2, %4 : vector<256x128xf32>
    %c0_5 = arith.constant 0 : index
    %c0_6 = arith.constant 0 : index
    %6 = vector.load %arg5[%c0_5, %c0_6] : memref<256x128xf32, #tpu.memory_space<vmem>>, vector<256x128xf32>
    tpu.vector_store %arg5[%c0_5, %c0_6], %5 {strides = array<i32>} : memref<256x128xf32, #tpu.memory_space<vmem>>, vector<256x128xf32>,
    return
  }
  func.func @transform_0(%arg0: i32, %arg1: i32) -> (i32, i32) {
    %c0_i32 = arith.constant 0 : i32
    %c0_i32_0 = arith.constant 0 : i32
    return %arg0, %c0_i32 : i32, i32
  }
  func.func @transform_1(%arg0: i32, %arg1: i32) -> (i32, i32) {
    %c0_i32 = arith.constant 0 : i32
    %c0_i32_0 = arith.constant 0 : i32
    return %c0_i32, %arg1 : i32, i32
  }
  func.func @transform_2(%arg0: i32, %arg1: i32) -> (i32, i32) {
    %c0_i32 = arith.constant 0 : i32
    %c0_i32_0 = arith.constant 0 : i32
    return %c0_i32, %arg1 : i32, i32
  }
  func.func @transform_3(%arg0: i32, %arg1: i32) -> (i32, i32) {
    %c0_i32 = arith.constant 0 : i32
    return %arg0, %arg1 : i32, i32
  }
}

</mosaic_0001>

<llo_original>
// kernel: _lambda_.18
$region0: #{_lambda_.18}
  #allocation0 [shape = 'u32[]', space=smem, size = 0x4, offset = 0x4, fixed_abs, tag = 'smem constant byte address 0x4 - core index']
  #allocation1 [shape = 'u32[144,128]{1,0:T(1,128)}', space=vmem, size = 0x12000, scoped, tag = 'internal scratch']
  %s0 = inlined_call_operand.vmem [shape: bf16[512,160], index: 0, kind: input, shape index: {}]
  %s1 = inlined_call_operand.vmem [shape: bf16[160,128], index: 1, kind: input, shape index: {}]
  %s2 = inlined_call_operand.vmem [shape: f32[1,128], index: 2, kind: input, shape index: {}]
  %s3 = inlined_call_operand.vmem [shape: bf16[512,128], index: 3, kind: output, shape index: {}]
  %s4 = sld [smem:[#allocation0]]
  $region45: #{_lambda_.18} parent=0
    _
  %s6 = ssub.s32 1, %s4
  %s7 = scalar_select 0, %s6, %s4
  loop: start=0, step=1, limit=4
  $region2: #{_lambda_.18} parent=0 // loop_pre_header
    _
  $region3: #{_lambda_.18} parent=0 // loop_header
    %s9 = sphi 0, %s13
    %p10 = scmp.ge.s32.totalorder %s9, 4
    %s16 = sphi 0, %s28
    %s17 = sphi 0, %s24
    %s18 = sphi 0, %s16
    %s19 = sphi 0, %s17
    %s20 = sphi 0, %s18
    %s21 = sphi 0, %s19
    %s31 = sphi 0, %s33
    %s34 = sphi 0, %s31
    %s35 = sphi 0, %s34
    %s51 = sphi 0, %s35
    %s57 = sphi 0, %s59
    %s60 = sphi 0, %s57
    %s61 = sphi 0, %s60
    %s77 = sphi 0, %s61
    %s83 = sphi 0, %s85
    %s86 = sphi 0, %s83
    %s87 = sphi 0, %s86
    %s103 = sphi 0, %s87
    %s111 = sphi 0, %s113
    %s114 = sphi 0, %s111
    %s115 = sphi 0, %s114
    %s131 = sphi 0, %s115
  $region4: #{_lambda_.18} parent=0 // loop_header_branch
    %12 = sbr.rel (%p10) target = $region8
  $region5: #{_lambda_.18} parent=0 // loop_body
    %s14 = ssub.s32 %s9, 1
    %s15 = ssub.s32 %s9, 2
    %s22 = sadd.s32 1, %s17
    %p23 = scmp.ge.s32.totalorder %s22, 1
    %s24 = scalar_select %p23, 0, %s22
    %s25 = sadd.s32 1, %s16
    %s26 = scalar_select %p23, %s25, %s16
    %p27 = scmp.ge.s32.totalorder %s26, 2
    %s28 = scalar_select %p27, 0, %s26
    %s29 = ssub.s32 %s16, %s28
    %p30 = scmp.eq.s32.totalorder %s29, 0
    %s32 = sadd.s32 %s31, 1
    %s33 = scalar_select %p30, %s31, %s32
    %p36 = pneg %p30
    %p37 = scmp.eq.s32.totalorder %s9, 1
    %p38 = por %p36, %p37
    %p39 = scmp.ne.s32.totalorder %s31, %s34
    %p40 = scmp.eq.s32.totalorder %s9, 0
    %p41 = por %p39, %p40
    %p42 = scmp.ne.s32.totalorder %s31, %s34
    %p43 = scmp.eq.s32.totalorder %s14, 1
    %p44 = por %p42, %p43
    %p45 = scmp.ne.s32.totalorder %s34, %s35
    %p46 = scmp.eq.s32.totalorder %s14, 0
    %p47 = por %p45, %p46
    %p48 = scmp.ne.s32.totalorder %s34, %s35
    %p49 = scmp.eq.s32.totalorder %s15, 1
    %p50 = por %p48, %p49
    %p52 = scmp.ne.s32.totalorder %s35, %s51
    %p53 = scmp.eq.s32.totalorder %s15, 0
    %p54 = por %p52, %p53
    %s55 = ssub.s32 %s17, %s24
    %p56 = scmp.eq.s32.totalorder %s55, 0
    %s58 = sadd.s32 %s57, 1
    %s59 = scalar_select %p56, %s57, %s58
    %p62 = pneg %p56
    %p63 = scmp.eq.s32.totalorder %s9, 1
    %p64 = por %p62, %p63
    %p65 = scmp.ne.s32.totalorder %s57, %s60
    %p66 = scmp.eq.s32.totalorder %s9, 0
    %p67 = por %p65, %p66
    %p68 = scmp.ne.s32.totalorder %s57, %s60
    %p69 = scmp.eq.s32.totalorder %s14, 1
    %p70 = por %p68, %p69
    %p71 = scmp.ne.s32.totalorder %s60, %s61
    %p72 = scmp.eq.s32.totalorder %s14, 0
    %p73 = por %p71, %p72
    %p74 = scmp.ne.s32.totalorder %s60, %s61
    %p75 = scmp.eq.s32.totalorder %s15, 1
    %p76 = por %p74, %p75
    %p78 = scmp.ne.s32.totalorder %s61, %s77
    %p79 = scmp.eq.s32.totalorder %s15, 0
    %p80 = por %p78, %p79
    %s81 = ssub.s32 %s17, %s24
    %p82 = scmp.eq.s32.totalorder %s81, 0
    %s84 = sadd.s32 %s83, 1
    %s85 = scalar_select %p82, %s83, %s84
    %p88 = pneg %p82
    %p89 = scmp.eq.s32.totalorder %s9, 1
    %p90 = por %p88, %p89
    %p91 = scmp.ne.s32.totalorder %s83, %s86
    %p92 = scmp.eq.s32.totalorder %s9, 0
    %p93 = por %p91, %p92
    %p94 = scmp.ne.s32.totalorder %s83, %s86
    %p95 = scmp.eq.s32.totalorder %s14, 1
    %p96 = por %p94, %p95
    %p97 = scmp.ne.s32.totalorder %s86, %s87
    %p98 = scmp.eq.s32.totalorder %s14, 0
    %p99 = por %p97, %p98
    %p100 = scmp.ne.s32.totalorder %s86, %s87
    %p101 = scmp.eq.s32.totalorder %s15, 1
    %p102 = por %p100, %p101
    %p104 = scmp.ne.s32.totalorder %s87, %s103
    %p105 = scmp.eq.s32.totalorder %s15, 0
    %p106 = por %p104, %p105
    %s107 = ssub.s32 %s16, %s28
    %s108 = ssub.s32 %s17, %s24
    %s109 = sor.u32 %s107, %s108
    %p110 = scmp.eq.s32.totalorder %s109, 0
    %s112 = sadd.s32 %s111, 1
    %s113 = scalar_select %p110, %s111, %s112
    %p116 = pneg %p110
    %p117 = scmp.eq.s32.totalorder %s9, 1
    %p118 = por %p116, %p117
    %p119 = scmp.ne.s32.totalorder %s111, %s114
    %p120 = scmp.eq.s32.totalorder %s9, 0
    %p121 = por %p119, %p120
    %p122 = scmp.ne.s32.totalorder %s111, %s114
    %p123 = scmp.eq.s32.totalorder %s14, 1
    %p124 = por %p122, %p123
    %p125 = scmp.ne.s32.totalorder %s114, %s115
    %p126 = scmp.eq.s32.totalorder %s14, 0
    %p127 = por %p125, %p126
    %p128 = scmp.ne.s32.totalorder %s114, %s115
    %p129 = scmp.eq.s32.totalorder %s15, 1
    %p130 = por %p128, %p129
    %p132 = scmp.ne.s32.totalorder %s115, %s131
    %p133 = scmp.eq.s32.totalorder %s15, 0
    %p134 = por %p132, %p133
    %p135 = scmp.le.s32.totalorder 1, %s9
    %p136 = scmp.lt.s32.totalorder %s9, 3
    %p137 = pnand %p135, %p136
    %p138 = pneg %p137
    // Predicated region
    $region9: #{_lambda_.18} parent=5 // pred_check
      _
    $region10: #{_lambda_.18} parent=5 // pred_check_branch
      %140 = sbr.rel (%p137) target = $region12
    $region11: #{_lambda_.18} parent=5 // pred_region
      %s141 = ssub.s32 %s9, 1
      // Predicated region
      $region13: #{_lambda_.18} parent=11 // pred_check
        %p142 = pneg %p73
      $region14: #{_lambda_.18} parent=11 // pred_check_branch
        %144 = sbr.rel (%p142) target = $region16
      $region15: #{_lambda_.18} parent=11 // pred_region
        %p145 = scmp.lt.s32.totalorder %s19, 0
        %s146 = scalar_select %p145, %s19, 0
        %s147 = smul.addr %s146, 4
        %s148 = scalar_lea.vmem %s1, %s147
      $region16: #{_lambda_.18} parent=11 // pred_fallthru
        _
      // Predicated region
      $region17: #{_lambda_.18} parent=11 // pred_check
        %p149 = pneg %p99
      $region18: #{_lambda_.18} parent=11 // pred_check_branch
        %151 = sbr.rel (%p149) target = $region20
      $region19: #{_lambda_.18} parent=11 // pred_region
        %p152 = scmp.lt.s32.totalorder %s19, 0
        %s153 = scalar_select %p152, %s19, 0
        %s154 = scalar_lea.vmem %s2, %s153
      $region20: #{_lambda_.18} parent=11 // pred_fallthru
        _
    $region12: #{_lambda_.18} parent=5 // pred_fallthru
      _
    %p155 = scmp.lt.s32.totalorder %s9, 2
    // Predicated region
    $region21: #{_lambda_.18} parent=5 // pred_check
      %p156 = pneg %p155
    $region22: #{_lambda_.18} parent=5 // pred_check_branch
      %158 = sbr.rel (%p156) target = $region24
    $region23: #{_lambda_.18} parent=5 // pred_region
      // Predicated region
      $region25: #{_lambda_.18} parent=23 // pred_check
        %p159 = pneg %p41
      $region26: #{_lambda_.18} parent=23 // pred_check_branch
        %161 = sbr.rel (%p159) target = $region28
      $region27: #{_lambda_.18} parent=23 // pred_region
        %s162 = smul.u32 32, %s16
        %p163 = scmp.lt.s32.totalorder %s162, 63
        %s164 = scalar_select %p163, %s162, 63
        %s165 = smul.addr %s164, 2
        %s166 = smul.addr %s165, 4
        %s167 = scalar_lea.vmem %s0, %s166
        %s168 = smul.u32 32, %s16
      $region28: #{_lambda_.18} parent=23 // pred_fallthru
        _
    $region24: #{_lambda_.18} parent=5 // pred_fallthru
      _
    %p169 = scmp.le.s32.totalorder 1, %s9
    %p170 = scmp.lt.s32.totalorder %s9, 3
    %p171 = pnand %p169, %p170
    %p172 = pneg %p171
    // Predicated region
    $region29: #{_lambda_.18} parent=5 // pred_check
      _
    $region30: #{_lambda_.18} parent=5 // pred_check_branch
      %174 = sbr.rel (%p171) target = $region32
    $region31: #{_lambda_.18} parent=5 // pred_region
      %s175 = ssub.s32 %s9, 1
      %s176 = smul.u32 32, %s18
      %p177 = scmp.lt.s32.totalorder %s176, 63
      %s178 = scalar_select %p177, %s176, 63
      %s179 = smul.addr %s178, 2
      %s180 = smul.addr %s179, 4
      %s181 = scalar_lea.vmem %s0, %s180
      %p182 = pneg %p47
      %p183 = pneg %p44
      %p184 = scmp.lt.s32.totalorder %s19, 0
      %s185 = scalar_select %p184, %s19, 0
      %s186 = smul.addr %s185, 4
      %s187 = scalar_lea.vmem %s1, %s186
      %p188 = pneg %p73
      %p189 = pneg %p70
      %p190 = scmp.lt.s32.totalorder %s19, 0
      %s191 = scalar_select %p190, %s19, 0
      %s192 = scalar_lea.vmem %s2, %s191
      %p193 = pneg %p99
      %p194 = pneg %p96
      %p195 = pneg %p127
      %p196 = pneg %p124
      %s197 = smul.u32 32, %s18
      %p198 = scmp.lt.s32.totalorder %s197, 63
      %s199 = scalar_select %p198, %s197, 63
      %p200 = scmp.lt.s32.totalorder %s19, 0
      %s201 = scalar_select %p200, %s19, 0
      %s202 = sadd.s32 %s201, %s199
      %s203 = smul.addr %s202, 4
      %s204 = scalar_lea.vmem %s3, %s203
      %s205 = smul.u32 32, %s18
      %p206 = scmp.lt.s32.totalorder %s205, 63
      %s207 = scalar_select %p206, %s205, 63
      %s208 = smul.addr %s207, 2
      %s209 = smul.addr %s208, 4
      %s210 = scalar_lea.vmem %s0, %s209
      %s211 = smul.u32 32, %s18
      %p212 = scmp.lt.s32.totalorder %s19, 0
      %s213 = scalar_select %p212, %s19, 0
      %s214 = smul.addr %s213, 4
      %s215 = scalar_lea.vmem %s1, %s214
      %p216 = scmp.lt.s32.totalorder %s19, 0
      %s217 = scalar_select %p216, %s19, 0
      %s218 = scalar_lea.vmem %s2, %s217
      %s219 = smul.u32 32, %s18
      %p220 = scmp.lt.s32.totalorder %s219, 63
      %s221 = scalar_select %p220, %s219, 63
      %p222 = scmp.lt.s32.totalorder %s19, 0
      %s223 = scalar_select %p222, %s19, 0
      %s224 = sadd.s32 %s223, %s221
      %s225 = smul.addr %s224, 4
      %s226 = scalar_lea.vmem %s3, %s225
      %s227 = smul.u32 32, %s18
      %v229 = vld [vmem:[%s210] sm:$0xff]
      %v230 = vld [vmem:[%s210 + $0x8] sm:$0xff]
      %v231 = vld [vmem:[%s210 + $0x10] sm:$0xff]
      %v232 = vld [vmem:[%s210 + $0x18] sm:$0xff]
      %v233 = vld [vmem:[%s210 + $0x20] sm:$0xff]
      %v234 = vld [vmem:[%s210 + $0x28] sm:$0xff]
      %v235 = vld [vmem:[%s210 + $0x30] sm:$0xff]
      %v236 = vld [vmem:[%s210 + $0x38] sm:$0xff]
      %v237 = vld [vmem:[%s210 + $0x40] sm:$0xff]
      %v238 = vld [vmem:[%s210 + $0x48] sm:$0xff]
      %v239 = vld [vmem:[%s210 + $0x50] sm:$0xff]
      %v240 = vld [vmem:[%s210 + $0x58] sm:$0xff]
      %v241 = vld [vmem:[%s210 + $0x60] sm:$0xff]
      %v242 = vld [vmem:[%s210 + $0x68] sm:$0xff]
      %v243 = vld [vmem:[%s210 + $0x70] sm:$0xff]
      %v244 = vld [vmem:[%s210 + $0x78] sm:$0xff]
      %v245 = vld [vmem:[%s210 + $0x80] sm:$0xff]
      %v246 = vld [vmem:[%s210 + $0x88] sm:$0xff]
      %v247 = vld [vmem:[%s210 + $0x90] sm:$0xff]
      %v248 = vld [vmem:[%s210 + $0x98] sm:$0xff]
      %v249 = vld [vmem:[%s210 + $0xa0] sm:$0xff]
      %v250 = vld [vmem:[%s210 + $0xa8] sm:$0xff]
      %v251 = vld [vmem:[%s210 + $0xb0] sm:$0xff]
      %v252 = vld [vmem:[%s210 + $0xb8] sm:$0xff]
      %v253 = vld [vmem:[%s210 + $0xc0] sm:$0xff]
      %v254 = vld [vmem:[%s210 + $0xc8] sm:$0xff]
      %v255 = vld [vmem:[%s210 + $0xd0] sm:$0xff]
      %v256 = vld [vmem:[%s210 + $0xd8] sm:$0xff]
      %v257 = vld [vmem:[%s210 + $0xe0] sm:$0xff]
      %v258 = vld [vmem:[%s210 + $0xe8] sm:$0xff]
      %v259 = vld [vmem:[%s210 + $0xf0] sm:$0xff]
      %v260 = vld [vmem:[%s210 + $0xf8] sm:$0xff]
      %v261 = vld [vmem:[%s215] sm:$0xf]
      %v262 = vld [vmem:[%s215 + $0x4] sm:$0xf]
      %v263 = vld [vmem:[%s215 + $0x8] sm:$0xf]
      %v264 = vld [vmem:[%s215 + $0xc] sm:$0xf]
      %v265 = vld [vmem:[%s215 + $0x10] sm:$0xf]
      %v266 = vld [vmem:[%s215 + $0x14] sm:$0xf]
      %v267 = vld [vmem:[%s215 + $0x18] sm:$0xf]
      %v268 = vld [vmem:[%s215 + $0x1c] sm:$0xf]
      %v269 = vld [vmem:[%s215 + $0x20] sm:$0xf]
      %v270 = vld [vmem:[%s215 + $0x24] sm:$0xf]
      %v271 = vld [vmem:[%s215 + $0x28] sm:$0xf]
      %v272 = vld [vmem:[%s215 + $0x2c] sm:$0xf]
      %v273 = vld [vmem:[%s215 + $0x30] sm:$0xf]
      %v274 = vld [vmem:[%s215 + $0x34] sm:$0xf]
      %v275 = vld [vmem:[%s215 + $0x38] sm:$0xf]
      %v276 = vld [vmem:[%s215 + $0x3c] sm:$0xf]
      %v277 = vld [vmem:[%s215 + $0x40] sm:$0xf]
      %v278 = vld [vmem:[%s215 + $0x44] sm:$0xf]
      %v279 = vld [vmem:[%s215 + $0x48] sm:$0xf]
      %v280 = vld [vmem:[%s215 + $0x4c] sm:$0xf]
      %v281 = vld [vmem:[%s218] sm:$0x1]
      %v283 = vlaneseq
      %v284 = vshrl.u32 %v283, 7
      %v285 = vsub.s32 0, %v284
      %v286 = vrot.slane %v281, %v285
      %v320 = vunpack.c.l.b16 %v229
      %v321 = vunpack.c.h.b16 %v229
      %v322 = vunpack.c.l.b16 %v230
      %v323 = vunpack.c.h.b16 %v230
      %v324 = vunpack.c.l.b16 %v231
      %v325 = vunpack.c.h.b16 %v231
      %v326 = vunpack.c.l.b16 %v232
      %v327 = vunpack.c.h.b16 %v232
      %v328 = vunpack.c.l.b16 %v233
      %v329 = vunpack.c.h.b16 %v233
      %v330 = vunpack.c.l.b16 %v234
      %v331 = vunpack.c.h.b16 %v234
      %v332 = vunpack.c.l.b16 %v235
      %v333 = vunpack.c.h.b16 %v235
      %v334 = vunpack.c.l.b16 %v236
      %v335 = vunpack.c.h.b16 %v236
      %v336 = vunpack.c.l.b16 %v237
      %v337 = vunpack.c.h.b16 %v237
      %v338 = vunpack.c.l.b16 %v238
      %v339 = vunpack.c.h.b16 %v238
      %v340 = vunpack.c.l.b16 %v239
      %v341 = vunpack.c.h.b16 %v239
      %v342 = vunpack.c.l.b16 %v240
      %v343 = vunpack.c.h.b16 %v240
      %v344 = vunpack.c.l.b16 %v241
      %v345 = vunpack.c.h.b16 %v241
      %v346 = vunpack.c.l.b16 %v242
      %v347 = vunpack.c.h.b16 %v242
      %v348 = vunpack.c.l.b16 %v243
      %v349 = vunpack.c.h.b16 %v243
      %v350 = vunpack.c.l.b16 %v244
      %v351 = vunpack.c.h.b16 %v244
      %v352 = vunpack.c.l.b16 %v245
      %v353 = vunpack.c.h.b16 %v245
      %v354 = vunpack.c.l.b16 %v246
      %v355 = vunpack.c.h.b16 %v246
      %v356 = vunpack.c.l.b16 %v247
      %v357 = vunpack.c.h.b16 %v247
      %v358 = vunpack.c.l.b16 %v248
      %v359 = vunpack.c.h.b16 %v248
      %v360 = vunpack.c.l.b16 %v249
      %v361 = vunpack.c.h.b16 %v249
      %v362 = vunpack.c.l.b16 %v250
      %v363 = vunpack.c.h.b16 %v250
      %v364 = vunpack.c.l.b16 %v251
      %v365 = vunpack.c.h.b16 %v251
      %v366 = vunpack.c.l.b16 %v252
      %v367 = vunpack.c.h.b16 %v252
      %v368 = vunpack.c.l.b16 %v253
      %v369 = vunpack.c.h.b16 %v253
      %v370 = vunpack.c.l.b16 %v254
      %v371 = vunpack.c.h.b16 %v254
      %v372 = vunpack.c.l.b16 %v255
      %v373 = vunpack.c.h.b16 %v255
      %v374 = vunpack.c.l.b16 %v256
      %v375 = vunpack.c.h.b16 %v256
      %v376 = vunpack.c.l.b16 %v257
      %v377 = vunpack.c.h.b16 %v257
      %v378 = vunpack.c.l.b16 %v258
      %v379 = vunpack.c.h.b16 %v258
      %v380 = vunpack.c.l.b16 %v259
      %v381 = vunpack.c.h.b16 %v259
      %v382 = vunpack.c.l.b16 %v260
      %v383 = vunpack.c.h.b16 %v260
      %v384 = vpack.c.b16 %v322, %v320
      %v385 = vpack.c.b16 %v323, %v321
      %v386 = vpack.c.b16 %v326, %v324
      %v387 = vpack.c.b16 %v327, %v325
      %v388 = vpack.c.b16 %v330, %v328
      %v389 = vpack.c.b16 %v331, %v329
      %v390 = vpack.c.b16 %v334, %v332
      %v391 = vpack.c.b16 %v335, %v333
      %v392 = vpack.c.b16 %v338, %v336
      %v393 = vpack.c.b16 %v339, %v337
      %v394 = vpack.c.b16 %v342, %v340
      %v395 = vpack.c.b16 %v343, %v341
      %v396 = vpack.c.b16 %v346, %v344
      %v397 = vpack.c.b16 %v347, %v345
      %v398 = vpack.c.b16 %v350, %v348
      %v399 = vpack.c.b16 %v351, %v349
      %v400 = vpack.c.b16 %v354, %v352
      %v401 = vpack.c.b16 %v355, %v353
      %v402 = vpack.c.b16 %v358, %v356
      %v403 = vpack.c.b16 %v359, %v357
      %v404 = vpack.c.b16 %v362, %v360
      %v405 = vpack.c.b16 %v363, %v361
      %v406 = vpack.c.b16 %v366, %v364
      %v407 = vpack.c.b16 %v367, %v365
      %v408 = vpack.c.b16 %v370, %v368
      %v409 = vpack.c.b16 %v371, %v369
      %v410 = vpack.c.b16 %v374, %v372
      %v411 = vpack.c.b16 %v375, %v373
      %v412 = vpack.c.b16 %v378, %v376
      %v413 = vpack.c.b16 %v379, %v377
      %v414 = vpack.c.b16 %v382, %v380
      %v415 = vpack.c.b16 %v383, %v381
      %v452 = vunpack.c.l.b16 %v261
      %v453 = vunpack.c.l.b16 %v262
      %v454 = vunpack.c.l.b16 %v263
      %v455 = vunpack.c.l.b16 %v264
      %v456 = vunpack.c.l.b16 %v265
      %v457 = vunpack.c.l.b16 %v266
      %v458 = vunpack.c.l.b16 %v267
      %v459 = vunpack.c.l.b16 %v268
      %v460 = vunpack.c.l.b16 %v269
      %v461 = vunpack.c.l.b16 %v270
      %v462 = vunpack.c.l.b16 %v271
      %v463 = vunpack.c.l.b16 %v272
      %v464 = vunpack.c.l.b16 %v273
      %v465 = vunpack.c.l.b16 %v274
      %v466 = vunpack.c.l.b16 %v275
      %v467 = vunpack.c.l.b16 %v276
      %v468 = vunpack.c.l.b16 %v277
      %v469 = vunpack.c.l.b16 %v278
      %v470 = vunpack.c.l.b16 %v279
      %v471 = vunpack.c.l.b16 %v280
      %v472 = vpack.c.b16 %v453, %v452
      %v473 = vpack.c.b16 %v455, %v454
      %v474 = vpack.c.b16 %v457, %v456
      %v475 = vpack.c.b16 %v459, %v458
      %v476 = vpack.c.b16 %v461, %v460
      %v477 = vpack.c.b16 %v463, %v462
      %v478 = vpack.c.b16 %v465, %v464
      %v479 = vpack.c.b16 %v467, %v466
      %v480 = vpack.c.b16 %v469, %v468
      %v481 = vpack.c.b16 %v471, %v470
      %vm492 = vcmask 261120
      %v494 = vsel %vm492, %v385, 0
      %v497 = vsel %vm492, %v387, 0
      %v500 = vsel %vm492, %v389, 0
      %v503 = vsel %vm492, %v391, 0
      %v506 = vsel %vm492, %v393, 0
      %v509 = vsel %vm492, %v395, 0
      %v512 = vsel %vm492, %v397, 0
      %v515 = vsel %vm492, %v399, 0
      %v518 = vsel %vm492, %v401, 0
      %v521 = vsel %vm492, %v403, 0
      %v524 = vsel %vm492, %v405, 0
      %v527 = vsel %vm492, %v407, 0
      %v530 = vsel %vm492, %v409, 0
      %v533 = vsel %vm492, %v411, 0
      %v536 = vsel %vm492, %v413, 0
      %v539 = vsel %vm492, %v415, 0
      %541 = vmatprep.subr.bf16.mxu0 0
      %542 = vmatpush1.bf16.msra.mxu0 %v472
      %543 = vmatprep.subr.bf16.mxu0 0
      %544 = vmatpush1.bf16.msra.mxu0 %v473
      %545 = vmatprep.subr.bf16.mxu0 0
      %546 = vmatpush1.bf16.msra.mxu0 %v474
      %547 = vmatprep.subr.bf16.mxu0 0
      %548 = vmatpush1.bf16.msra.mxu0 %v475
      %549 = vmatprep.subr.bf16.mxu0 0
      %550 = vmatpush1.bf16.msra.mxu0 %v476
      %551 = vmatprep.subr.bf16.mxu0 0
      %552 = vmatpush1.bf16.msra.mxu0 %v477
      %553 = vmatprep.subr.bf16.mxu0 0
      %554 = vmatpush1.bf16.msra.mxu0 %v478
      %555 = vmatprep.subr.bf16.mxu0 0
      %556 = vmatpush1.bf16.msra.mxu0 %v479
      %557 = vmatprep.subr.bf16.mxu0 0
      %558 = vmatpush1.bf16.msra.mxu0 %v480
      %559 = vmatprep.subr.bf16.mxu0 0
      %560 = vmatpush1.bf16.msra.mxu0 %v481
      %561 = vmatprep.subr.bf16.mxu0 0
      %562 = vmatpush1.bf16.msra.mxu0 0
      %563 = vmatprep.subr.bf16.mxu0 0
      %564 = vmatpush1.bf16.msra.mxu0 0
      %565 = vmatprep.subr.bf16.mxu0 0
      %566 = vmatpush1.bf16.msra.mxu0 0
      %567 = vmatprep.subr.bf16.mxu0 0
      %568 = vmatpush1.bf16.msra.mxu0 0
      %569 = vmatprep.subr.bf16.mxu0 0
      %570 = vmatpush1.bf16.msra.mxu0 0
      %571 = vmatprep.subr.bf16.mxu0 0
      %572 = vmatpush1.bf16.msra.mxu0 0
      %573 = vmatprep.mubr.bf16.mxu0 %v494
      %574 = vmatmul.mubr.bf16.gmra.mrb[0].mxu0 %v384
      %v575 = vpop.f32.mrb[0].mxu0
      %v576 = vadd.f32 %v286, %v575
      %v577 = vpop.f32.mrb[0].mxu0
      %v578 = vpop.f32.mrb[0].mxu0
      %v579 = vadd.f32 %v286, %v578
      %v580 = vpop.f32.mrb[0].mxu0
      %581 = vmatprep.mubr.bf16.mxu0 %v497
      %582 = vmatmul.mubr.bf16.gmra.mrb[0].mxu0 %v386
      %v583 = vpop.f32.mrb[0].mxu0
      %v584 = vadd.f32 %v286, %v583
      %v585 = vpop.f32.mrb[0].mxu0
      %v586 = vpop.f32.mrb[0].mxu0
      %v587 = vadd.f32 %v286, %v586
      %v588 = vpop.f32.mrb[0].mxu0
      %589 = vmatprep.mubr.bf16.mxu0 %v500
      %590 = vmatmul.mubr.bf16.gmra.mrb[0].mxu0 %v388
      %v591 = vpop.f32.mrb[0].mxu0
      %v592 = vadd.f32 %v286, %v591
      %v593 = vpop.f32.mrb[0].mxu0
      %v594 = vpop.f32.mrb[0].mxu0
      %v595 = vadd.f32 %v286, %v594
      %v596 = vpop.f32.mrb[0].mxu0
      %597 = vmatprep.mubr.bf16.mxu0 %v503
      %598 = vmatmul.mubr.bf16.gmra.mrb[0].mxu0 %v390
      %v599 = vpop.f32.mrb[0].mxu0
      %v600 = vadd.f32 %v286, %v599
      %v601 = vpop.f32.mrb[0].mxu0
      %v602 = vpop.f32.mrb[0].mxu0
      %v603 = vadd.f32 %v286, %v602
      %v604 = vpop.f32.mrb[0].mxu0
      %605 = vmatprep.mubr.bf16.mxu0 %v506
      %606 = vmatmul.mubr.bf16.gmra.mrb[0].mxu0 %v392
      %v607 = vpop.f32.mrb[0].mxu0
      %v608 = vadd.f32 %v286, %v607
      %v609 = vpop.f32.mrb[0].mxu0
      %v610 = vpop.f32.mrb[0].mxu0
      %v611 = vadd.f32 %v286, %v610
      %v612 = vpop.f32.mrb[0].mxu0
      %613 = vmatprep.mubr.bf16.mxu0 %v509
      %614 = vmatmul.mubr.bf16.gmra.mrb[0].mxu0 %v394
      %v615 = vpop.f32.mrb[0].mxu0
      %v616 = vadd.f32 %v286, %v615
      %v617 = vpop.f32.mrb[0].mxu0
      %v618 = vpop.f32.mrb[0].mxu0
      %v619 = vadd.f32 %v286, %v618
      %v620 = vpop.f32.mrb[0].mxu0
      %621 = vmatprep.mubr.bf16.mxu0 %v512
      %622 = vmatmul.mubr.bf16.gmra.mrb[0].mxu0 %v396
      %v623 = vpop.f32.mrb[0].mxu0
      %v624 = vadd.f32 %v286, %v623
      %v625 = vpop.f32.mrb[0].mxu0
      %v626 = vpop.f32.mrb[0].mxu0
      %v627 = vadd.f32 %v286, %v626
      %v628 = vpop.f32.mrb[0].mxu0
      %629 = vmatprep.mubr.bf16.mxu0 %v515
      %630 = vmatmul.mubr.bf16.gmra.mrb[0].mxu0 %v398
      %v631 = vpop.f32.mrb[0].mxu0
      %v632 = vadd.f32 %v286, %v631
      %v633 = vpop.f32.mrb[0].mxu0
      %v634 = vpop.f32.mrb[0].mxu0
      %v635 = vadd.f32 %v286, %v634
      %v636 = vpop.f32.mrb[0].mxu0
      %637 = vmatprep.mubr.bf16.mxu0 %v518
      %638 = vmatmul.mubr.bf16.gmra.mrb[0].mxu0 %v400
      %v639 = vpop.f32.mrb[0].mxu0
      %v640 = vadd.f32 %v286, %v639
      %v641 = vpop.f32.mrb[0].mxu0
      %v642 = vpop.f32.mrb[0].mxu0
      %v643 = vadd.f32 %v286, %v642
      %v644 = vpop.f32.mrb[0].mxu0
      %645 = vmatprep.mubr.bf16.mxu0 %v521
      %646 = vmatmul.mubr.bf16.gmra.mrb[0].mxu0 %v402
      %v647 = vpop.f32.mrb[0].mxu0
      %v648 = vadd.f32 %v286, %v647
      %v649 = vpop.f32.mrb[0].mxu0
      %v650 = vpop.f32.mrb[0].mxu0
      %v651 = vadd.f32 %v286, %v650
      %v652 = vpop.f32.mrb[0].mxu0
      %653 = vmatprep.mubr.bf16.mxu0 %v524
      %654 = vmatmul.mubr.bf16.gmra.mrb[0].mxu0 %v404
      %v655 = vpop.f32.mrb[0].mxu0
      %v656 = vadd.f32 %v286, %v655
      %v657 = vpop.f32.mrb[0].mxu0
      %v658 = vpop.f32.mrb[0].mxu0
      %v659 = vadd.f32 %v286, %v658
      %v660 = vpop.f32.mrb[0].mxu0
      %661 = vmatprep.mubr.bf16.mxu0 %v527
      %662 = vmatmul.mubr.bf16.gmra.mrb[0].mxu0 %v406
      %v663 = vpop.f32.mrb[0].mxu0
      %v664 = vadd.f32 %v286, %v663
      %v665 = vpop.f32.mrb[0].mxu0
      %v666 = vpop.f32.mrb[0].mxu0
      %v667 = vadd.f32 %v286, %v666
      %v668 = vpop.f32.mrb[0].mxu0
      %669 = vmatprep.mubr.bf16.mxu0 %v530
      %670 = vmatmul.mubr.bf16.gmra.mrb[0].mxu0 %v408
      %v671 = vpop.f32.mrb[0].mxu0
      %v672 = vadd.f32 %v286, %v671
      %v673 = vpop.f32.mrb[0].mxu0
      %v674 = vpop.f32.mrb[0].mxu0
      %v675 = vadd.f32 %v286, %v674
      %v676 = vpop.f32.mrb[0].mxu0
      %677 = vmatprep.mubr.bf16.mxu0 %v533
      %678 = vmatmul.mubr.bf16.gmra.mrb[0].mxu0 %v410
      %v679 = vpop.f32.mrb[0].mxu0
      %v680 = vadd.f32 %v286, %v679
      %v681 = vpop.f32.mrb[0].mxu0
      %v682 = vpop.f32.mrb[0].mxu0
      %v683 = vadd.f32 %v286, %v682
      %v684 = vpop.f32.mrb[0].mxu0
      %685 = vmatprep.mubr.bf16.mxu0 %v536
      %686 = vmatmul.mubr.bf16.gmra.mrb[0].mxu0 %v412
      %v687 = vpop.f32.mrb[0].mxu0
      %v688 = vadd.f32 %v286, %v687
      %v689 = vpop.f32.mrb[0].mxu0
      %v690 = vpop.f32.mrb[0].mxu0
      %v691 = vadd.f32 %v286, %v690
      %v692 = vpop.f32.mrb[0].mxu0
      %693 = vmatprep.mubr.bf16.mxu0 %v539
      %694 = vmatmul.mubr.bf16.gmra.mrb[0].mxu0 %v414
      %v695 = vpop.f32.mrb[0].mxu0
      %v696 = vadd.f32 %v286, %v695
      %v697 = vpop.f32.mrb[0].mxu0
      %v698 = vpop.f32.mrb[0].mxu0
      %v699 = vadd.f32 %v286, %v698
      %v700 = vpop.f32.mrb[0].mxu0
      %701 = vdwg.mxu0
      %v702 = vmax.f32 %v576, 0.0
      %v703 = vmax.f32 %v579, 0.0
      %v704 = vmax.f32 %v584, 0.0
      %v705 = vmax.f32 %v587, 0.0
      %v706 = vmax.f32 %v592, 0.0
      %v707 = vmax.f32 %v595, 0.0
      %v708 = vmax.f32 %v600, 0.0
      %v709 = vmax.f32 %v603, 0.0
      %v710 = vmax.f32 %v608, 0.0
      %v711 = vmax.f32 %v611, 0.0
      %v712 = vmax.f32 %v616, 0.0
      %v713 = vmax.f32 %v619, 0.0
      %v714 = vmax.f32 %v624, 0.0
      %v715 = vmax.f32 %v627, 0.0
      %v716 = vmax.f32 %v632, 0.0
      %v717 = vmax.f32 %v635, 0.0
      %v718 = vmax.f32 %v640, 0.0
      %v719 = vmax.f32 %v643, 0.0
      %v720 = vmax.f32 %v648, 0.0
      %v721 = vmax.f32 %v651, 0.0
      %v722 = vmax.f32 %v656, 0.0
      %v723 = vmax.f32 %v659, 0.0
      %v724 = vmax.f32 %v664, 0.0
      %v725 = vmax.f32 %v667, 0.0
      %v726 = vmax.f32 %v672, 0.0
      %v727 = vmax.f32 %v675, 0.0
      %v728 = vmax.f32 %v680, 0.0
      %v729 = vmax.f32 %v683, 0.0
      %v730 = vmax.f32 %v688, 0.0
      %v731 = vmax.f32 %v691, 0.0
      %v732 = vmax.f32 %v696, 0.0
      %v733 = vmax.f32 %v699, 0.0
      %v734 = vpack.c.bf16 %v703, %v702
      %v735 = vpack.c.bf16 %v705, %v704
      %v736 = vpack.c.bf16 %v707, %v706
      %v737 = vpack.c.bf16 %v709, %v708
      %v738 = vpack.c.bf16 %v711, %v710
      %v739 = vpack.c.bf16 %v713, %v712
      %v740 = vpack.c.bf16 %v715, %v714
      %v741 = vpack.c.bf16 %v717, %v716
      %v742 = vpack.c.bf16 %v719, %v718
      %v743 = vpack.c.bf16 %v721, %v720
      %v744 = vpack.c.bf16 %v723, %v722
      %v745 = vpack.c.bf16 %v725, %v724
      %v746 = vpack.c.bf16 %v727, %v726
      %v747 = vpack.c.bf16 %v729, %v728
      %v748 = vpack.c.bf16 %v731, %v730
      %v749 = vpack.c.bf16 %v733, %v732
      %v766 = vunpack.c.l.b16 %v734
      %v767 = vunpack.c.h.b16 %v734
      %v768 = vunpack.c.l.b16 %v735
      %v769 = vunpack.c.h.b16 %v735
      %v770 = vunpack.c.l.b16 %v736
      %v771 = vunpack.c.h.b16 %v736
      %v772 = vunpack.c.l.b16 %v737
      %v773 = vunpack.c.h.b16 %v737
      %v774 = vunpack.c.l.b16 %v738
      %v775 = vunpack.c.h.b16 %v738
      %v776 = vunpack.c.l.b16 %v739
      %v777 = vunpack.c.h.b16 %v739
      %v778 = vunpack.c.l.b16 %v740
      %v779 = vunpack.c.h.b16 %v740
      %v780 = vunpack.c.l.b16 %v741
      %v781 = vunpack.c.h.b16 %v741
      %v782 = vunpack.c.l.b16 %v742
      %v783 = vunpack.c.h.b16 %v742
      %v784 = vunpack.c.l.b16 %v743
      %v785 = vunpack.c.h.b16 %v743
      %v786 = vunpack.c.l.b16 %v744
      %v787 = vunpack.c.h.b16 %v744
      %v788 = vunpack.c.l.b16 %v745
      %v789 = vunpack.c.h.b16 %v745
      %v790 = vunpack.c.l.b16 %v746
      %v791 = vunpack.c.h.b16 %v746
      %v792 = vunpack.c.l.b16 %v747
      %v793 = vunpack.c.h.b16 %v747
      %v794 = vunpack.c.l.b16 %v748
      %v795 = vunpack.c.h.b16 %v748
      %v796 = vunpack.c.l.b16 %v749
      %v797 = vunpack.c.h.b16 %v749
      %v798 = vpack.c.b16 %v766, %v766
      %v799 = vpack.c.b16 %v767, %v767
      %v800 = vpack.c.b16 %v768, %v768
      %v801 = vpack.c.b16 %v769, %v769
      %v802 = vpack.c.b16 %v770, %v770
      %v803 = vpack.c.b16 %v771, %v771
      %v804 = vpack.c.b16 %v772, %v772
      %v805 = vpack.c.b16 %v773, %v773
      %v806 = vpack.c.b16 %v774, %v774
      %v807 = vpack.c.b16 %v775, %v775
      %v808 = vpack.c.b16 %v776, %v776
      %v809 = vpack.c.b16 %v777, %v777
      %v810 = vpack.c.b16 %v778, %v778
      %v811 = vpack.c.b16 %v779, %v779
      %v812 = vpack.c.b16 %v780, %v780
      %v813 = vpack.c.b16 %v781, %v781
      %v814 = vpack.c.b16 %v782, %v782
      %v815 = vpack.c.b16 %v783, %v783
      %v816 = vpack.c.b16 %v784, %v784
      %v817 = vpack.c.b16 %v785, %v785
      %v818 = vpack.c.b16 %v786, %v786
      %v819 = vpack.c.b16 %v787, %v787
      %v820 = vpack.c.b16 %v788, %v788
      %v821 = vpack.c.b16 %v789, %v789
      %v822 = vpack.c.b16 %v790, %v790
      %v823 = vpack.c.b16 %v791, %v791
      %v824 = vpack.c.b16 %v792, %v792
      %v825 = vpack.c.b16 %v793, %v793
      %v826 = vpack.c.b16 %v794, %v794
      %v827 = vpack.c.b16 %v795, %v795
      %v828 = vpack.c.b16 %v796, %v796
      %v829 = vpack.c.b16 %v797, %v797
      %862 = vst [vmem:[%s226] sm:$0xf] %v798
      %863 = vst [vmem:[%s226 + $0x4] sm:$0xf] %v799
      %864 = vst [vmem:[%s226 + $0x8] sm:$0xf] %v800
      %865 = vst [vmem:[%s226 + $0xc] sm:$0xf] %v801
      %866 = vst [vmem:[%s226 + $0x10] sm:$0xf] %v802
      %867 = vst [vmem:[%s226 + $0x14] sm:$0xf] %v803
      %868 = vst [vmem:[%s226 + $0x18] sm:$0xf] %v804
      %869 = vst [vmem:[%s226 + $0x1c] sm:$0xf] %v805
      %870 = vst [vmem:[%s226 + $0x20] sm:$0xf] %v806
      %871 = vst [vmem:[%s226 + $0x24] sm:$0xf] %v807
      %872 = vst [vmem:[%s226 + $0x28] sm:$0xf] %v808
      %873 = vst [vmem:[%s226 + $0x2c] sm:$0xf] %v809
      %874 = vst [vmem:[%s226 + $0x30] sm:$0xf] %v810
      %875 = vst [vmem:[%s226 + $0x34] sm:$0xf] %v811
      %876 = vst [vmem:[%s226 + $0x38] sm:$0xf] %v812
      %877 = vst [vmem:[%s226 + $0x3c] sm:$0xf] %v813
      %878 = vst [vmem:[%s226 + $0x40] sm:$0xf] %v814
      %879 = vst [vmem:[%s226 + $0x44] sm:$0xf] %v815
      %880 = vst [vmem:[%s226 + $0x48] sm:$0xf] %v816
      %881 = vst [vmem:[%s226 + $0x4c] sm:$0xf] %v817
      %882 = vst [vmem:[%s226 + $0x50] sm:$0xf] %v818
      %883 = vst [vmem:[%s226 + $0x54] sm:$0xf] %v819
      %884 = vst [vmem:[%s226 + $0x58] sm:$0xf] %v820
      %885 = vst [vmem:[%s226 + $0x5c] sm:$0xf] %v821
      %886 = vst [vmem:[%s226 + $0x60] sm:$0xf] %v822
      %887 = vst [vmem:[%s226 + $0x64] sm:$0xf] %v823
      %888 = vst [vmem:[%s226 + $0x68] sm:$0xf] %v824
      %889 = vst [vmem:[%s226 + $0x6c] sm:$0xf] %v825
      %890 = vst [vmem:[%s226 + $0x70] sm:$0xf] %v826
      %891 = vst [vmem:[%s226 + $0x74] sm:$0xf] %v827
      %892 = vst [vmem:[%s226 + $0x78] sm:$0xf] %v828
      %893 = vst [vmem:[%s226 + $0x7c] sm:$0xf] %v829
      %s894 = smul.u32 32, %s18
      %p895 = scmp.lt.s32.totalorder %s894, 63
      %s896 = scalar_select %p895, %s894, 63
      %p897 = scmp.lt.s32.totalorder %s19, 0
      %s898 = scalar_select %p897, %s19, 0
      %s899 = sadd.s32 %s898, %s896
      %s900 = smul.addr %s899, 4
      %s901 = scalar_lea.vmem %s3, %s900
      // Predicated region
      $region33: #{_lambda_.18} parent=31 // pred_check
        %p902 = pneg %p124
      $region34: #{_lambda_.18} parent=31 // pred_check_branch
        %904 = sbr.rel (%p902) target = $region36
      $region35: #{_lambda_.18} parent=31 // pred_region
        %s905 = smul.u32 32, %s18
      $region36: #{_lambda_.18} parent=31 // pred_fallthru
        _
    $region32: #{_lambda_.18} parent=5 // pred_fallthru
      _
    %p906 = scmp.le.s32.totalorder 2, %s9
    // Predicated region
    $region37: #{_lambda_.18} parent=5 // pred_check
      %p907 = pneg %p906
    $region38: #{_lambda_.18} parent=5 // pred_check_branch
      %909 = sbr.rel (%p907) target = $region40
    $region39: #{_lambda_.18} parent=5 // pred_region
      %s910 = ssub.s32 %s9, 2
      // Predicated region
      $region41: #{_lambda_.18} parent=39 // pred_check
        %p911 = pneg %p130
      $region42: #{_lambda_.18} parent=39 // pred_check_branch
        %913 = sbr.rel (%p911) target = $region44
      $region43: #{_lambda_.18} parent=39 // pred_region
        %s914 = smul.u32 32, %s20
        %p915 = scmp.lt.s32.totalorder %s914, 63
        %s916 = scalar_select %p915, %s914, 63
        %p917 = scmp.lt.s32.totalorder %s21, 0
        %s918 = scalar_select %p917, %s21, 0
        %s919 = sadd.s32 %s918, %s916
        %s920 = smul.addr %s919, 4
        %s921 = scalar_lea.vmem %s3, %s920
      $region44: #{_lambda_.18} parent=39 // pred_fallthru
        _
    $region40: #{_lambda_.18} parent=5 // pred_fallthru
      _
  $region6: #{_lambda_.18} parent=0 // loop_footer
    %s13 = sadd.s32 1, %s9
  $region7: #{_lambda_.18} parent=0 // loop_footer_branch
    %8 = sbr.rel target = $region3
  $region8: #{_lambda_.18} parent=0 // loop_exit
    _

// kernel: _lambda_.19
$region0: #{_lambda_.19}
  #allocation0 [shape = 'u32[]', space=smem, size = 0x4, offset = 0x4, fixed_abs, tag = 'smem constant byte address 0x4 - core index']
  #allocation1 [shape = 'u32[144,128]{1,0:T(1,128)}', space=vmem, size = 0x12000, scoped, tag = 'internal scratch']
  %s0 = inlined_call_operand.vmem [shape: bf16[3,384,128], index: 0, kind: input, shape index: {}]
  %s1 = inlined_call_operand.vmem [shape: bf16[384,128], index: 1, kind: output, shape index: {}]
  %s2 = sld [smem:[#allocation0]]
  $region78: #{_lambda_.19} parent=0
    _
  %s4 = ssub.s32 1, %s2
  %s5 = scalar_select 0, %s4, %s2
  $region1: #{_lambda_.19} parent=0
    #allocation2 [shape = 'u8[196608]{0}', space=vmem, size = 0x30000, scoped, tag = 'input window, operand 0']
    loop: start=0, step=1, limit=5
    $region2: #{_lambda_.19} parent=1 // loop_pre_header
      _
    $region3: #{_lambda_.19} parent=1 // loop_header
      %s7 = sphi 0, %s11
      %p8 = scmp.ge.s32.totalorder %s7, 5
      %s17 = sphi 0, %s19
      %s20 = sphi 0, %s17
      %s21 = sphi 0, %s20
      %s37 = sphi 0, %s21
      %s43 = sphi 0, %s45
      %s46 = sphi 0, %s43
      %s47 = sphi 0, %s46
      %s63 = sphi 0, %s47
    $region4: #{_lambda_.19} parent=1 // loop_header_branch
      %10 = sbr.rel (%p8) target = $region8
    $region5: #{_lambda_.19} parent=1 // loop_body
      %s12 = ssub.s32 %s7, 1
      %s13 = ssub.s32 %s7, 2
      %s14 = sadd.s32 %s7, 1
      %s15 = ssub.s32 %s7, %s14
      %p16 = scmp.eq.s32.totalorder %s15, 0
      %s18 = sadd.s32 %s17, 1
      %s19 = scalar_select %p16, %s17, %s18
      %p22 = pneg %p16
      %p23 = scmp.eq.s32.totalorder %s7, 2
      %p24 = por %p22, %p23
      %p25 = scmp.ne.s32.totalorder %s17, %s20
      %p26 = scmp.eq.s32.totalorder %s7, 0
      %p27 = por %p25, %p26
      %p28 = scmp.ne.s32.totalorder %s17, %s20
      %p29 = scmp.eq.s32.totalorder %s12, 2
      %p30 = por %p28, %p29
      %p31 = scmp.ne.s32.totalorder %s20, %s21
      %p32 = scmp.eq.s32.totalorder %s12, 0
      %p33 = por %p31, %p32
      %p34 = scmp.ne.s32.totalorder %s20, %s21
      %p35 = scmp.eq.s32.totalorder %s13, 2
      %p36 = por %p34, %p35
      %p38 = scmp.ne.s32.totalorder %s21, %s37
      %p39 = scmp.eq.s32.totalorder %s13, 0
      %p40 = por %p38, %p39
      %s41 = ssub.s32 %s7, %s14
      %p42 = scmp.eq.s32.totalorder %s41, 0
      %s44 = sadd.s32 %s43, 1
      %s45 = scalar_select %p42, %s43, %s44
      %p48 = pneg %p42
      %p49 = scmp.eq.s32.totalorder %s7, 2
      %p50 = por %p48, %p49
      %p51 = scmp.ne.s32.totalorder %s43, %s46
      %p52 = scmp.eq.s32.totalorder %s7, 0
      %p53 = por %p51, %p52
      %p54 = scmp.ne.s32.totalorder %s43, %s46
      %p55 = scmp.eq.s32.totalorder %s12, 2
      %p56 = por %p54, %p55
      %p57 = scmp.ne.s32.totalorder %s46, %s47
      %p58 = scmp.eq.s32.totalorder %s12, 0
      %p59 = por %p57, %p58
      %p60 = scmp.ne.s32.totalorder %s46, %s47
      %p61 = scmp.eq.s32.totalorder %s13, 2
      %p62 = por %p60, %p61
      %p64 = scmp.ne.s32.totalorder %s47, %s63
      %p65 = scmp.eq.s32.totalorder %s13, 0
      %p66 = por %p64, %p65
      %p67 = scmp.le.s32.totalorder 1, %s7
      %p68 = scmp.lt.s32.totalorder %s7, 4
      %p69 = pnand %p67, %p68
      %p70 = pneg %p69
      // Predicated region
      $region9: #{_lambda_.19} parent=5 // pred_check
        _
      $region10: #{_lambda_.19} parent=5 // pred_check_branch
        %72 = sbr.rel (%p69) target = $region12
      $region11: #{_lambda_.19} parent=5 // pred_region
        %s73 = ssub.s32 %s7, 1
      $region12: #{_lambda_.19} parent=5 // pred_fallthru
        _
      %p74 = scmp.lt.s32.totalorder %s7, 3
      // Predicated region
      $region13: #{_lambda_.19} parent=5 // pred_check
        %p75 = pneg %p74
      $region14: #{_lambda_.19} parent=5 // pred_check_branch
        %77 = sbr.rel (%p75) target = $region16
      $region15: #{_lambda_.19} parent=5 // pred_region
        // Predicated region
        $region17: #{_lambda_.19} parent=15 // pred_check
          %p78 = pneg %p27
        $region18: #{_lambda_.19} parent=15 // pred_check_branch
          %80 = sbr.rel (%p78) target = $region20
        $region19: #{_lambda_.19} parent=15 // pred_region
          %s81 = sand.u32 %s17, 1
          %s82 = sand.u32 %s17, 1
          %s83 = smul.addr %s82, 192
          %s84 = scalar_lea.vmem [#allocation2], %s83
          %s85 = smul.u32 16, %s7
          %s86 = smul.addr %s85, 4
          %s87 = scalar_lea.vmem %s0, %s86
          // Predicated region
          $region21: #{_lambda_.19} parent=19 // pred_check
            _
          $region22: #{_lambda_.19} parent=19 // pred_check_branch
            %89 = sbr.rel (0) target = $region24
          $region23: #{_lambda_.19} parent=19 // pred_region
            // Predicated region
            $region25: #{_lambda_.19} parent=23 // pred_check
              _
            $region26: #{_lambda_.19} parent=23 // pred_check_branch
              %91 = sbr.rel target = $region28
            $region27: #{_lambda_.19} parent=23 // pred_region
              // Predicated region
              $region40: #{_lambda_.19} parent=27 // pred_check
                _
              $region41: #{_lambda_.19} parent=27 // pred_check_branch
                %200 = sbr.rel (0) target = $region43
              $region42: #{_lambda_.19} parent=27 // pred_region
                loop: start=0, step=1, limit=1
                $region44: #{_lambda_.19} parent=42 // loop_pre_header
                  _
                $region45: #{_lambda_.19} parent=42 // loop_header
                  %s202 = sphi 0, %s206
                  %p203 = scmp.ge.s32.totalorder %s202, 1
                  %s207 = sphi %s87, %s87
                  %s208 = sphi %s84, %s84
                $region46: #{_lambda_.19} parent=42 // loop_header_branch
                  %205 = sbr.rel (%p203) target = $region50
                $region47: #{_lambda_.19} parent=42 // loop_body
                  _
                $region48: #{_lambda_.19} parent=42 // loop_footer
                  %s206 = sadd.s32 1, %s202
                $region49: #{_lambda_.19} parent=42 // loop_footer_branch
                  %201 = sbr.rel target = $region45
                $region50: #{_lambda_.19} parent=42 // loop_exit
                  _
                loop: start=0, step=1, limit=1
                $region51: #{_lambda_.19} parent=42 // loop_pre_header
                  _
                $region52: #{_lambda_.19} parent=42 // loop_header
                  %s211 = sphi 0, %s215
                  %p212 = scmp.ge.s32.totalorder %s211, 1
                  %s216 = sphi %s87, %s87
                  %s217 = sphi %s84, %s84
                $region53: #{_lambda_.19} parent=42 // loop_header_branch
                  %214 = sbr.rel (%p212) target = $region57
                $region54: #{_lambda_.19} parent=42 // loop_body
                  %v218 = vld [vmem:[%s216] sm:$0xf]
                  %219 = vst [vmem:[%s217] sm:$0xf] %v218
                  %v220 = vld [vmem:[%s216 + $0x4] sm:$0xf]
                  %221 = vst [vmem:[%s217 + $0x4] sm:$0xf] %v220
                  %v222 = vld [vmem:[%s216 + $0x8] sm:$0xf]
                  %223 = vst [vmem:[%s217 + $0x8] sm:$0xf] %v222
                  %v224 = vld [vmem:[%s216 + $0xc] sm:$0xf]
                  %225 = vst [vmem:[%s217 + $0xc] sm:$0xf] %v224
                  %v226 = vld [vmem:[%s216 + $0x10] sm:$0xf]
                  %227 = vst [vmem:[%s217 + $0x10] sm:$0xf] %v226
                  %v228 = vld [vmem:[%s216 + $0x14] sm:$0xf]
                  %229 = vst [vmem:[%s217 + $0x14] sm:$0xf] %v228
                  %v230 = vld [vmem:[%s216 + $0x18] sm:$0xf]
                  %231 = vst [vmem:[%s217 + $0x18] sm:$0xf] %v230
                  %v232 = vld [vmem:[%s216 + $0x1c] sm:$0xf]
                  %233 = vst [vmem:[%s217 + $0x1c] sm:$0xf] %v232
                  %v234 = vld [vmem:[%s216 + $0x20] sm:$0xf]
                  %235 = vst [vmem:[%s217 + $0x20] sm:$0xf] %v234
                  %v236 = vld [vmem:[%s216 + $0x24] sm:$0xf]
                  %237 = vst [vmem:[%s217 + $0x24] sm:$0xf] %v236
                  %v238 = vld [vmem:[%s216 + $0x28] sm:$0xf]
                  %239 = vst [vmem:[%s217 + $0x28] sm:$0xf] %v238
                  %v240 = vld [vmem:[%s216 + $0x2c] sm:$0xf]
                  %241 = vst [vmem:[%s217 + $0x2c] sm:$0xf] %v240
                  %v242 = vld [vmem:[%s216 + $0x30] sm:$0xf]
                  %243 = vst [vmem:[%s217 + $0x30] sm:$0xf] %v242
                  %v244 = vld [vmem:[%s216 + $0x34] sm:$0xf]
                  %245 = vst [vmem:[%s217 + $0x34] sm:$0xf] %v244
                  %v246 = vld [vmem:[%s216 + $0x38] sm:$0xf]
                  %247 = vst [vmem:[%s217 + $0x38] sm:$0xf] %v246
                  %v248 = vld [vmem:[%s216 + $0x3c] sm:$0xf]
                  %249 = vst [vmem:[%s217 + $0x3c] sm:$0xf] %v248
                  %v250 = vld [vmem:[%s216 + $0xc0] sm:$0xf]
                  %251 = vst [vmem:[%s217 + $0x40] sm:$0xf] %v250
                  %v252 = vld [vmem:[%s216 + $0xc4] sm:$0xf]
                  %253 = vst [vmem:[%s217 + $0x44] sm:$0xf] %v252
                  %v254 = vld [vmem:[%s216 + $0xc8] sm:$0xf]
                  %255 = vst [vmem:[%s217 + $0x48] sm:$0xf] %v254
                  %v256 = vld [vmem:[%s216 + $0xcc] sm:$0xf]
                  %257 = vst [vmem:[%s217 + $0x4c] sm:$0xf] %v256
                  %v258 = vld [vmem:[%s216 + $0xd0] sm:$0xf]
                  %259 = vst [vmem:[%s217 + $0x50] sm:$0xf] %v258
                  %v260 = vld [vmem:[%s216 + $0xd4] sm:$0xf]
                  %261 = vst [vmem:[%s217 + $0x54] sm:$0xf] %v260
                  %v262 = vld [vmem:[%s216 + $0xd8] sm:$0xf]
                  %263 = vst [vmem:[%s217 + $0x58] sm:$0xf] %v262
                  %v264 = vld [vmem:[%s216 + $0xdc] sm:$0xf]
                  %265 = vst [vmem:[%s217 + $0x5c] sm:$0xf] %v264
                  %v266 = vld [vmem:[%s216 + $0xe0] sm:$0xf]
                  %267 = vst [vmem:[%s217 + $0x60] sm:$0xf] %v266
                  %v268 = vld [vmem:[%s216 + $0xe4] sm:$0xf]
                  %269 = vst [vmem:[%s217 + $0x64] sm:$0xf] %v268
                  %v270 = vld [vmem:[%s216 + $0xe8] sm:$0xf]
                  %271 = vst [vmem:[%s217 + $0x68] sm:$0xf] %v270
                  %v272 = vld [vmem:[%s216 + $0xec] sm:$0xf]
                  %273 = vst [vmem:[%s217 + $0x6c] sm:$0xf] %v272
                  %v274 = vld [vmem:[%s216 + $0xf0] sm:$0xf]
                  %275 = vst [vmem:[%s217 + $0x70] sm:$0xf] %v274
                  %v276 = vld [vmem:[%s216 + $0xf4] sm:$0xf]
                  %277 = vst [vmem:[%s217 + $0x74] sm:$0xf] %v276
                  %v278 = vld [vmem:[%s216 + $0xf8] sm:$0xf]
                  %279 = vst [vmem:[%s217 + $0x78] sm:$0xf] %v278
                  %v280 = vld [vmem:[%s216 + $0xfc] sm:$0xf]
                  %281 = vst [vmem:[%s217 + $0x7c] sm:$0xf] %v280
                  %v282 = vld [vmem:[%s216 + $0x180] sm:$0xf]
                  %283 = vst [vmem:[%s217 + $0x80] sm:$0xf] %v282
                  %v284 = vld [vmem:[%s216 + $0x184] sm:$0xf]
                  %285 = vst [vmem:[%s217 + $0x84] sm:$0xf] %v284
                  %v286 = vld [vmem:[%s216 + $0x188] sm:$0xf]
                  %287 = vst [vmem:[%s217 + $0x88] sm:$0xf] %v286
                  %v288 = vld [vmem:[%s216 + $0x18c] sm:$0xf]
                  %289 = vst [vmem:[%s217 + $0x8c] sm:$0xf] %v288
                  %v290 = vld [vmem:[%s216 + $0x190] sm:$0xf]
                  %291 = vst [vmem:[%s217 + $0x90] sm:$0xf] %v290
                  %v292 = vld [vmem:[%s216 + $0x194] sm:$0xf]
                  %293 = vst [vmem:[%s217 + $0x94] sm:$0xf] %v292
                  %v294 = vld [vmem:[%s216 + $0x198] sm:$0xf]
                  %295 = vst [vmem:[%s217 + $0x98] sm:$0xf] %v294
                  %v296 = vld [vmem:[%s216 + $0x19c] sm:$0xf]
                  %297 = vst [vmem:[%s217 + $0x9c] sm:$0xf] %v296
                  %v298 = vld [vmem:[%s216 + $0x1a0] sm:$0xf]
                  %299 = vst [vmem:[%s217 + $0xa0] sm:$0xf] %v298
                  %v300 = vld [vmem:[%s216 + $0x1a4] sm:$0xf]
                  %301 = vst [vmem:[%s217 + $0xa4] sm:$0xf] %v300
                  %v302 = vld [vmem:[%s216 + $0x1a8] sm:$0xf]
                  %303 = vst [vmem:[%s217 + $0xa8] sm:$0xf] %v302
                  %v304 = vld [vmem:[%s216 + $0x1ac] sm:$0xf]
                  %305 = vst [vmem:[%s217 + $0xac] sm:$0xf] %v304
                  %v306 = vld [vmem:[%s216 + $0x1b0] sm:$0xf]
                  %307 = vst [vmem:[%s217 + $0xb0] sm:$0xf] %v306
                  %v308 = vld [vmem:[%s216 + $0x1b4] sm:$0xf]
                  %309 = vst [vmem:[%s217 + $0xb4] sm:$0xf] %v308
                  %v310 = vld [vmem:[%s216 + $0x1b8] sm:$0xf]
                  %311 = vst [vmem:[%s217 + $0xb8] sm:$0xf] %v310
                  %v312 = vld [vmem:[%s216 + $0x1bc] sm:$0xf]
                  %313 = vst [vmem:[%s217 + $0xbc] sm:$0xf] %v312
                $region55: #{_lambda_.19} parent=42 // loop_footer
                  %s215 = sadd.s32 1, %s211
                $region56: #{_lambda_.19} parent=42 // loop_footer_branch
                  %210 = sbr.rel target = $region52
                $region57: #{_lambda_.19} parent=42 // loop_exit
                  _
              $region43: #{_lambda_.19} parent=27 // pred_fallthru
                _
            $region28: #{_lambda_.19} parent=23 // pred_fallthru
              _
            // Predicated region
            $region29: #{_lambda_.19} parent=23 // pred_check
              _
            $region30: #{_lambda_.19} parent=23 // pred_check_branch
              %93 = sbr.rel (0) target = $region32
            $region31: #{_lambda_.19} parent=23 // pred_region
              loop: start=0, step=1, limit=1
              $region33: #{_lambda_.19} parent=31 // loop_pre_header
                _
              $region34: #{_lambda_.19} parent=31 // loop_header
                %s96 = sphi 0, %s100
                %p97 = scmp.ge.s32.totalorder %s96, 1
                %s101 = sphi %s87, %s87
                %s102 = sphi %s84, %s84
              $region35: #{_lambda_.19} parent=31 // loop_header_branch
                %99 = sbr.rel (%p97) target = $region39
              $region36: #{_lambda_.19} parent=31 // loop_body
                %v103 = vld [vmem:[%s101] sm:$0xf]
                %104 = vst [vmem:[%s102] sm:$0xf] %v103
                %v105 = vld [vmem:[%s101 + $0x4] sm:$0xf]
                %106 = vst [vmem:[%s102 + $0x4] sm:$0xf] %v105
                %v107 = vld [vmem:[%s101 + $0x8] sm:$0xf]
                %108 = vst [vmem:[%s102 + $0x8] sm:$0xf] %v107
                %v109 = vld [vmem:[%s101 + $0xc] sm:$0xf]
                %110 = vst [vmem:[%s102 + $0xc] sm:$0xf] %v109
                %v111 = vld [vmem:[%s101 + $0x10] sm:$0xf]
                %112 = vst [vmem:[%s102 + $0x10] sm:$0xf] %v111
                %v113 = vld [vmem:[%s101 + $0x14] sm:$0xf]
                %114 = vst [vmem:[%s102 + $0x14] sm:$0xf] %v113
                %v115 = vld [vmem:[%s101 + $0x18] sm:$0xf]
                %116 = vst [vmem:[%s102 + $0x18] sm:$0xf] %v115
                %v117 = vld [vmem:[%s101 + $0x1c] sm:$0xf]
                %118 = vst [vmem:[%s102 + $0x1c] sm:$0xf] %v117
                %v119 = vld [vmem:[%s101 + $0x20] sm:$0xf]
                %120 = vst [vmem:[%s102 + $0x20] sm:$0xf] %v119
                %v121 = vld [vmem:[%s101 + $0x24] sm:$0xf]
                %122 = vst [vmem:[%s102 + $0x24] sm:$0xf] %v121
                %v123 = vld [vmem:[%s101 + $0x28] sm:$0xf]
                %124 = vst [vmem:[%s102 + $0x28] sm:$0xf] %v123
                %v125 = vld [vmem:[%s101 + $0x2c] sm:$0xf]
                %126 = vst [vmem:[%s102 + $0x2c] sm:$0xf] %v125
                %v127 = vld [vmem:[%s101 + $0x30] sm:$0xf]
                %128 = vst [vmem:[%s102 + $0x30] sm:$0xf] %v127
                %v129 = vld [vmem:[%s101 + $0x34] sm:$0xf]
                %130 = vst [vmem:[%s102 + $0x34] sm:$0xf] %v129
                %v131 = vld [vmem:[%s101 + $0x38] sm:$0xf]
                %132 = vst [vmem:[%s102 + $0x38] sm:$0xf] %v131
                %v133 = vld [vmem:[%s101 + $0x3c] sm:$0xf]
                %134 = vst [vmem:[%s102 + $0x3c] sm:$0xf] %v133
                %v135 = vld [vmem:[%s101 + $0xc0] sm:$0xf]
                %136 = vst [vmem:[%s102 + $0x40] sm:$0xf] %v135
                %v137 = vld [vmem:[%s101 + $0xc4] sm:$0xf]
                %138 = vst [vmem:[%s102 + $0x44] sm:$0xf] %v137
                %v139 = vld [vmem:[%s101 + $0xc8] sm:$0xf]
                %140 = vst [vmem:[%s102 + $0x48] sm:$0xf] %v139
                %v141 = vld [vmem:[%s101 + $0xcc] sm:$0xf]
                %142 = vst [vmem:[%s102 + $0x4c] sm:$0xf] %v141
                %v143 = vld [vmem:[%s101 + $0xd0] sm:$0xf]
                %144 = vst [vmem:[%s102 + $0x50] sm:$0xf] %v143
                %v145 = vld [vmem:[%s101 + $0xd4] sm:$0xf]
                %146 = vst [vmem:[%s102 + $0x54] sm:$0xf] %v145
                %v147 = vld [vmem:[%s101 + $0xd8] sm:$0xf]
                %148 = vst [vmem:[%s102 + $0x58] sm:$0xf] %v147
                %v149 = vld [vmem:[%s101 + $0xdc] sm:$0xf]
                %150 = vst [vmem:[%s102 + $0x5c] sm:$0xf] %v149
                %v151 = vld [vmem:[%s101 + $0xe0] sm:$0xf]
                %152 = vst [vmem:[%s102 + $0x60] sm:$0xf] %v151
                %v153 = vld [vmem:[%s101 + $0xe4] sm:$0xf]
                %154 = vst [vmem:[%s102 + $0x64] sm:$0xf] %v153
                %v155 = vld [vmem:[%s101 + $0xe8] sm:$0xf]
                %156 = vst [vmem:[%s102 + $0x68] sm:$0xf] %v155
                %v157 = vld [vmem:[%s101 + $0xec] sm:$0xf]
                %158 = vst [vmem:[%s102 + $0x6c] sm:$0xf] %v157
                %v159 = vld [vmem:[%s101 + $0xf0] sm:$0xf]
                %160 = vst [vmem:[%s102 + $0x70] sm:$0xf] %v159
                %v161 = vld [vmem:[%s101 + $0xf4] sm:$0xf]
                %162 = vst [vmem:[%s102 + $0x74] sm:$0xf] %v161
                %v163 = vld [vmem:[%s101 + $0xf8] sm:$0xf]
                %164 = vst [vmem:[%s102 + $0x78] sm:$0xf] %v163
                %v165 = vld [vmem:[%s101 + $0xfc] sm:$0xf]
                %166 = vst [vmem:[%s102 + $0x7c] sm:$0xf] %v165
                %v167 = vld [vmem:[%s101 + $0x180] sm:$0xf]
                %168 = vst [vmem:[%s102 + $0x80] sm:$0xf] %v167
                %v169 = vld [vmem:[%s101 + $0x184] sm:$0xf]
                %170 = vst [vmem:[%s102 + $0x84] sm:$0xf] %v169
                %v171 = vld [vmem:[%s101 + $0x188] sm:$0xf]
                %172 = vst [vmem:[%s102 + $0x88] sm:$0xf] %v171
                %v173 = vld [vmem:[%s101 + $0x18c] sm:$0xf]
                %174 = vst [vmem:[%s102 + $0x8c] sm:$0xf] %v173
                %v175 = vld [vmem:[%s101 + $0x190] sm:$0xf]
                %176 = vst [vmem:[%s102 + $0x90] sm:$0xf] %v175
                %v177 = vld [vmem:[%s101 + $0x194] sm:$0xf]
                %178 = vst [vmem:[%s102 + $0x94] sm:$0xf] %v177
                %v179 = vld [vmem:[%s101 + $0x198] sm:$0xf]
                %180 = vst [vmem:[%s102 + $0x98] sm:$0xf] %v179
                %v181 = vld [vmem:[%s101 + $0x19c] sm:$0xf]
                %182 = vst [vmem:[%s102 + $0x9c] sm:$0xf] %v181
                %v183 = vld [vmem:[%s101 + $0x1a0] sm:$0xf]
                %184 = vst [vmem:[%s102 + $0xa0] sm:$0xf] %v183
                %v185 = vld [vmem:[%s101 + $0x1a4] sm:$0xf]
                %186 = vst [vmem:[%s102 + $0xa4] sm:$0xf] %v185
                %v187 = vld [vmem:[%s101 + $0x1a8] sm:$0xf]
                %188 = vst [vmem:[%s102 + $0xa8] sm:$0xf] %v187
                %v189 = vld [vmem:[%s101 + $0x1ac] sm:$0xf]
                %190 = vst [vmem:[%s102 + $0xac] sm:$0xf] %v189
                %v191 = vld [vmem:[%s101 + $0x1b0] sm:$0xf]
                %192 = vst [vmem:[%s102 + $0xb0] sm:$0xf] %v191
                %v193 = vld [vmem:[%s101 + $0x1b4] sm:$0xf]
                %194 = vst [vmem:[%s102 + $0xb4] sm:$0xf] %v193
                %v195 = vld [vmem:[%s101 + $0x1b8] sm:$0xf]
                %196 = vst [vmem:[%s102 + $0xb8] sm:$0xf] %v195
                %v197 = vld [vmem:[%s101 + $0x1bc] sm:$0xf]
                %198 = vst [vmem:[%s102 + $0xbc] sm:$0xf] %v197
              $region37: #{_lambda_.19} parent=31 // loop_footer
                %s100 = sadd.s32 1, %s96
              $region38: #{_lambda_.19} parent=31 // loop_footer_branch
                %95 = sbr.rel target = $region34
              $region39: #{_lambda_.19} parent=31 // loop_exit
                _
            $region32: #{_lambda_.19} parent=23 // pred_fallthru
              _
          $region24: #{_lambda_.19} parent=19 // pred_fallthru
            _
          %314 = vnop
        $region20: #{_lambda_.19} parent=15 // pred_fallthru
          _
      $region16: #{_lambda_.19} parent=5 // pred_fallthru
        _
      %p315 = scmp.le.s32.totalorder 1, %s7
      %p316 = scmp.lt.s32.totalorder %s7, 4
      %p317 = pnand %p315, %p316
      %p318 = pneg %p317
      // Predicated region
      $region58: #{_lambda_.19} parent=5 // pred_check
        _
      $region59: #{_lambda_.19} parent=5 // pred_check_branch
        %320 = sbr.rel (%p317) target = $region61
      $region60: #{_lambda_.19} parent=5 // pred_region
        %s321 = ssub.s32 %s7, 1
        %s322 = sand.u32 %s20, 1
        %s323 = sand.u32 %s20, 1
        %s324 = smul.addr %s323, 192
        %s325 = scalar_lea.vmem [#allocation2], %s324
        // Predicated region
        $region62: #{_lambda_.19} parent=60 // pred_check
          %p326 = pneg %p33
        $region63: #{_lambda_.19} parent=60 // pred_check_branch
          %328 = sbr.rel (%p326) target = $region65
        $region64: #{_lambda_.19} parent=60 // pred_region
          _
        $region65: #{_lambda_.19} parent=60 // pred_fallthru
          _
        %s329 = sand.u32 %s20, 1
        %s330 = sand.u32 %s20, 1
        %s331 = smul.addr %s330, 192
        %s332 = scalar_lea.vmem [#allocation2], %s331
        %p333 = pneg %p33
        %p334 = pneg %p30
        %p335 = pneg %p59
        %p336 = pneg %p56
        %s337 = smul.u32 16, %s12
        %p338 = scmp.lt.s32.totalorder %s337, 47
        %s339 = scalar_select %p338, %s337, 47
        %s340 = smul.addr %s339, 4
        %s341 = scalar_lea.vmem %s1, %s340
        %s342 = smul.u32 16, %s12
        %s343 = smul.u32 16, %s12
        %p344 = scmp.lt.s32.totalorder %s343, 47
        %s345 = scalar_select %p344, %s343, 47
        %s346 = smul.addr %s345, 4
        %s347 = scalar_lea.vmem %s1, %s346
        %s348 = smul.u32 16, %s12
        %v350 = vld [vmem:[%s325] sm:$0xf]
        %v351 = vld [vmem:[%s325 + $0x4] sm:$0xf]
        %v352 = vld [vmem:[%s325 + $0x8] sm:$0xf]
        %v353 = vld [vmem:[%s325 + $0xc] sm:$0xf]
        %v354 = vld [vmem:[%s325 + $0x10] sm:$0xf]
        %v355 = vld [vmem:[%s325 + $0x14] sm:$0xf]
        %v356 = vld [vmem:[%s325 + $0x18] sm:$0xf]
        %v357 = vld [vmem:[%s325 + $0x1c] sm:$0xf]
        %v358 = vld [vmem:[%s325 + $0x20] sm:$0xf]
        %v359 = vld [vmem:[%s325 + $0x24] sm:$0xf]
        %v360 = vld [vmem:[%s325 + $0x28] sm:$0xf]
        %v361 = vld [vmem:[%s325 + $0x2c] sm:$0xf]
        %v362 = vld [vmem:[%s325 + $0x30] sm:$0xf]
        %v363 = vld [vmem:[%s325 + $0x34] sm:$0xf]
        %v364 = vld [vmem:[%s325 + $0x38] sm:$0xf]
        %v365 = vld [vmem:[%s325 + $0x3c] sm:$0xf]
        %v366 = vld [vmem:[%s325 + $0x40] sm:$0xf]
        %v367 = vld [vmem:[%s325 + $0x44] sm:$0xf]
        %v368 = vld [vmem:[%s325 + $0x48] sm:$0xf]
        %v369 = vld [vmem:[%s325 + $0x4c] sm:$0xf]
        %v370 = vld [vmem:[%s325 + $0x50] sm:$0xf]
        %v371 = vld [vmem:[%s325 + $0x54] sm:$0xf]
        %v372 = vld [vmem:[%s325 + $0x58] sm:$0xf]
        %v373 = vld [vmem:[%s325 + $0x5c] sm:$0xf]
        %v374 = vld [vmem:[%s325 + $0x60] sm:$0xf]
        %v375 = vld [vmem:[%s325 + $0x64] sm:$0xf]
        %v376 = vld [vmem:[%s325 + $0x68] sm:$0xf]
        %v377 = vld [vmem:[%s325 + $0x6c] sm:$0xf]
        %v378 = vld [vmem:[%s325 + $0x70] sm:$0xf]
        %v379 = vld [vmem:[%s325 + $0x74] sm:$0xf]
        %v380 = vld [vmem:[%s325 + $0x78] sm:$0xf]
        %v381 = vld [vmem:[%s325 + $0x7c] sm:$0xf]
        %v382 = vld [vmem:[%s325 + $0x80] sm:$0xf]
        %v383 = vld [vmem:[%s325 + $0x84] sm:$0xf]
        %v384 = vld [vmem:[%s325 + $0x88] sm:$0xf]
        %v385 = vld [vmem:[%s325 + $0x8c] sm:$0xf]
        %v386 = vld [vmem:[%s325 + $0x90] sm:$0xf]
        %v387 = vld [vmem:[%s325 + $0x94] sm:$0xf]
        %v388 = vld [vmem:[%s325 + $0x98] sm:$0xf]
        %v389 = vld [vmem:[%s325 + $0x9c] sm:$0xf]
        %v390 = vld [vmem:[%s325 + $0xa0] sm:$0xf]
        %v391 = vld [vmem:[%s325 + $0xa4] sm:$0xf]
        %v392 = vld [vmem:[%s325 + $0xa8] sm:$0xf]
        %v393 = vld [vmem:[%s325 + $0xac] sm:$0xf]
        %v394 = vld [vmem:[%s325 + $0xb0] sm:$0xf]
        %v395 = vld [vmem:[%s325 + $0xb4] sm:$0xf]
        %v396 = vld [vmem:[%s325 + $0xb8] sm:$0xf]
        %v397 = vld [vmem:[%s325 + $0xbc] sm:$0xf]
        %vm398 = vcmask 1043456
        %v401 = vsel %vm398, %v350, 4286644096
        %v404 = vsel %vm398, %v366, 4286644096
        %v406 = vmax.bf16 %v401, %v404
        %v408 = vsel %vm398, %v382, 4286644096
        %v410 = vmax.bf16 %v406, %v408
        %v412 = vsel %vm398, %v351, 4286644096
        %v415 = vsel %vm398, %v367, 4286644096
        %v417 = vmax.bf16 %v412, %v415
        %v419 = vsel %vm398, %v383, 4286644096
        %v421 = vmax.bf16 %v417, %v419
        %v423 = vsel %vm398, %v352, 4286644096
        %v426 = vsel %vm398, %v368, 4286644096
        %v428 = vmax.bf16 %v423, %v426
        %v430 = vsel %vm398, %v384, 4286644096
        %v432 = vmax.bf16 %v428, %v430
        %v434 = vsel %vm398, %v353, 4286644096
        %v437 = vsel %vm398, %v369, 4286644096
        %v439 = vmax.bf16 %v434, %v437
        %v441 = vsel %vm398, %v385, 4286644096
        %v443 = vmax.bf16 %v439, %v441
        %v445 = vsel %vm398, %v354, 4286644096
        %v448 = vsel %vm398, %v370, 4286644096
        %v450 = vmax.bf16 %v445, %v448
        %v452 = vsel %vm398, %v386, 4286644096
        %v454 = vmax.bf16 %v450, %v452
        %v456 = vsel %vm398, %v355, 4286644096
        %v459 = vsel %vm398, %v371, 4286644096
        %v461 = vmax.bf16 %v456, %v459
        %v463 = vsel %vm398, %v387, 4286644096
        %v465 = vmax.bf16 %v461, %v463
        %v467 = vsel %vm398, %v356, 4286644096
        %v470 = vsel %vm398, %v372, 4286644096
        %v472 = vmax.bf16 %v467, %v470
        %v474 = vsel %vm398, %v388, 4286644096
        %v476 = vmax.bf16 %v472, %v474
        %v478 = vsel %vm398, %v357, 4286644096
        %v481 = vsel %vm398, %v373, 4286644096
        %v483 = vmax.bf16 %v478, %v481
        %v485 = vsel %vm398, %v389, 4286644096
        %v487 = vmax.bf16 %v483, %v485
        %v489 = vsel %vm398, %v358, 4286644096
        %v492 = vsel %vm398, %v374, 4286644096
        %v494 = vmax.bf16 %v489, %v492
        %v496 = vsel %vm398, %v390, 4286644096
        %v498 = vmax.bf16 %v494, %v496
        %v500 = vsel %vm398, %v359, 4286644096
        %v503 = vsel %vm398, %v375, 4286644096
        %v505 = vmax.bf16 %v500, %v503
        %v507 = vsel %vm398, %v391, 4286644096
        %v509 = vmax.bf16 %v505, %v507
        %v511 = vsel %vm398, %v360, 4286644096
        %v514 = vsel %vm398, %v376, 4286644096
        %v516 = vmax.bf16 %v511, %v514
        %v518 = vsel %vm398, %v392, 4286644096
        %v520 = vmax.bf16 %v516, %v518
        %v522 = vsel %vm398, %v361, 4286644096
        %v525 = vsel %vm398, %v377, 4286644096
        %v527 = vmax.bf16 %v522, %v525
        %v529 = vsel %vm398, %v393, 4286644096
        %v531 = vmax.bf16 %v527, %v529
        %v533 = vsel %vm398, %v362, 4286644096
        %v536 = vsel %vm398, %v378, 4286644096
        %v538 = vmax.bf16 %v533, %v536
        %v540 = vsel %vm398, %v394, 4286644096
        %v542 = vmax.bf16 %v538, %v540
        %v544 = vsel %vm398, %v363, 4286644096
        %v547 = vsel %vm398, %v379, 4286644096
        %v549 = vmax.bf16 %v544, %v547
        %v551 = vsel %vm398, %v395, 4286644096
        %v553 = vmax.bf16 %v549, %v551
        %v555 = vsel %vm398, %v364, 4286644096
        %v558 = vsel %vm398, %v380, 4286644096
        %v560 = vmax.bf16 %v555, %v558
        %v562 = vsel %vm398, %v396, 4286644096
        %v564 = vmax.bf16 %v560, %v562
        %v566 = vsel %vm398, %v365, 4286644096
        %v569 = vsel %vm398, %v381, 4286644096
        %v571 = vmax.bf16 %v566, %v569
        %v573 = vsel %vm398, %v397, 4286644096
        %v575 = vmax.bf16 %v571, %v573
        %576 = vst [vmem:[%s347] sm:$0xf] %v410
        %577 = vst [vmem:[%s347 + $0x4] sm:$0xf] %v421
        %578 = vst [vmem:[%s347 + $0x8] sm:$0xf] %v432
        %579 = vst [vmem:[%s347 + $0xc] sm:$0xf] %v443
        %580 = vst [vmem:[%s347 + $0x10] sm:$0xf] %v454
        %581 = vst [vmem:[%s347 + $0x14] sm:$0xf] %v465
        %582 = vst [vmem:[%s347 + $0x18] sm:$0xf] %v476
        %583 = vst [vmem:[%s347 + $0x1c] sm:$0xf] %v487
        %584 = vst [vmem:[%s347 + $0x20] sm:$0xf] %v498
        %585 = vst [vmem:[%s347 + $0x24] sm:$0xf] %v509
        %586 = vst [vmem:[%s347 + $0x28] sm:$0xf] %v520
        %587 = vst [vmem:[%s347 + $0x2c] sm:$0xf] %v531
        %588 = vst [vmem:[%s347 + $0x30] sm:$0xf] %v542
        %589 = vst [vmem:[%s347 + $0x34] sm:$0xf] %v553
        %590 = vst [vmem:[%s347 + $0x38] sm:$0xf] %v564
        %591 = vst [vmem:[%s347 + $0x3c] sm:$0xf] %v575
        %s592 = smul.u32 16, %s12
        %p593 = scmp.lt.s32.totalorder %s592, 47
        %s594 = scalar_select %p593, %s592, 47
        %s595 = smul.addr %s594, 4
        %s596 = scalar_lea.vmem %s1, %s595
        // Predicated region
        $region66: #{_lambda_.19} parent=60 // pred_check
          %p597 = pneg %p56
        $region67: #{_lambda_.19} parent=60 // pred_check_branch
          %599 = sbr.rel (%p597) target = $region69
        $region68: #{_lambda_.19} parent=60 // pred_region
          %s600 = smul.u32 16, %s12
        $region69: #{_lambda_.19} parent=60 // pred_fallthru
          _
      $region61: #{_lambda_.19} parent=5 // pred_fallthru
        _
      %p601 = scmp.le.s32.totalorder 2, %s7
      // Predicated region
      $region70: #{_lambda_.19} parent=5 // pred_check
        %p602 = pneg %p601
      $region71: #{_lambda_.19} parent=5 // pred_check_branch
        %604 = sbr.rel (%p602) target = $region73
      $region72: #{_lambda_.19} parent=5 // pred_region
        %s605 = ssub.s32 %s7, 2
        // Predicated region
        $region74: #{_lambda_.19} parent=72 // pred_check
          %p606 = pneg %p62
        $region75: #{_lambda_.19} parent=72 // pred_check_branch
          %608 = sbr.rel (%p606) target = $region77
        $region76: #{_lambda_.19} parent=72 // pred_region
          %s609 = smul.u32 16, %s13
          %p610 = scmp.lt.s32.totalorder %s609, 47
          %s611 = scalar_select %p610, %s609, 47
          %s612 = smul.addr %s611, 4
          %s613 = scalar_lea.vmem %s1, %s612
        $region77: #{_lambda_.19} parent=72 // pred_fallthru
          _
      $region73: #{_lambda_.19} parent=5 // pred_fallthru
        _
    $region6: #{_lambda_.19} parent=1 // loop_footer
      %s11 = sadd.s32 1, %s7
    $region7: #{_lambda_.19} parent=1 // loop_footer_branch
      %6 = sbr.rel target = $region3
    $region8: #{_lambda_.19} parent=1 // loop_exit
      _

// kernel: _lambda_.20
$region0: #{_lambda_.20}
  #allocation0 [shape = 'u32[]', space=smem, size = 0x4, offset = 0x4, fixed_abs, tag = 'smem constant byte address 0x4 - core index']
  #allocation1 [shape = 'u32[144,128]{1,0:T(1,128)}', space=vmem, size = 0x12000, scoped, tag = 'internal scratch']
  %s0 = inlined_call_operand.vmem [shape: bf16[3,128,128], index: 0, kind: input, shape index: {}]
  %s1 = inlined_call_operand.vmem [shape: bf16[128,128], index: 1, kind: output, shape index: {}]
  %s2 = sld [smem:[#allocation0]]
  $region14: #{_lambda_.20} parent=0
    _
  %s4 = ssub.s32 1, %s2
  %s5 = scalar_select 0, %s4, %s2
  // Predicated region
  $region2: #{_lambda_.20} parent=0 // pred_check
    _
  $region3: #{_lambda_.20} parent=0 // pred_check_branch
    %7 = sbr.rel (0) target = $region5
  $region4: #{_lambda_.20} parent=0 // pred_region
    _
  $region5: #{_lambda_.20} parent=0 // pred_fallthru
    _
  %v9 = vld [vmem:[%s0] sm:$0xf]
  %v10 = vld [vmem:[%s0 + $0x4] sm:$0xf]
  %v11 = vld [vmem:[%s0 + $0x8] sm:$0xf]
  %v12 = vld [vmem:[%s0 + $0xc] sm:$0xf]
  %v13 = vld [vmem:[%s0 + $0x10] sm:$0xf]
  %v14 = vld [vmem:[%s0 + $0x14] sm:$0xf]
  %v15 = vld [vmem:[%s0 + $0x18] sm:$0xf]
  %v16 = vld [vmem:[%s0 + $0x1c] sm:$0xf]
  %v17 = vld [vmem:[%s0 + $0x20] sm:$0xf]
  %v18 = vld [vmem:[%s0 + $0x24] sm:$0xf]
  %v19 = vld [vmem:[%s0 + $0x28] sm:$0xf]
  %v20 = vld [vmem:[%s0 + $0x2c] sm:$0xf]
  %v21 = vld [vmem:[%s0 + $0x30] sm:$0xf]
  %v22 = vld [vmem:[%s0 + $0x34] sm:$0xf]
  %v23 = vld [vmem:[%s0 + $0x38] sm:$0xf]
  %v24 = vld [vmem:[%s0 + $0x3c] sm:$0xf]
  %v25 = vld [vmem:[%s0 + $0x40] sm:$0xf]
  %v26 = vld [vmem:[%s0 + $0x44] sm:$0xf]
  %v27 = vld [vmem:[%s0 + $0x48] sm:$0xf]
  %v28 = vld [vmem:[%s0 + $0x4c] sm:$0xf]
  %v29 = vld [vmem:[%s0 + $0x50] sm:$0xf]
  %v30 = vld [vmem:[%s0 + $0x54] sm:$0xf]
  %v31 = vld [vmem:[%s0 + $0x58] sm:$0xf]
  %v32 = vld [vmem:[%s0 + $0x5c] sm:$0xf]
  %v33 = vld [vmem:[%s0 + $0x60] sm:$0xf]
  %v34 = vld [vmem:[%s0 + $0x64] sm:$0xf]
  %v35 = vld [vmem:[%s0 + $0x68] sm:$0xf]
  %v36 = vld [vmem:[%s0 + $0x6c] sm:$0xf]
  %v37 = vld [vmem:[%s0 + $0x70] sm:$0xf]
  %v38 = vld [vmem:[%s0 + $0x74] sm:$0xf]
  %v39 = vld [vmem:[%s0 + $0x78] sm:$0xf]
  %v40 = vld [vmem:[%s0 + $0x7c] sm:$0xf]
  %v41 = vld [vmem:[%s0 + $0x80] sm:$0xf]
  %v42 = vld [vmem:[%s0 + $0x84] sm:$0xf]
  %v43 = vld [vmem:[%s0 + $0x88] sm:$0xf]
  %v44 = vld [vmem:[%s0 + $0x8c] sm:$0xf]
  %v45 = vld [vmem:[%s0 + $0x90] sm:$0xf]
  %v46 = vld [vmem:[%s0 + $0x94] sm:$0xf]
  %v47 = vld [vmem:[%s0 + $0x98] sm:$0xf]
  %v48 = vld [vmem:[%s0 + $0x9c] sm:$0xf]
  %v49 = vld [vmem:[%s0 + $0xa0] sm:$0xf]
  %v50 = vld [vmem:[%s0 + $0xa4] sm:$0xf]
  %v51 = vld [vmem:[%s0 + $0xa8] sm:$0xf]
  %v52 = vld [vmem:[%s0 + $0xac] sm:$0xf]
  %v53 = vld [vmem:[%s0 + $0xb0] sm:$0xf]
  %v54 = vld [vmem:[%s0 + $0xb4] sm:$0xf]
  %v55 = vld [vmem:[%s0 + $0xb8] sm:$0xf]
  %v56 = vld [vmem:[%s0 + $0xbc] sm:$0xf]
  %vm57 = vcmask 1043456
  %v60 = vsel %vm57, %v9, 4286644096
  %v63 = vsel %vm57, %v25, 4286644096
  %v65 = vmax.bf16 %v60, %v63
  %v67 = vsel %vm57, %v41, 4286644096
  %v69 = vmax.bf16 %v65, %v67
  %v71 = vsel %vm57, %v10, 4286644096
  %v74 = vsel %vm57, %v26, 4286644096
  %v76 = vmax.bf16 %v71, %v74
  %v78 = vsel %vm57, %v42, 4286644096
  %v80 = vmax.bf16 %v76, %v78
  %v82 = vsel %vm57, %v11, 4286644096
  %v85 = vsel %vm57, %v27, 4286644096
  %v87 = vmax.bf16 %v82, %v85
  %v89 = vsel %vm57, %v43, 4286644096
  %v91 = vmax.bf16 %v87, %v89
  %v93 = vsel %vm57, %v12, 4286644096
  %v96 = vsel %vm57, %v28, 4286644096
  %v98 = vmax.bf16 %v93, %v96
  %v100 = vsel %vm57, %v44, 4286644096
  %v102 = vmax.bf16 %v98, %v100
  %v104 = vsel %vm57, %v13, 4286644096
  %v107 = vsel %vm57, %v29, 4286644096
  %v109 = vmax.bf16 %v104, %v107
  %v111 = vsel %vm57, %v45, 4286644096
  %v113 = vmax.bf16 %v109, %v111
  %v115 = vsel %vm57, %v14, 4286644096
  %v118 = vsel %vm57, %v30, 4286644096
  %v120 = vmax.bf16 %v115, %v118
  %v122 = vsel %vm57, %v46, 4286644096
  %v124 = vmax.bf16 %v120, %v122
  %v126 = vsel %vm57, %v15, 4286644096
  %v129 = vsel %vm57, %v31, 4286644096
  %v131 = vmax.bf16 %v126, %v129
  %v133 = vsel %vm57, %v47, 4286644096
  %v135 = vmax.bf16 %v131, %v133
  %v137 = vsel %vm57, %v16, 4286644096
  %v140 = vsel %vm57, %v32, 4286644096
  %v142 = vmax.bf16 %v137, %v140
  %v144 = vsel %vm57, %v48, 4286644096
  %v146 = vmax.bf16 %v142, %v144
  %v148 = vsel %vm57, %v17, 4286644096
  %v151 = vsel %vm57, %v33, 4286644096
  %v153 = vmax.bf16 %v148, %v151
  %v155 = vsel %vm57, %v49, 4286644096
  %v157 = vmax.bf16 %v153, %v155
  %v159 = vsel %vm57, %v18, 4286644096
  %v162 = vsel %vm57, %v34, 4286644096
  %v164 = vmax.bf16 %v159, %v162
  %v166 = vsel %vm57, %v50, 4286644096
  %v168 = vmax.bf16 %v164, %v166
  %v170 = vsel %vm57, %v19, 4286644096
  %v173 = vsel %vm57, %v35, 4286644096
  %v175 = vmax.bf16 %v170, %v173
  %v177 = vsel %vm57, %v51, 4286644096
  %v179 = vmax.bf16 %v175, %v177
  %v181 = vsel %vm57, %v20, 4286644096
  %v184 = vsel %vm57, %v36, 4286644096
  %v186 = vmax.bf16 %v181, %v184
  %v188 = vsel %vm57, %v52, 4286644096
  %v190 = vmax.bf16 %v186, %v188
  %v192 = vsel %vm57, %v21, 4286644096
  %v195 = vsel %vm57, %v37, 4286644096
  %v197 = vmax.bf16 %v192, %v195
  %v199 = vsel %vm57, %v53, 4286644096
  %v201 = vmax.bf16 %v197, %v199
  %v203 = vsel %vm57, %v22, 4286644096
  %v206 = vsel %vm57, %v38, 4286644096
  %v208 = vmax.bf16 %v203, %v206
  %v210 = vsel %vm57, %v54, 4286644096
  %v212 = vmax.bf16 %v208, %v210
  %v214 = vsel %vm57, %v23, 4286644096
  %v217 = vsel %vm57, %v39, 4286644096
  %v219 = vmax.bf16 %v214, %v217
  %v221 = vsel %vm57, %v55, 4286644096
  %v223 = vmax.bf16 %v219, %v221
  %v225 = vsel %vm57, %v24, 4286644096
  %v228 = vsel %vm57, %v40, 4286644096
  %v230 = vmax.bf16 %v225, %v228
  %v232 = vsel %vm57, %v56, 4286644096
  %v234 = vmax.bf16 %v230, %v232
  %235 = vst [vmem:[%s1] sm:$0xf] %v69
  %236 = vst [vmem:[%s1 + $0x4] sm:$0xf] %v80
  %237 = vst [vmem:[%s1 + $0x8] sm:$0xf] %v91
  %238 = vst [vmem:[%s1 + $0xc] sm:$0xf] %v102
  %239 = vst [vmem:[%s1 + $0x10] sm:$0xf] %v113
  %240 = vst [vmem:[%s1 + $0x14] sm:$0xf] %v124
  %241 = vst [vmem:[%s1 + $0x18] sm:$0xf] %v135
  %242 = vst [vmem:[%s1 + $0x1c] sm:$0xf] %v146
  %243 = vst [vmem:[%s1 + $0x20] sm:$0xf] %v157
  %244 = vst [vmem:[%s1 + $0x24] sm:$0xf] %v168
  %245 = vst [vmem:[%s1 + $0x28] sm:$0xf] %v179
  %246 = vst [vmem:[%s1 + $0x2c] sm:$0xf] %v190
  %247 = vst [vmem:[%s1 + $0x30] sm:$0xf] %v201
  %248 = vst [vmem:[%s1 + $0x34] sm:$0xf] %v212
  %249 = vst [vmem:[%s1 + $0x38] sm:$0xf] %v223
  %250 = vst [vmem:[%s1 + $0x3c] sm:$0xf] %v234
  // Predicated region
  $region6: #{_lambda_.20} parent=0 // pred_check
    _
  $region7: #{_lambda_.20} parent=0 // pred_check_branch
    %252 = sbr.rel (0) target = $region9
  $region8: #{_lambda_.20} parent=0 // pred_region
    _
  $region9: #{_lambda_.20} parent=0 // pred_fallthru
    _
  // Predicated region
  $region10: #{_lambda_.20} parent=0 // pred_check
    _
  $region11: #{_lambda_.20} parent=0 // pred_check_branch
    %254 = sbr.rel (0) target = $region13
  $region12: #{_lambda_.20} parent=0 // pred_region
    _
  $region13: #{_lambda_.20} parent=0 // pred_fallthru
    _

// kernel: _lambda_.21
$region0: #{_lambda_.21}
  #allocation0 [shape = 'u32[]', space=smem, size = 0x4, offset = 0x4, fixed_abs, tag = 'smem constant byte address 0x4 - core index']
  #allocation1 [shape = 'u32[144,128]{1,0:T(1,128)}', space=vmem, size = 0x12000, scoped, tag = 'internal scratch']
  %s0 = inlined_call_operand.vmem [shape: bf16[128,144], index: 0, kind: input, shape index: {}]
  %s1 = inlined_call_operand.vmem [shape: bf16[144,128], index: 1, kind: input, shape index: {}]
  %s2 = inlined_call_operand.vmem [shape: f32[1,128], index: 2, kind: input, shape index: {}]
  %s3 = inlined_call_operand.vmem [shape: bf16[128,128], index: 3, kind: output, shape index: {}]
  %s4 = sld [smem:[#allocation0]]
  $region22: #{_lambda_.21} parent=0
    _
  %s6 = ssub.s32 1, %s4
  %s7 = scalar_select 0, %s6, %s4
  // Predicated region
  $region2: #{_lambda_.21} parent=0 // pred_check
    _
  $region3: #{_lambda_.21} parent=0 // pred_check_branch
    %9 = sbr.rel (0) target = $region5
  $region4: #{_lambda_.21} parent=0 // pred_region
    _
  $region5: #{_lambda_.21} parent=0 // pred_fallthru
    _
  // Predicated region
  $region6: #{_lambda_.21} parent=0 // pred_check
    _
  $region7: #{_lambda_.21} parent=0 // pred_check_branch
    %11 = sbr.rel (0) target = $region9
  $region8: #{_lambda_.21} parent=0 // pred_region
    _
  $region9: #{_lambda_.21} parent=0 // pred_fallthru
    _
  // Predicated region
  $region10: #{_lambda_.21} parent=0 // pred_check
    _
  $region11: #{_lambda_.21} parent=0 // pred_check_branch
    %13 = sbr.rel (0) target = $region13
  $region12: #{_lambda_.21} parent=0 // pred_region
    _
  $region13: #{_lambda_.21} parent=0 // pred_fallthru
    _
  %v15 = vld [vmem:[%s0] sm:$0xff]
  %v16 = vld [vmem:[%s0 + $0x8] sm:$0xff]
  %v17 = vld [vmem:[%s0 + $0x10] sm:$0xff]
  %v18 = vld [vmem:[%s0 + $0x18] sm:$0xff]
  %v19 = vld [vmem:[%s0 + $0x20] sm:$0xff]
  %v20 = vld [vmem:[%s0 + $0x28] sm:$0xff]
  %v21 = vld [vmem:[%s0 + $0x30] sm:$0xff]
  %v22 = vld [vmem:[%s0 + $0x38] sm:$0xff]
  %v23 = vld [vmem:[%s0 + $0x40] sm:$0xff]
  %v24 = vld [vmem:[%s0 + $0x48] sm:$0xff]
  %v25 = vld [vmem:[%s0 + $0x50] sm:$0xff]
  %v26 = vld [vmem:[%s0 + $0x58] sm:$0xff]
  %v27 = vld [vmem:[%s0 + $0x60] sm:$0xff]
  %v28 = vld [vmem:[%s0 + $0x68] sm:$0xff]
  %v29 = vld [vmem:[%s0 + $0x70] sm:$0xff]
  %v30 = vld [vmem:[%s0 + $0x78] sm:$0xff]
  %v31 = vld [vmem:[%s1] sm:$0xf]
  %v32 = vld [vmem:[%s1 + $0x4] sm:$0xf]
  %v33 = vld [vmem:[%s1 + $0x8] sm:$0xf]
  %v34 = vld [vmem:[%s1 + $0xc] sm:$0xf]
  %v35 = vld [vmem:[%s1 + $0x10] sm:$0xf]
  %v36 = vld [vmem:[%s1 + $0x14] sm:$0xf]
  %v37 = vld [vmem:[%s1 + $0x18] sm:$0xf]
  %v38 = vld [vmem:[%s1 + $0x1c] sm:$0xf]
  %v39 = vld [vmem:[%s1 + $0x20] sm:$0xf]
  %v40 = vld [vmem:[%s1 + $0x24] sm:$0xf]
  %v41 = vld [vmem:[%s1 + $0x28] sm:$0xf]
  %v42 = vld [vmem:[%s1 + $0x2c] sm:$0xf]
  %v43 = vld [vmem:[%s1 + $0x30] sm:$0xf]
  %v44 = vld [vmem:[%s1 + $0x34] sm:$0xf]
  %v45 = vld [vmem:[%s1 + $0x38] sm:$0xf]
  %v46 = vld [vmem:[%s1 + $0x3c] sm:$0xf]
  %v47 = vld [vmem:[%s1 + $0x40] sm:$0xf]
  %v48 = vld [vmem:[%s1 + $0x44] sm:$0xf]
  %v49 = vld [vmem:[%s2] sm:$0x1]
  %v51 = vlaneseq
  %v52 = vshrl.u32 %v51, 7
  %v53 = vsub.s32 0, %v52
  %v54 = vrot.slane %v49, %v53
  %v72 = vunpack.c.l.b16 %v15
  %v73 = vunpack.c.h.b16 %v15
  %v74 = vunpack.c.l.b16 %v16
  %v75 = vunpack.c.h.b16 %v16
  %v76 = vunpack.c.l.b16 %v17
  %v77 = vunpack.c.h.b16 %v17
  %v78 = vunpack.c.l.b16 %v18
  %v79 = vunpack.c.h.b16 %v18
  %v80 = vunpack.c.l.b16 %v19
  %v81 = vunpack.c.h.b16 %v19
  %v82 = vunpack.c.l.b16 %v20
  %v83 = vunpack.c.h.b16 %v20
  %v84 = vunpack.c.l.b16 %v21
  %v85 = vunpack.c.h.b16 %v21
  %v86 = vunpack.c.l.b16 %v22
  %v87 = vunpack.c.h.b16 %v22
  %v88 = vunpack.c.l.b16 %v23
  %v89 = vunpack.c.h.b16 %v23
  %v90 = vunpack.c.l.b16 %v24
  %v91 = vunpack.c.h.b16 %v24
  %v92 = vunpack.c.l.b16 %v25
  %v93 = vunpack.c.h.b16 %v25
  %v94 = vunpack.c.l.b16 %v26
  %v95 = vunpack.c.h.b16 %v26
  %v96 = vunpack.c.l.b16 %v27
  %v97 = vunpack.c.h.b16 %v27
  %v98 = vunpack.c.l.b16 %v28
  %v99 = vunpack.c.h.b16 %v28
  %v100 = vunpack.c.l.b16 %v29
  %v101 = vunpack.c.h.b16 %v29
  %v102 = vunpack.c.l.b16 %v30
  %v103 = vunpack.c.h.b16 %v30
  %v104 = vpack.c.b16 %v74, %v72
  %v105 = vpack.c.b16 %v75, %v73
  %v106 = vpack.c.b16 %v78, %v76
  %v107 = vpack.c.b16 %v79, %v77
  %v108 = vpack.c.b16 %v82, %v80
  %v109 = vpack.c.b16 %v83, %v81
  %v110 = vpack.c.b16 %v86, %v84
  %v111 = vpack.c.b16 %v87, %v85
  %v112 = vpack.c.b16 %v90, %v88
  %v113 = vpack.c.b16 %v91, %v89
  %v114 = vpack.c.b16 %v94, %v92
  %v115 = vpack.c.b16 %v95, %v93
  %v116 = vpack.c.b16 %v98, %v96
  %v117 = vpack.c.b16 %v99, %v97
  %v118 = vpack.c.b16 %v102, %v100
  %v119 = vpack.c.b16 %v103, %v101
  %v146 = vunpack.c.l.b16 %v31
  %v147 = vunpack.c.l.b16 %v32
  %v148 = vunpack.c.l.b16 %v33
  %v149 = vunpack.c.l.b16 %v34
  %v150 = vunpack.c.l.b16 %v35
  %v151 = vunpack.c.l.b16 %v36
  %v152 = vunpack.c.l.b16 %v37
  %v153 = vunpack.c.l.b16 %v38
  %v154 = vunpack.c.l.b16 %v39
  %v155 = vunpack.c.l.b16 %v40
  %v156 = vunpack.c.l.b16 %v41
  %v157 = vunpack.c.l.b16 %v42
  %v158 = vunpack.c.l.b16 %v43
  %v159 = vunpack.c.l.b16 %v44
  %v160 = vunpack.c.l.b16 %v45
  %v161 = vunpack.c.l.b16 %v46
  %v162 = vunpack.c.l.b16 %v47
  %v163 = vunpack.c.l.b16 %v48
  %v164 = vpack.c.b16 %v147, %v146
  %v165 = vpack.c.b16 %v149, %v148
  %v166 = vpack.c.b16 %v151, %v150
  %v167 = vpack.c.b16 %v153, %v152
  %v168 = vpack.c.b16 %v155, %v154
  %v169 = vpack.c.b16 %v157, %v156
  %v170 = vpack.c.b16 %v159, %v158
  %v171 = vpack.c.b16 %v161, %v160
  %v172 = vpack.c.b16 %v163, %v162
  %vm182 = vcmask 130048
  %v184 = vsel %vm182, %v105, 0
  %v187 = vsel %vm182, %v107, 0
  %v190 = vsel %vm182, %v109, 0
  %v193 = vsel %vm182, %v111, 0
  %v196 = vsel %vm182, %v113, 0
  %v199 = vsel %vm182, %v115, 0
  %v202 = vsel %vm182, %v117, 0
  %v205 = vsel %vm182, %v119, 0
  %207 = vmatprep.subr.bf16.mxu0 0
  %208 = vmatpush1.bf16.msra.mxu0 %v164
  %209 = vmatprep.subr.bf16.mxu0 0
  %210 = vmatpush1.bf16.msra.mxu0 %v165
  %211 = vmatprep.subr.bf16.mxu0 0
  %212 = vmatpush1.bf16.msra.mxu0 %v166
  %213 = vmatprep.subr.bf16.mxu0 0
  %214 = vmatpush1.bf16.msra.mxu0 %v167
  %215 = vmatprep.subr.bf16.mxu0 0
  %216 = vmatpush1.bf16.msra.mxu0 %v168
  %217 = vmatprep.subr.bf16.mxu0 0
  %218 = vmatpush1.bf16.msra.mxu0 %v169
  %219 = vmatprep.subr.bf16.mxu0 0
  %220 = vmatpush1.bf16.msra.mxu0 %v170
  %221 = vmatprep.subr.bf16.mxu0 0
  %222 = vmatpush1.bf16.msra.mxu0 %v171
  %223 = vmatprep.subr.bf16.mxu0 0
  %224 = vmatpush1.bf16.msra.mxu0 %v172
  %225 = vmatprep.subr.bf16.mxu0 0
  %226 = vmatpush1.bf16.msra.mxu0 0
  %227 = vmatprep.subr.bf16.mxu0 0
  %228 = vmatpush1.bf16.msra.mxu0 0
  %229 = vmatprep.subr.bf16.mxu0 0
  %230 = vmatpush1.bf16.msra.mxu0 0
  %231 = vmatprep.subr.bf16.mxu0 0
  %232 = vmatpush1.bf16.msra.mxu0 0
  %233 = vmatprep.subr.bf16.mxu0 0
  %234 = vmatpush1.bf16.msra.mxu0 0
  %235 = vmatprep.subr.bf16.mxu0 0
  %236 = vmatpush1.bf16.msra.mxu0 0
  %237 = vmatprep.subr.bf16.mxu0 0
  %238 = vmatpush1.bf16.msra.mxu0 0
  %239 = vmatprep.mubr.bf16.mxu0 %v184
  %240 = vmatmul.mubr.bf16.gmra.mrb[0].mxu0 %v104
  %v241 = vpop.f32.mrb[0].mxu0
  %v242 = vadd.f32 %v54, %v241
  %v243 = vpop.f32.mrb[0].mxu0
  %v244 = vpop.f32.mrb[0].mxu0
  %v245 = vadd.f32 %v54, %v244
  %v246 = vpop.f32.mrb[0].mxu0
  %247 = vmatprep.mubr.bf16.mxu0 %v187
  %248 = vmatmul.mubr.bf16.gmra.mrb[0].mxu0 %v106
  %v249 = vpop.f32.mrb[0].mxu0
  %v250 = vadd.f32 %v54, %v249
  %v251 = vpop.f32.mrb[0].mxu0
  %v252 = vpop.f32.mrb[0].mxu0
  %v253 = vadd.f32 %v54, %v252
  %v254 = vpop.f32.mrb[0].mxu0
  %255 = vmatprep.mubr.bf16.mxu0 %v190
  %256 = vmatmul.mubr.bf16.gmra.mrb[0].mxu0 %v108
  %v257 = vpop.f32.mrb[0].mxu0
  %v258 = vadd.f32 %v54, %v257
  %v259 = vpop.f32.mrb[0].mxu0
  %v260 = vpop.f32.mrb[0].mxu0
  %v261 = vadd.f32 %v54, %v260
  %v262 = vpop.f32.mrb[0].mxu0
  %263 = vmatprep.mubr.bf16.mxu0 %v193
  %264 = vmatmul.mubr.bf16.gmra.mrb[0].mxu0 %v110
  %v265 = vpop.f32.mrb[0].mxu0
  %v266 = vadd.f32 %v54, %v265
  %v267 = vpop.f32.mrb[0].mxu0
  %v268 = vpop.f32.mrb[0].mxu0
  %v269 = vadd.f32 %v54, %v268
  %v270 = vpop.f32.mrb[0].mxu0
  %271 = vmatprep.mubr.bf16.mxu0 %v196
  %272 = vmatmul.mubr.bf16.gmra.mrb[0].mxu0 %v112
  %v273 = vpop.f32.mrb[0].mxu0
  %v274 = vadd.f32 %v54, %v273
  %v275 = vpop.f32.mrb[0].mxu0
  %v276 = vpop.f32.mrb[0].mxu0
  %v277 = vadd.f32 %v54, %v276
  %v278 = vpop.f32.mrb[0].mxu0
  %279 = vmatprep.mubr.bf16.mxu0 %v199
  %280 = vmatmul.mubr.bf16.gmra.mrb[0].mxu0 %v114
  %v281 = vpop.f32.mrb[0].mxu0
  %v282 = vadd.f32 %v54, %v281
  %v283 = vpop.f32.mrb[0].mxu0
  %v284 = vpop.f32.mrb[0].mxu0
  %v285 = vadd.f32 %v54, %v284
  %v286 = vpop.f32.mrb[0].mxu0
  %287 = vmatprep.mubr.bf16.mxu0 %v202
  %288 = vmatmul.mubr.bf16.gmra.mrb[0].mxu0 %v116
  %v289 = vpop.f32.mrb[0].mxu0
  %v290 = vadd.f32 %v54, %v289
  %v291 = vpop.f32.mrb[0].mxu0
  %v292 = vpop.f32.mrb[0].mxu0
  %v293 = vadd.f32 %v54, %v292
  %v294 = vpop.f32.mrb[0].mxu0
  %295 = vmatprep.mubr.bf16.mxu0 %v205
  %296 = vmatmul.mubr.bf16.gmra.mrb[0].mxu0 %v118
  %v297 = vpop.f32.mrb[0].mxu0
  %v298 = vadd.f32 %v54, %v297
  %v299 = vpop.f32.mrb[0].mxu0
  %v300 = vpop.f32.mrb[0].mxu0
  %v301 = vadd.f32 %v54, %v300
  %v302 = vpop.f32.mrb[0].mxu0
  %303 = vdwg.mxu0
  %v304 = vmax.f32 %v242, 0.0
  %v305 = vmax.f32 %v245, 0.0
  %v306 = vmax.f32 %v250, 0.0
  %v307 = vmax.f32 %v253, 0.0
  %v308 = vmax.f32 %v258, 0.0
  %v309 = vmax.f32 %v261, 0.0
  %v310 = vmax.f32 %v266, 0.0
  %v311 = vmax.f32 %v269, 0.0
  %v312 = vmax.f32 %v274, 0.0
  %v313 = vmax.f32 %v277, 0.0
  %v314 = vmax.f32 %v282, 0.0
  %v315 = vmax.f32 %v285, 0.0
  %v316 = vmax.f32 %v290, 0.0
  %v317 = vmax.f32 %v293, 0.0
  %v318 = vmax.f32 %v298, 0.0
  %v319 = vmax.f32 %v301, 0.0
  %v320 = vpack.c.bf16 %v305, %v304
  %v321 = vpack.c.bf16 %v307, %v306
  %v322 = vpack.c.bf16 %v309, %v308
  %v323 = vpack.c.bf16 %v311, %v310
  %v324 = vpack.c.bf16 %v313, %v312
  %v325 = vpack.c.bf16 %v315, %v314
  %v326 = vpack.c.bf16 %v317, %v316
  %v327 = vpack.c.bf16 %v319, %v318
  %v336 = vunpack.c.l.b16 %v320
  %v337 = vunpack.c.h.b16 %v320
  %v338 = vunpack.c.l.b16 %v321
  %v339 = vunpack.c.h.b16 %v321
  %v340 = vunpack.c.l.b16 %v322
  %v341 = vunpack.c.h.b16 %v322
  %v342 = vunpack.c.l.b16 %v323
  %v343 = vunpack.c.h.b16 %v323
  %v344 = vunpack.c.l.b16 %v324
  %v345 = vunpack.c.h.b16 %v324
  %v346 = vunpack.c.l.b16 %v325
  %v347 = vunpack.c.h.b16 %v325
  %v348 = vunpack.c.l.b16 %v326
  %v349 = vunpack.c.h.b16 %v326
  %v350 = vunpack.c.l.b16 %v327
  %v351 = vunpack.c.h.b16 %v327
  %v352 = vpack.c.b16 %v336, %v336
  %v353 = vpack.c.b16 %v337, %v337
  %v354 = vpack.c.b16 %v338, %v338
  %v355 = vpack.c.b16 %v339, %v339
  %v356 = vpack.c.b16 %v340, %v340
  %v357 = vpack.c.b16 %v341, %v341
  %v358 = vpack.c.b16 %v342, %v342
  %v359 = vpack.c.b16 %v343, %v343
  %v360 = vpack.c.b16 %v344, %v344
  %v361 = vpack.c.b16 %v345, %v345
  %v362 = vpack.c.b16 %v346, %v346
  %v363 = vpack.c.b16 %v347, %v347
  %v364 = vpack.c.b16 %v348, %v348
  %v365 = vpack.c.b16 %v349, %v349
  %v366 = vpack.c.b16 %v350, %v350
  %v367 = vpack.c.b16 %v351, %v351
  %384 = vst [vmem:[%s3] sm:$0xf] %v352
  %385 = vst [vmem:[%s3 + $0x4] sm:$0xf] %v353
  %386 = vst [vmem:[%s3 + $0x8] sm:$0xf] %v354
  %387 = vst [vmem:[%s3 + $0xc] sm:$0xf] %v355
  %388 = vst [vmem:[%s3 + $0x10] sm:$0xf] %v356
  %389 = vst [vmem:[%s3 + $0x14] sm:$0xf] %v357
  %390 = vst [vmem:[%s3 + $0x18] sm:$0xf] %v358
  %391 = vst [vmem:[%s3 + $0x1c] sm:$0xf] %v359
  %392 = vst [vmem:[%s3 + $0x20] sm:$0xf] %v360
  %393 = vst [vmem:[%s3 + $0x24] sm:$0xf] %v361
  %394 = vst [vmem:[%s3 + $0x28] sm:$0xf] %v362
  %395 = vst [vmem:[%s3 + $0x2c] sm:$0xf] %v363
  %396 = vst [vmem:[%s3 + $0x30] sm:$0xf] %v364
  %397 = vst [vmem:[%s3 + $0x34] sm:$0xf] %v365
  %398 = vst [vmem:[%s3 + $0x38] sm:$0xf] %v366
  %399 = vst [vmem:[%s3 + $0x3c] sm:$0xf] %v367
  // Predicated region
  $region14: #{_lambda_.21} parent=0 // pred_check
    _
  $region15: #{_lambda_.21} parent=0 // pred_check_branch
    %401 = sbr.rel (0) target = $region17
  $region16: #{_lambda_.21} parent=0 // pred_region
    _
  $region17: #{_lambda_.21} parent=0 // pred_fallthru
    _
  // Predicated region
  $region18: #{_lambda_.21} parent=0 // pred_check
    _
  $region19: #{_lambda_.21} parent=0 // pred_check_branch
    %403 = sbr.rel (0) target = $region21
  $region20: #{_lambda_.21} parent=0 // pred_region
    _
  $region21: #{_lambda_.21} parent=0 // pred_fallthru
    _

// kernel: _lambda_.22
$region0: #{_lambda_.22}
  #allocation0 [shape = 'u32[]', space=smem, size = 0x4, offset = 0x4, fixed_abs, tag = 'smem constant byte address 0x4 - core index']
  #allocation1 [shape = 'u32[144,128]{1,0:T(1,128)}', space=vmem, size = 0x12000, scoped, tag = 'internal scratch']
  %s0 = inlined_call_operand.vmem [shape: bf16[128,144], index: 0, kind: input, shape index: {}]
  %s1 = inlined_call_operand.vmem [shape: bf16[144,128], index: 1, kind: input, shape index: {}]
  %s2 = inlined_call_operand.vmem [shape: f32[1,128], index: 2, kind: input, shape index: {}]
  %s3 = inlined_call_operand.vmem [shape: bf16[128,128], index: 3, kind: input, shape index: {}]
  %s4 = inlined_call_operand.vmem [shape: bf16[128,128], index: 4, kind: output, shape index: {}]
  %s5 = sld [smem:[#allocation0]]
  $region26: #{_lambda_.22} parent=0
    _
  %s7 = ssub.s32 1, %s5
  %s8 = scalar_select 0, %s7, %s5
  // Predicated region
  $region2: #{_lambda_.22} parent=0 // pred_check
    _
  $region3: #{_lambda_.22} parent=0 // pred_check_branch
    %10 = sbr.rel (0) target = $region5
  $region4: #{_lambda_.22} parent=0 // pred_region
    _
  $region5: #{_lambda_.22} parent=0 // pred_fallthru
    _
  // Predicated region
  $region6: #{_lambda_.22} parent=0 // pred_check
    _
  $region7: #{_lambda_.22} parent=0 // pred_check_branch
    %12 = sbr.rel (0) target = $region9
  $region8: #{_lambda_.22} parent=0 // pred_region
    _
  $region9: #{_lambda_.22} parent=0 // pred_fallthru
    _
  // Predicated region
  $region10: #{_lambda_.22} parent=0 // pred_check
    _
  $region11: #{_lambda_.22} parent=0 // pred_check_branch
    %14 = sbr.rel (0) target = $region13
  $region12: #{_lambda_.22} parent=0 // pred_region
    _
  $region13: #{_lambda_.22} parent=0 // pred_fallthru
    _
  // Predicated region
  $region14: #{_lambda_.22} parent=0 // pred_check
    _
  $region15: #{_lambda_.22} parent=0 // pred_check_branch
    %16 = sbr.rel (0) target = $region17
  $region16: #{_lambda_.22} parent=0 // pred_region
    _
  $region17: #{_lambda_.22} parent=0 // pred_fallthru
    _
  %v18 = vld [vmem:[%s0] sm:$0xff]
  %v19 = vld [vmem:[%s0 + $0x8] sm:$0xff]
  %v20 = vld [vmem:[%s0 + $0x10] sm:$0xff]
  %v21 = vld [vmem:[%s0 + $0x18] sm:$0xff]
  %v22 = vld [vmem:[%s0 + $0x20] sm:$0xff]
  %v23 = vld [vmem:[%s0 + $0x28] sm:$0xff]
  %v24 = vld [vmem:[%s0 + $0x30] sm:$0xff]
  %v25 = vld [vmem:[%s0 + $0x38] sm:$0xff]
  %v26 = vld [vmem:[%s0 + $0x40] sm:$0xff]
  %v27 = vld [vmem:[%s0 + $0x48] sm:$0xff]
  %v28 = vld [vmem:[%s0 + $0x50] sm:$0xff]
  %v29 = vld [vmem:[%s0 + $0x58] sm:$0xff]
  %v30 = vld [vmem:[%s0 + $0x60] sm:$0xff]
  %v31 = vld [vmem:[%s0 + $0x68] sm:$0xff]
  %v32 = vld [vmem:[%s0 + $0x70] sm:$0xff]
  %v33 = vld [vmem:[%s0 + $0x78] sm:$0xff]
  %v34 = vld [vmem:[%s1] sm:$0xf]
  %v35 = vld [vmem:[%s1 + $0x4] sm:$0xf]
  %v36 = vld [vmem:[%s1 + $0x8] sm:$0xf]
  %v37 = vld [vmem:[%s1 + $0xc] sm:$0xf]
  %v38 = vld [vmem:[%s1 + $0x10] sm:$0xf]
  %v39 = vld [vmem:[%s1 + $0x14] sm:$0xf]
  %v40 = vld [vmem:[%s1 + $0x18] sm:$0xf]
  %v41 = vld [vmem:[%s1 + $0x1c] sm:$0xf]
  %v42 = vld [vmem:[%s1 + $0x20] sm:$0xf]
  %v43 = vld [vmem:[%s1 + $0x24] sm:$0xf]
  %v44 = vld [vmem:[%s1 + $0x28] sm:$0xf]
  %v45 = vld [vmem:[%s1 + $0x2c] sm:$0xf]
  %v46 = vld [vmem:[%s1 + $0x30] sm:$0xf]
  %v47 = vld [vmem:[%s1 + $0x34] sm:$0xf]
  %v48 = vld [vmem:[%s1 + $0x38] sm:$0xf]
  %v49 = vld [vmem:[%s1 + $0x3c] sm:$0xf]
  %v50 = vld [vmem:[%s1 + $0x40] sm:$0xf]
  %v51 = vld [vmem:[%s1 + $0x44] sm:$0xf]
  %v52 = vld [vmem:[%s2] sm:$0x1]
  %v54 = vlaneseq
  %v55 = vshrl.u32 %v54, 7
  %v56 = vsub.s32 0, %v55
  %v57 = vrot.slane %v52, %v56
  %v75 = vunpack.c.l.b16 %v18
  %v76 = vunpack.c.h.b16 %v18
  %v77 = vunpack.c.l.b16 %v19
  %v78 = vunpack.c.h.b16 %v19
  %v79 = vunpack.c.l.b16 %v20
  %v80 = vunpack.c.h.b16 %v20
  %v81 = vunpack.c.l.b16 %v21
  %v82 = vunpack.c.h.b16 %v21
  %v83 = vunpack.c.l.b16 %v22
  %v84 = vunpack.c.h.b16 %v22
  %v85 = vunpack.c.l.b16 %v23
  %v86 = vunpack.c.h.b16 %v23
  %v87 = vunpack.c.l.b16 %v24
  %v88 = vunpack.c.h.b16 %v24
  %v89 = vunpack.c.l.b16 %v25
  %v90 = vunpack.c.h.b16 %v25
  %v91 = vunpack.c.l.b16 %v26
  %v92 = vunpack.c.h.b16 %v26
  %v93 = vunpack.c.l.b16 %v27
  %v94 = vunpack.c.h.b16 %v27
  %v95 = vunpack.c.l.b16 %v28
  %v96 = vunpack.c.h.b16 %v28
  %v97 = vunpack.c.l.b16 %v29
  %v98 = vunpack.c.h.b16 %v29
  %v99 = vunpack.c.l.b16 %v30
  %v100 = vunpack.c.h.b16 %v30
  %v101 = vunpack.c.l.b16 %v31
  %v102 = vunpack.c.h.b16 %v31
  %v103 = vunpack.c.l.b16 %v32
  %v104 = vunpack.c.h.b16 %v32
  %v105 = vunpack.c.l.b16 %v33
  %v106 = vunpack.c.h.b16 %v33
  %v107 = vpack.c.b16 %v77, %v75
  %v108 = vpack.c.b16 %v78, %v76
  %v109 = vpack.c.b16 %v81, %v79
  %v110 = vpack.c.b16 %v82, %v80
  %v111 = vpack.c.b16 %v85, %v83
  %v112 = vpack.c.b16 %v86, %v84
  %v113 = vpack.c.b16 %v89, %v87
  %v114 = vpack.c.b16 %v90, %v88
  %v115 = vpack.c.b16 %v93, %v91
  %v116 = vpack.c.b16 %v94, %v92
  %v117 = vpack.c.b16 %v97, %v95
  %v118 = vpack.c.b16 %v98, %v96
  %v119 = vpack.c.b16 %v101, %v99
  %v120 = vpack.c.b16 %v102, %v100
  %v121 = vpack.c.b16 %v105, %v103
  %v122 = vpack.c.b16 %v106, %v104
  %v149 = vunpack.c.l.b16 %v34
  %v150 = vunpack.c.l.b16 %v35
  %v151 = vunpack.c.l.b16 %v36
  %v152 = vunpack.c.l.b16 %v37
  %v153 = vunpack.c.l.b16 %v38
  %v154 = vunpack.c.l.b16 %v39
  %v155 = vunpack.c.l.b16 %v40
  %v156 = vunpack.c.l.b16 %v41
  %v157 = vunpack.c.l.b16 %v42
  %v158 = vunpack.c.l.b16 %v43
  %v159 = vunpack.c.l.b16 %v44
  %v160 = vunpack.c.l.b16 %v45
  %v161 = vunpack.c.l.b16 %v46
  %v162 = vunpack.c.l.b16 %v47
  %v163 = vunpack.c.l.b16 %v48
  %v164 = vunpack.c.l.b16 %v49
  %v165 = vunpack.c.l.b16 %v50
  %v166 = vunpack.c.l.b16 %v51
  %v167 = vpack.c.b16 %v150, %v149
  %v168 = vpack.c.b16 %v152, %v151
  %v169 = vpack.c.b16 %v154, %v153
  %v170 = vpack.c.b16 %v156, %v155
  %v171 = vpack.c.b16 %v158, %v157
  %v172 = vpack.c.b16 %v160, %v159
  %v173 = vpack.c.b16 %v162, %v161
  %v174 = vpack.c.b16 %v164, %v163
  %v175 = vpack.c.b16 %v166, %v165
  %vm185 = vcmask 130048
  %v187 = vsel %vm185, %v108, 0
  %v190 = vsel %vm185, %v110, 0
  %v193 = vsel %vm185, %v112, 0
  %v196 = vsel %vm185, %v114, 0
  %v199 = vsel %vm185, %v116, 0
  %v202 = vsel %vm185, %v118, 0
  %v205 = vsel %vm185, %v120, 0
  %v208 = vsel %vm185, %v122, 0
  %210 = vmatprep.subr.bf16.mxu0 0
  %211 = vmatpush1.bf16.msra.mxu0 %v167
  %212 = vmatprep.subr.bf16.mxu0 0
  %213 = vmatpush1.bf16.msra.mxu0 %v168
  %214 = vmatprep.subr.bf16.mxu0 0
  %215 = vmatpush1.bf16.msra.mxu0 %v169
  %216 = vmatprep.subr.bf16.mxu0 0
  %217 = vmatpush1.bf16.msra.mxu0 %v170
  %218 = vmatprep.subr.bf16.mxu0 0
  %219 = vmatpush1.bf16.msra.mxu0 %v171
  %220 = vmatprep.subr.bf16.mxu0 0
  %221 = vmatpush1.bf16.msra.mxu0 %v172
  %222 = vmatprep.subr.bf16.mxu0 0
  %223 = vmatpush1.bf16.msra.mxu0 %v173
  %224 = vmatprep.subr.bf16.mxu0 0
  %225 = vmatpush1.bf16.msra.mxu0 %v174
  %226 = vmatprep.subr.bf16.mxu0 0
  %227 = vmatpush1.bf16.msra.mxu0 %v175
  %228 = vmatprep.subr.bf16.mxu0 0
  %229 = vmatpush1.bf16.msra.mxu0 0
  %230 = vmatprep.subr.bf16.mxu0 0
  %231 = vmatpush1.bf16.msra.mxu0 0
  %232 = vmatprep.subr.bf16.mxu0 0
  %233 = vmatpush1.bf16.msra.mxu0 0
  %234 = vmatprep.subr.bf16.mxu0 0
  %235 = vmatpush1.bf16.msra.mxu0 0
  %236 = vmatprep.subr.bf16.mxu0 0
  %237 = vmatpush1.bf16.msra.mxu0 0
  %238 = vmatprep.subr.bf16.mxu0 0
  %239 = vmatpush1.bf16.msra.mxu0 0
  %240 = vmatprep.subr.bf16.mxu0 0
  %241 = vmatpush1.bf16.msra.mxu0 0
  %242 = vmatprep.mubr.bf16.mxu0 %v187
  %243 = vmatmul.mubr.bf16.gmra.mrb[0].mxu0 %v107
  %v244 = vpop.f32.mrb[0].mxu0
  %v245 = vadd.f32 %v57, %v244
  %v246 = vpop.f32.mrb[0].mxu0
  %v247 = vpop.f32.mrb[0].mxu0
  %v248 = vadd.f32 %v57, %v247
  %v249 = vpop.f32.mrb[0].mxu0
  %250 = vmatprep.mubr.bf16.mxu0 %v190
  %251 = vmatmul.mubr.bf16.gmra.mrb[0].mxu0 %v109
  %v252 = vpop.f32.mrb[0].mxu0
  %v253 = vadd.f32 %v57, %v252
  %v254 = vpop.f32.mrb[0].mxu0
  %v255 = vpop.f32.mrb[0].mxu0
  %v256 = vadd.f32 %v57, %v255
  %v257 = vpop.f32.mrb[0].mxu0
  %258 = vmatprep.mubr.bf16.mxu0 %v193
  %259 = vmatmul.mubr.bf16.gmra.mrb[0].mxu0 %v111
  %v260 = vpop.f32.mrb[0].mxu0
  %v261 = vadd.f32 %v57, %v260
  %v262 = vpop.f32.mrb[0].mxu0
  %v263 = vpop.f32.mrb[0].mxu0
  %v264 = vadd.f32 %v57, %v263
  %v265 = vpop.f32.mrb[0].mxu0
  %266 = vmatprep.mubr.bf16.mxu0 %v196
  %267 = vmatmul.mubr.bf16.gmra.mrb[0].mxu0 %v113
  %v268 = vpop.f32.mrb[0].mxu0
  %v269 = vadd.f32 %v57, %v268
  %v270 = vpop.f32.mrb[0].mxu0
  %v271 = vpop.f32.mrb[0].mxu0
  %v272 = vadd.f32 %v57, %v271
  %v273 = vpop.f32.mrb[0].mxu0
  %274 = vmatprep.mubr.bf16.mxu0 %v199
  %275 = vmatmul.mubr.bf16.gmra.mrb[0].mxu0 %v115
  %v276 = vpop.f32.mrb[0].mxu0
  %v277 = vadd.f32 %v57, %v276
  %v278 = vpop.f32.mrb[0].mxu0
  %v279 = vpop.f32.mrb[0].mxu0
  %v280 = vadd.f32 %v57, %v279
  %v281 = vpop.f32.mrb[0].mxu0
  %282 = vmatprep.mubr.bf16.mxu0 %v202
  %283 = vmatmul.mubr.bf16.gmra.mrb[0].mxu0 %v117
  %v284 = vpop.f32.mrb[0].mxu0
  %v285 = vadd.f32 %v57, %v284
  %v286 = vpop.f32.mrb[0].mxu0
  %v287 = vpop.f32.mrb[0].mxu0
  %v288 = vadd.f32 %v57, %v287
  %v289 = vpop.f32.mrb[0].mxu0
  %290 = vmatprep.mubr.bf16.mxu0 %v205
  %291 = vmatmul.mubr.bf16.gmra.mrb[0].mxu0 %v119
  %v292 = vpop.f32.mrb[0].mxu0
  %v293 = vadd.f32 %v57, %v292
  %v294 = vpop.f32.mrb[0].mxu0
  %v295 = vpop.f32.mrb[0].mxu0
  %v296 = vadd.f32 %v57, %v295
  %v297 = vpop.f32.mrb[0].mxu0
  %298 = vmatprep.mubr.bf16.mxu0 %v208
  %299 = vmatmul.mubr.bf16.gmra.mrb[0].mxu0 %v121
  %v300 = vpop.f32.mrb[0].mxu0
  %v301 = vadd.f32 %v57, %v300
  %v302 = vpop.f32.mrb[0].mxu0
  %v303 = vpop.f32.mrb[0].mxu0
  %v304 = vadd.f32 %v57, %v303
  %v305 = vpop.f32.mrb[0].mxu0
  %306 = vdwg.mxu0
  %v307 = vld [vmem:[%s3] sm:$0xf]
  %v308 = vld [vmem:[%s3 + $0x4] sm:$0xf]
  %v309 = vld [vmem:[%s3 + $0x8] sm:$0xf]
  %v310 = vld [vmem:[%s3 + $0xc] sm:$0xf]
  %v311 = vld [vmem:[%s3 + $0x10] sm:$0xf]
  %v312 = vld [vmem:[%s3 + $0x14] sm:$0xf]
  %v313 = vld [vmem:[%s3 + $0x18] sm:$0xf]
  %v314 = vld [vmem:[%s3 + $0x1c] sm:$0xf]
  %v315 = vld [vmem:[%s3 + $0x20] sm:$0xf]
  %v316 = vld [vmem:[%s3 + $0x24] sm:$0xf]
  %v317 = vld [vmem:[%s3 + $0x28] sm:$0xf]
  %v318 = vld [vmem:[%s3 + $0x2c] sm:$0xf]
  %v319 = vld [vmem:[%s3 + $0x30] sm:$0xf]
  %v320 = vld [vmem:[%s3 + $0x34] sm:$0xf]
  %v321 = vld [vmem:[%s3 + $0x38] sm:$0xf]
  %v322 = vld [vmem:[%s3 + $0x3c] sm:$0xf]
  %v323 = vunpack.c.l.bf16 %v307
  %v324 = vunpack.c.l.bf16 %v308
  %v325 = vunpack.c.l.bf16 %v309
  %v326 = vunpack.c.l.bf16 %v310
  %v327 = vunpack.c.l.bf16 %v311
  %v328 = vunpack.c.l.bf16 %v312
  %v329 = vunpack.c.l.bf16 %v313
  %v330 = vunpack.c.l.bf16 %v314
  %v331 = vunpack.c.l.bf16 %v315
  %v332 = vunpack.c.l.bf16 %v316
  %v333 = vunpack.c.l.bf16 %v317
  %v334 = vunpack.c.l.bf16 %v318
  %v335 = vunpack.c.l.bf16 %v319
  %v336 = vunpack.c.l.bf16 %v320
  %v337 = vunpack.c.l.bf16 %v321
  %v338 = vunpack.c.l.bf16 %v322
  %v339 = vadd.f32 %v245, %v323
  %v340 = vadd.f32 %v248, %v324
  %v341 = vadd.f32 %v253, %v325
  %v342 = vadd.f32 %v256, %v326
  %v343 = vadd.f32 %v261, %v327
  %v344 = vadd.f32 %v264, %v328
  %v345 = vadd.f32 %v269, %v329
  %v346 = vadd.f32 %v272, %v330
  %v347 = vadd.f32 %v277, %v331
  %v348 = vadd.f32 %v280, %v332
  %v349 = vadd.f32 %v285, %v333
  %v350 = vadd.f32 %v288, %v334
  %v351 = vadd.f32 %v293, %v335
  %v352 = vadd.f32 %v296, %v336
  %v353 = vadd.f32 %v301, %v337
  %v354 = vadd.f32 %v304, %v338
  %v355 = vmax.f32 %v339, 0.0
  %v356 = vmax.f32 %v340, 0.0
  %v357 = vmax.f32 %v341, 0.0
  %v358 = vmax.f32 %v342, 0.0
  %v359 = vmax.f32 %v343, 0.0
  %v360 = vmax.f32 %v344, 0.0
  %v361 = vmax.f32 %v345, 0.0
  %v362 = vmax.f32 %v346, 0.0
  %v363 = vmax.f32 %v347, 0.0
  %v364 = vmax.f32 %v348, 0.0
  %v365 = vmax.f32 %v349, 0.0
  %v366 = vmax.f32 %v350, 0.0
  %v367 = vmax.f32 %v351, 0.0
  %v368 = vmax.f32 %v352, 0.0
  %v369 = vmax.f32 %v353, 0.0
  %v370 = vmax.f32 %v354, 0.0
  %v371 = vpack.c.bf16 %v356, %v355
  %v372 = vpack.c.bf16 %v358, %v357
  %v373 = vpack.c.bf16 %v360, %v359
  %v374 = vpack.c.bf16 %v362, %v361
  %v375 = vpack.c.bf16 %v364, %v363
  %v376 = vpack.c.bf16 %v366, %v365
  %v377 = vpack.c.bf16 %v368, %v367
  %v378 = vpack.c.bf16 %v370, %v369
  %v387 = vunpack.c.l.b16 %v371
  %v388 = vunpack.c.h.b16 %v371
  %v389 = vunpack.c.l.b16 %v372
  %v390 = vunpack.c.h.b16 %v372
  %v391 = vunpack.c.l.b16 %v373
  %v392 = vunpack.c.h.b16 %v373
  %v393 = vunpack.c.l.b16 %v374
  %v394 = vunpack.c.h.b16 %v374
  %v395 = vunpack.c.l.b16 %v375
  %v396 = vunpack.c.h.b16 %v375
  %v397 = vunpack.c.l.b16 %v376
  %v398 = vunpack.c.h.b16 %v376
  %v399 = vunpack.c.l.b16 %v377
  %v400 = vunpack.c.h.b16 %v377
  %v401 = vunpack.c.l.b16 %v378
  %v402 = vunpack.c.h.b16 %v378
  %v403 = vpack.c.b16 %v387, %v387
  %v404 = vpack.c.b16 %v388, %v388
  %v405 = vpack.c.b16 %v389, %v389
  %v406 = vpack.c.b16 %v390, %v390
  %v407 = vpack.c.b16 %v391, %v391
  %v408 = vpack.c.b16 %v392, %v392
  %v409 = vpack.c.b16 %v393, %v393
  %v410 = vpack.c.b16 %v394, %v394
  %v411 = vpack.c.b16 %v395, %v395
  %v412 = vpack.c.b16 %v396, %v396
  %v413 = vpack.c.b16 %v397, %v397
  %v414 = vpack.c.b16 %v398, %v398
  %v415 = vpack.c.b16 %v399, %v399
  %v416 = vpack.c.b16 %v400, %v400
  %v417 = vpack.c.b16 %v401, %v401
  %v418 = vpack.c.b16 %v402, %v402
  %435 = vst [vmem:[%s4] sm:$0xf] %v403
  %436 = vst [vmem:[%s4 + $0x4] sm:$0xf] %v404
  %437 = vst [vmem:[%s4 + $0x8] sm:$0xf] %v405
  %438 = vst [vmem:[%s4 + $0xc] sm:$0xf] %v406
  %439 = vst [vmem:[%s4 + $0x10] sm:$0xf] %v407
  %440 = vst [vmem:[%s4 + $0x14] sm:$0xf] %v408
  %441 = vst [vmem:[%s4 + $0x18] sm:$0xf] %v409
  %442 = vst [vmem:[%s4 + $0x1c] sm:$0xf] %v410
  %443 = vst [vmem:[%s4 + $0x20] sm:$0xf] %v411
  %444 = vst [vmem:[%s4 + $0x24] sm:$0xf] %v412
  %445 = vst [vmem:[%s4 + $0x28] sm:$0xf] %v413
  %446 = vst [vmem:[%s4 + $0x2c] sm:$0xf] %v414
  %447 = vst [vmem:[%s4 + $0x30] sm:$0xf] %v415
  %448 = vst [vmem:[%s4 + $0x34] sm:$0xf] %v416
  %449 = vst [vmem:[%s4 + $0x38] sm:$0xf] %v417
  %450 = vst [vmem:[%s4 + $0x3c] sm:$0xf] %v418
  // Predicated region
  $region18: #{_lambda_.22} parent=0 // pred_check
    _
  $region19: #{_lambda_.22} parent=0 // pred_check_branch
    %452 = sbr.rel (0) target = $region21
  $region20: #{_lambda_.22} parent=0 // pred_region
    _
  $region21: #{_lambda_.22} parent=0 // pred_fallthru
    _
  // Predicated region
  $region22: #{_lambda_.22} parent=0 // pred_check
    _
  $region23: #{_lambda_.22} parent=0 // pred_check_branch
    %454 = sbr.rel (0) target = $region25
  $region24: #{_lambda_.22} parent=0 // pred_region
    _
  $region25: #{_lambda_.22} parent=0 // pred_fallthru
    _

// kernel: _lambda_.25
$region0: #{_lambda_.25}
  #allocation0 [shape = 'u32[]', space=smem, size = 0x4, offset = 0x4, fixed_abs, tag = 'smem constant byte address 0x4 - core index']
  #allocation1 [shape = 'u32[144,128]{1,0:T(1,128)}', space=vmem, size = 0x12000, scoped, tag = 'internal scratch']
  %s0 = inlined_call_operand.vmem [shape: bf16[32,144], index: 0, kind: input, shape index: {}]
  %s1 = inlined_call_operand.vmem [shape: bf16[144,128], index: 1, kind: input, shape index: {}]
  %s2 = inlined_call_operand.vmem [shape: f32[1,128], index: 2, kind: input, shape index: {}]
  %s3 = inlined_call_operand.vmem [shape: bf16[32,128], index: 3, kind: output, shape index: {}]
  %s4 = sld [smem:[#allocation0]]
  $region22: #{_lambda_.25} parent=0
    _
  %s6 = ssub.s32 1, %s4
  %s7 = scalar_select 0, %s6, %s4
  // Predicated region
  $region2: #{_lambda_.25} parent=0 // pred_check
    _
  $region3: #{_lambda_.25} parent=0 // pred_check_branch
    %9 = sbr.rel (0) target = $region5
  $region4: #{_lambda_.25} parent=0 // pred_region
    _
  $region5: #{_lambda_.25} parent=0 // pred_fallthru
    _
  // Predicated region
  $region6: #{_lambda_.25} parent=0 // pred_check
    _
  $region7: #{_lambda_.25} parent=0 // pred_check_branch
    %11 = sbr.rel (0) target = $region9
  $region8: #{_lambda_.25} parent=0 // pred_region
    _
  $region9: #{_lambda_.25} parent=0 // pred_fallthru
    _
  // Predicated region
  $region10: #{_lambda_.25} parent=0 // pred_check
    _
  $region11: #{_lambda_.25} parent=0 // pred_check_branch
    %13 = sbr.rel (0) target = $region13
  $region12: #{_lambda_.25} parent=0 // pred_region
    _
  $region13: #{_lambda_.25} parent=0 // pred_fallthru
    _
  %v15 = vld [vmem:[%s0] sm:$0xff]
  %v16 = vld [vmem:[%s0 + $0x8] sm:$0xff]
  %v17 = vld [vmem:[%s0 + $0x10] sm:$0xff]
  %v18 = vld [vmem:[%s0 + $0x18] sm:$0xff]
  %v19 = vld [vmem:[%s1] sm:$0xf]
  %v20 = vld [vmem:[%s1 + $0x4] sm:$0xf]
  %v21 = vld [vmem:[%s1 + $0x8] sm:$0xf]
  %v22 = vld [vmem:[%s1 + $0xc] sm:$0xf]
  %v23 = vld [vmem:[%s1 + $0x10] sm:$0xf]
  %v24 = vld [vmem:[%s1 + $0x14] sm:$0xf]
  %v25 = vld [vmem:[%s1 + $0x18] sm:$0xf]
  %v26 = vld [vmem:[%s1 + $0x1c] sm:$0xf]
  %v27 = vld [vmem:[%s1 + $0x20] sm:$0xf]
  %v28 = vld [vmem:[%s1 + $0x24] sm:$0xf]
  %v29 = vld [vmem:[%s1 + $0x28] sm:$0xf]
  %v30 = vld [vmem:[%s1 + $0x2c] sm:$0xf]
  %v31 = vld [vmem:[%s1 + $0x30] sm:$0xf]
  %v32 = vld [vmem:[%s1 + $0x34] sm:$0xf]
  %v33 = vld [vmem:[%s1 + $0x38] sm:$0xf]
  %v34 = vld [vmem:[%s1 + $0x3c] sm:$0xf]
  %v35 = vld [vmem:[%s1 + $0x40] sm:$0xf]
  %v36 = vld [vmem:[%s1 + $0x44] sm:$0xf]
  %v37 = vld [vmem:[%s2] sm:$0x1]
  %v39 = vlaneseq
  %v40 = vshrl.u32 %v39, 7
  %v41 = vsub.s32 0, %v40
  %v42 = vrot.slane %v37, %v41
  %v48 = vunpack.c.l.b16 %v15
  %v49 = vunpack.c.h.b16 %v15
  %v50 = vunpack.c.l.b16 %v16
  %v51 = vunpack.c.h.b16 %v16
  %v52 = vunpack.c.l.b16 %v17
  %v53 = vunpack.c.h.b16 %v17
  %v54 = vunpack.c.l.b16 %v18
  %v55 = vunpack.c.h.b16 %v18
  %v56 = vpack.c.b16 %v50, %v48
  %v57 = vpack.c.b16 %v51, %v49
  %v58 = vpack.c.b16 %v54, %v52
  %v59 = vpack.c.b16 %v55, %v53
  %v80 = vunpack.c.l.b16 %v19
  %v81 = vunpack.c.l.b16 %v20
  %v82 = vunpack.c.l.b16 %v21
  %v83 = vunpack.c.l.b16 %v22
  %v84 = vunpack.c.l.b16 %v23
  %v85 = vunpack.c.l.b16 %v24
  %v86 = vunpack.c.l.b16 %v25
  %v87 = vunpack.c.l.b16 %v26
  %v88 = vunpack.c.l.b16 %v27
  %v89 = vunpack.c.l.b16 %v28
  %v90 = vunpack.c.l.b16 %v29
  %v91 = vunpack.c.l.b16 %v30
  %v92 = vunpack.c.l.b16 %v31
  %v93 = vunpack.c.l.b16 %v32
  %v94 = vunpack.c.l.b16 %v33
  %v95 = vunpack.c.l.b16 %v34
  %v96 = vunpack.c.l.b16 %v35
  %v97 = vunpack.c.l.b16 %v36
  %v98 = vpack.c.b16 %v81, %v80
  %v99 = vpack.c.b16 %v83, %v82
  %v100 = vpack.c.b16 %v85, %v84
  %v101 = vpack.c.b16 %v87, %v86
  %v102 = vpack.c.b16 %v89, %v88
  %v103 = vpack.c.b16 %v91, %v90
  %v104 = vpack.c.b16 %v93, %v92
  %v105 = vpack.c.b16 %v95, %v94
  %v106 = vpack.c.b16 %v97, %v96
  %vm116 = vcmask 130048
  %v118 = vsel %vm116, %v57, 0
  %v121 = vsel %vm116, %v59, 0
  %123 = vmatprep.subr.bf16.mxu0 0
  %124 = vmatpush1.bf16.msra.mxu0 %v98
  %125 = vmatprep.subr.bf16.mxu0 0
  %126 = vmatpush1.bf16.msra.mxu0 %v99
  %127 = vmatprep.subr.bf16.mxu0 0
  %128 = vmatpush1.bf16.msra.mxu0 %v100
  %129 = vmatprep.subr.bf16.mxu0 0
  %130 = vmatpush1.bf16.msra.mxu0 %v101
  %131 = vmatprep.subr.bf16.mxu0 0
  %132 = vmatpush1.bf16.msra.mxu0 %v102
  %133 = vmatprep.subr.bf16.mxu0 0
  %134 = vmatpush1.bf16.msra.mxu0 %v103
  %135 = vmatprep.subr.bf16.mxu0 0
  %136 = vmatpush1.bf16.msra.mxu0 %v104
  %137 = vmatprep.subr.bf16.mxu0 0
  %138 = vmatpush1.bf16.msra.mxu0 %v105
  %139 = vmatprep.subr.bf16.mxu0 0
  %140 = vmatpush1.bf16.msra.mxu0 %v106
  %141 = vmatprep.subr.bf16.mxu0 0
  %142 = vmatpush1.bf16.msra.mxu0 0
  %143 = vmatprep.subr.bf16.mxu0 0
  %144 = vmatpush1.bf16.msra.mxu0 0
  %145 = vmatprep.subr.bf16.mxu0 0
  %146 = vmatpush1.bf16.msra.mxu0 0
  %147 = vmatprep.subr.bf16.mxu0 0
  %148 = vmatpush1.bf16.msra.mxu0 0
  %149 = vmatprep.subr.bf16.mxu0 0
  %150 = vmatpush1.bf16.msra.mxu0 0
  %151 = vmatprep.subr.bf16.mxu0 0
  %152 = vmatpush1.bf16.msra.mxu0 0
  %153 = vmatprep.subr.bf16.mxu0 0
  %154 = vmatpush1.bf16.msra.mxu0 0
  %155 = vmatprep.mubr.bf16.mxu0 %v118
  %156 = vmatmul.mubr.bf16.gmra.mrb[0].mxu0 %v56
  %v157 = vpop.f32.mrb[0].mxu0
  %v158 = vadd.f32 %v42, %v157
  %v159 = vpop.f32.mrb[0].mxu0
  %v160 = vpop.f32.mrb[0].mxu0
  %v161 = vadd.f32 %v42, %v160
  %v162 = vpop.f32.mrb[0].mxu0
  %163 = vmatprep.mubr.bf16.mxu0 %v121
  %164 = vmatmul.mubr.bf16.gmra.mrb[0].mxu0 %v58
  %v165 = vpop.f32.mrb[0].mxu0
  %v166 = vadd.f32 %v42, %v165
  %v167 = vpop.f32.mrb[0].mxu0
  %v168 = vpop.f32.mrb[0].mxu0
  %v169 = vadd.f32 %v42, %v168
  %v170 = vpop.f32.mrb[0].mxu0
  %171 = vdwg.mxu0
  %v172 = vmax.f32 %v158, 0.0
  %v173 = vmax.f32 %v161, 0.0
  %v174 = vmax.f32 %v166, 0.0
  %v175 = vmax.f32 %v169, 0.0
  %v176 = vpack.c.bf16 %v173, %v172
  %v177 = vpack.c.bf16 %v175, %v174
  %v180 = vunpack.c.l.b16 %v176
  %v181 = vunpack.c.h.b16 %v176
  %v182 = vunpack.c.l.b16 %v177
  %v183 = vunpack.c.h.b16 %v177
  %v184 = vpack.c.b16 %v180, %v180
  %v185 = vpack.c.b16 %v181, %v181
  %v186 = vpack.c.b16 %v182, %v182
  %v187 = vpack.c.b16 %v183, %v183
  %192 = vst [vmem:[%s3] sm:$0xf] %v184
  %193 = vst [vmem:[%s3 + $0x4] sm:$0xf] %v185
  %194 = vst [vmem:[%s3 + $0x8] sm:$0xf] %v186
  %195 = vst [vmem:[%s3 + $0xc] sm:$0xf] %v187
  // Predicated region
  $region14: #{_lambda_.25} parent=0 // pred_check
    _
  $region15: #{_lambda_.25} parent=0 // pred_check_branch
    %197 = sbr.rel (0) target = $region17
  $region16: #{_lambda_.25} parent=0 // pred_region
    _
  $region17: #{_lambda_.25} parent=0 // pred_fallthru
    _
  // Predicated region
  $region18: #{_lambda_.25} parent=0 // pred_check
    _
  $region19: #{_lambda_.25} parent=0 // pred_check_branch
    %199 = sbr.rel (0) target = $region21
  $region20: #{_lambda_.25} parent=0 // pred_region
    _
  $region21: #{_lambda_.25} parent=0 // pred_fallthru
    _

// kernel: _lambda_.26
$region0: #{_lambda_.26}
  #allocation0 [shape = 'u32[]', space=smem, size = 0x4, offset = 0x4, fixed_abs, tag = 'smem constant byte address 0x4 - core index']
  #allocation1 [shape = 'u32[144,128]{1,0:T(1,128)}', space=vmem, size = 0x12000, scoped, tag = 'internal scratch']
  %s0 = inlined_call_operand.vmem [shape: bf16[32,16], index: 0, kind: input, shape index: {}]
  %s1 = inlined_call_operand.vmem [shape: bf16[16,128], index: 1, kind: input, shape index: {}]
  %s2 = inlined_call_operand.vmem [shape: f32[1,128], index: 2, kind: input, shape index: {}]
  %s3 = inlined_call_operand.vmem [shape: bf16[32,128], index: 3, kind: output, shape index: {}]
  %s4 = sld [smem:[#allocation0]]
  $region22: #{_lambda_.26} parent=0
    _
  %s6 = ssub.s32 1, %s4
  %s7 = scalar_select 0, %s6, %s4
  // Predicated region
  $region2: #{_lambda_.26} parent=0 // pred_check
    _
  $region3: #{_lambda_.26} parent=0 // pred_check_branch
    %9 = sbr.rel (0) target = $region5
  $region4: #{_lambda_.26} parent=0 // pred_region
    _
  $region5: #{_lambda_.26} parent=0 // pred_fallthru
    _
  // Predicated region
  $region6: #{_lambda_.26} parent=0 // pred_check
    _
  $region7: #{_lambda_.26} parent=0 // pred_check_branch
    %11 = sbr.rel (0) target = $region9
  $region8: #{_lambda_.26} parent=0 // pred_region
    _
  $region9: #{_lambda_.26} parent=0 // pred_fallthru
    _
  // Predicated region
  $region10: #{_lambda_.26} parent=0 // pred_check
    _
  $region11: #{_lambda_.26} parent=0 // pred_check_branch
    %13 = sbr.rel (0) target = $region13
  $region12: #{_lambda_.26} parent=0 // pred_region
    _
  $region13: #{_lambda_.26} parent=0 // pred_fallthru
    _
  %v15 = vld [vmem:[%s0] sm:$0xf]
  %v16 = vld [vmem:[%s0 + $0x4] sm:$0xf]
  %v17 = vld [vmem:[%s0 + $0x8] sm:$0xf]
  %v18 = vld [vmem:[%s0 + $0xc] sm:$0xf]
  %v19 = vld [vmem:[%s1] sm:$0xf]
  %v20 = vld [vmem:[%s1 + $0x4] sm:$0xf]
  %v21 = vld [vmem:[%s2] sm:$0x1]
  %v23 = vlaneseq
  %v24 = vshrl.u32 %v23, 7
  %v25 = vsub.s32 0, %v24
  %v26 = vrot.slane %v21, %v25
  %v32 = vunpack.c.l.b16 %v15
  %v33 = vunpack.c.l.b16 %v16
  %v34 = vunpack.c.l.b16 %v17
  %v35 = vunpack.c.l.b16 %v18
  %v36 = vpack.c.b16 %v33, %v32
  %v37 = vpack.c.b16 %v35, %v34
  %v40 = vunpack.c.l.b16 %v19
  %v41 = vunpack.c.l.b16 %v20
  %v42 = vpack.c.b16 %v41, %v40
  %vm44 = vcmask 130048
  %v46 = vsel %vm44, %v36, 0
  %v49 = vsel %vm44, %v37, 0
  %51 = vmatprep.subr.bf16.mxu0 0
  %52 = vmatpush1.bf16.msra.mxu0 %v42
  %53 = vmatprep.subr.bf16.mxu0 0
  %54 = vmatpush1.bf16.msra.mxu0 0
  %55 = vmatprep.subr.bf16.mxu0 0
  %56 = vmatpush1.bf16.msra.mxu0 0
  %57 = vmatprep.subr.bf16.mxu0 0
  %58 = vmatpush1.bf16.msra.mxu0 0
  %59 = vmatprep.subr.bf16.mxu0 0
  %60 = vmatpush1.bf16.msra.mxu0 0
  %61 = vmatprep.subr.bf16.mxu0 0
  %62 = vmatpush1.bf16.msra.mxu0 0
  %63 = vmatprep.subr.bf16.mxu0 0
  %64 = vmatpush1.bf16.msra.mxu0 0
  %65 = vmatprep.subr.bf16.mxu0 0
  %66 = vmatpush1.bf16.msra.mxu0 0
  %67 = vmatprep.subr.bf16.mxu0 0
  %68 = vmatpush1.bf16.msra.mxu0 0
  %69 = vmatprep.subr.bf16.mxu0 0
  %70 = vmatpush1.bf16.msra.mxu0 0
  %71 = vmatprep.subr.bf16.mxu0 0
  %72 = vmatpush1.bf16.msra.mxu0 0
  %73 = vmatprep.subr.bf16.mxu0 0
  %74 = vmatpush1.bf16.msra.mxu0 0
  %75 = vmatprep.subr.bf16.mxu0 0
  %76 = vmatpush1.bf16.msra.mxu0 0
  %77 = vmatprep.subr.bf16.mxu0 0
  %78 = vmatpush1.bf16.msra.mxu0 0
  %79 = vmatprep.subr.bf16.mxu0 0
  %80 = vmatpush1.bf16.msra.mxu0 0
  %81 = vmatprep.subr.bf16.mxu0 0
  %82 = vmatpush1.bf16.msra.mxu0 0
  %83 = vmatprep.mubr.bf16.mxu0 0
  %84 = vmatmul.mubr.bf16.gmra.mrb[0].mxu0 %v46
  %v85 = vpop.f32.mrb[0].mxu0
  %v86 = vadd.f32 %v26, %v85
  %v87 = vpop.f32.mrb[0].mxu0
  %v88 = vpop.f32.mrb[0].mxu0
  %v89 = vadd.f32 %v26, %v88
  %v90 = vpop.f32.mrb[0].mxu0
  %91 = vmatprep.mubr.bf16.mxu0 0
  %92 = vmatmul.mubr.bf16.gmra.mrb[0].mxu0 %v49
  %v93 = vpop.f32.mrb[0].mxu0
  %v94 = vadd.f32 %v26, %v93
  %v95 = vpop.f32.mrb[0].mxu0
  %v96 = vpop.f32.mrb[0].mxu0
  %v97 = vadd.f32 %v26, %v96
  %v98 = vpop.f32.mrb[0].mxu0
  %99 = vdwg.mxu0
  %v100 = vpack.c.bf16 %v89, %v86
  %v101 = vpack.c.bf16 %v97, %v94
  %v104 = vunpack.c.l.b16 %v100
  %v105 = vunpack.c.h.b16 %v100
  %v106 = vunpack.c.l.b16 %v101
  %v107 = vunpack.c.h.b16 %v101
  %v108 = vpack.c.b16 %v104, %v104
  %v109 = vpack.c.b16 %v105, %v105
  %v110 = vpack.c.b16 %v106, %v106
  %v111 = vpack.c.b16 %v107, %v107
  %116 = vst [vmem:[%s3] sm:$0xf] %v108
  %117 = vst [vmem:[%s3 + $0x4] sm:$0xf] %v109
  %118 = vst [vmem:[%s3 + $0x8] sm:$0xf] %v110
  %119 = vst [vmem:[%s3 + $0xc] sm:$0xf] %v111
  // Predicated region
  $region14: #{_lambda_.26} parent=0 // pred_check
    _
  $region15: #{_lambda_.26} parent=0 // pred_check_branch
    %121 = sbr.rel (0) target = $region17
  $region16: #{_lambda_.26} parent=0 // pred_region
    _
  $region17: #{_lambda_.26} parent=0 // pred_fallthru
    _
  // Predicated region
  $region18: #{_lambda_.26} parent=0 // pred_check
    _
  $region19: #{_lambda_.26} parent=0 // pred_check_branch
    %123 = sbr.rel (0) target = $region21
  $region20: #{_lambda_.26} parent=0 // pred_region
    _
  $region21: #{_lambda_.26} parent=0 // pred_fallthru
    _

// kernel: _lambda_.27
$region0: #{_lambda_.27}
  #allocation0 [shape = 'u32[]', space=smem, size = 0x4, offset = 0x4, fixed_abs, tag = 'smem constant byte address 0x4 - core index']
  #allocation1 [shape = 'u32[144,128]{1,0:T(1,128)}', space=vmem, size = 0x12000, scoped, tag = 'internal scratch']
  %s0 = inlined_call_operand.vmem [shape: bf16[32,288], index: 0, kind: input, shape index: {}]
  %s1 = inlined_call_operand.vmem [shape: bf16[288,128], index: 1, kind: input, shape index: {}]
  %s2 = inlined_call_operand.vmem [shape: f32[1,128], index: 2, kind: input, shape index: {}]
  %s3 = inlined_call_operand.vmem [shape: bf16[32,128], index: 3, kind: input, shape index: {}]
  %s4 = inlined_call_operand.vmem [shape: bf16[32,128], index: 4, kind: output, shape index: {}]
  %s5 = sld [smem:[#allocation0]]
  $region26: #{_lambda_.27} parent=0
    _
  %s7 = ssub.s32 1, %s5
  %s8 = scalar_select 0, %s7, %s5
  // Predicated region
  $region2: #{_lambda_.27} parent=0 // pred_check
    _
  $region3: #{_lambda_.27} parent=0 // pred_check_branch
    %10 = sbr.rel (0) target = $region5
  $region4: #{_lambda_.27} parent=0 // pred_region
    _
  $region5: #{_lambda_.27} parent=0 // pred_fallthru
    _
  // Predicated region
  $region6: #{_lambda_.27} parent=0 // pred_check
    _
  $region7: #{_lambda_.27} parent=0 // pred_check_branch
    %12 = sbr.rel (0) target = $region9
  $region8: #{_lambda_.27} parent=0 // pred_region
    _
  $region9: #{_lambda_.27} parent=0 // pred_fallthru
    _
  // Predicated region
  $region10: #{_lambda_.27} parent=0 // pred_check
    _
  $region11: #{_lambda_.27} parent=0 // pred_check_branch
    %14 = sbr.rel (0) target = $region13
  $region12: #{_lambda_.27} parent=0 // pred_region
    _
  $region13: #{_lambda_.27} parent=0 // pred_fallthru
    _
  // Predicated region
  $region14: #{_lambda_.27} parent=0 // pred_check
    _
  $region15: #{_lambda_.27} parent=0 // pred_check_branch
    %16 = sbr.rel (0) target = $region17
  $region16: #{_lambda_.27} parent=0 // pred_region
    _
  $region17: #{_lambda_.27} parent=0 // pred_fallthru
    _
  %v18 = vld [vmem:[%s0] sm:$0xff]
  %v19 = vld [vmem:[%s0 + $0x8] sm:$0xf]
  %v20 = vld [vmem:[%s0 + $0xc] sm:$0xff]
  %v21 = vld [vmem:[%s0 + $0x14] sm:$0xf]
  %v22 = vld [vmem:[%s0 + $0x18] sm:$0xff]
  %v23 = vld [vmem:[%s0 + $0x20] sm:$0xf]
  %v24 = vld [vmem:[%s0 + $0x24] sm:$0xff]
  %v25 = vld [vmem:[%s0 + $0x2c] sm:$0xf]
  %v26 = vld [vmem:[%s1] sm:$0xf]
  %v27 = vld [vmem:[%s1 + $0x4] sm:$0xf]
  %v28 = vld [vmem:[%s1 + $0x8] sm:$0xf]
  %v29 = vld [vmem:[%s1 + $0xc] sm:$0xf]
  %v30 = vld [vmem:[%s1 + $0x10] sm:$0xf]
  %v31 = vld [vmem:[%s1 + $0x14] sm:$0xf]
  %v32 = vld [vmem:[%s1 + $0x18] sm:$0xf]
  %v33 = vld [vmem:[%s1 + $0x1c] sm:$0xf]
  %v34 = vld [vmem:[%s1 + $0x20] sm:$0xf]
  %v35 = vld [vmem:[%s1 + $0x24] sm:$0xf]
  %v36 = vld [vmem:[%s1 + $0x28] sm:$0xf]
  %v37 = vld [vmem:[%s1 + $0x2c] sm:$0xf]
  %v38 = vld [vmem:[%s1 + $0x30] sm:$0xf]
  %v39 = vld [vmem:[%s1 + $0x34] sm:$0xf]
  %v40 = vld [vmem:[%s1 + $0x38] sm:$0xf]
  %v41 = vld [vmem:[%s1 + $0x3c] sm:$0xf]
  %v42 = vld [vmem:[%s1 + $0x40] sm:$0xf]
  %v43 = vld [vmem:[%s1 + $0x44] sm:$0xf]
  %v44 = vld [vmem:[%s1 + $0x48] sm:$0xf]
  %v45 = vld [vmem:[%s1 + $0x4c] sm:$0xf]
  %v46 = vld [vmem:[%s1 + $0x50] sm:$0xf]
  %v47 = vld [vmem:[%s1 + $0x54] sm:$0xf]
  %v48 = vld [vmem:[%s1 + $0x58] sm:$0xf]
  %v49 = vld [vmem:[%s1 + $0x5c] sm:$0xf]
  %v50 = vld [vmem:[%s1 + $0x60] sm:$0xf]
  %v51 = vld [vmem:[%s1 + $0x64] sm:$0xf]
  %v52 = vld [vmem:[%s1 + $0x68] sm:$0xf]
  %v53 = vld [vmem:[%s1 + $0x6c] sm:$0xf]
  %v54 = vld [vmem:[%s1 + $0x70] sm:$0xf]
  %v55 = vld [vmem:[%s1 + $0x74] sm:$0xf]
  %v56 = vld [vmem:[%s1 + $0x78] sm:$0xf]
  %v57 = vld [vmem:[%s1 + $0x7c] sm:$0xf]
  %v58 = vld [vmem:[%s1 + $0x80] sm:$0xf]
  %v59 = vld [vmem:[%s1 + $0x84] sm:$0xf]
  %v60 = vld [vmem:[%s1 + $0x88] sm:$0xf]
  %v61 = vld [vmem:[%s1 + $0x8c] sm:$0xf]
  %v62 = vld [vmem:[%s2] sm:$0x1]
  %v64 = vlaneseq
  %v65 = vshrl.u32 %v64, 7
  %v66 = vsub.s32 0, %v65
  %v67 = vrot.slane %v62, %v66
  %v77 = vunpack.c.l.b16 %v18
  %v78 = vunpack.c.h.b16 %v18
  %v79 = vunpack.c.l.b16 %v19
  %v80 = vunpack.c.l.b16 %v20
  %v81 = vunpack.c.h.b16 %v20
  %v82 = vunpack.c.l.b16 %v21
  %v83 = vunpack.c.l.b16 %v22
  %v84 = vunpack.c.h.b16 %v22
  %v85 = vunpack.c.l.b16 %v23
  %v86 = vunpack.c.l.b16 %v24
  %v87 = vunpack.c.h.b16 %v24
  %v88 = vunpack.c.l.b16 %v25
  %v89 = vpack.c.b16 %v80, %v77
  %v90 = vpack.c.b16 %v81, %v78
  %v91 = vpack.c.b16 %v82, %v79
  %v92 = vpack.c.b16 %v86, %v83
  %v93 = vpack.c.b16 %v87, %v84
  %v94 = vpack.c.b16 %v88, %v85
  %v135 = vunpack.c.l.b16 %v26
  %v136 = vunpack.c.l.b16 %v27
  %v137 = vunpack.c.l.b16 %v28
  %v138 = vunpack.c.l.b16 %v29
  %v139 = vunpack.c.l.b16 %v30
  %v140 = vunpack.c.l.b16 %v31
  %v141 = vunpack.c.l.b16 %v32
  %v142 = vunpack.c.l.b16 %v33
  %v143 = vunpack.c.l.b16 %v34
  %v144 = vunpack.c.l.b16 %v35
  %v145 = vunpack.c.l.b16 %v36
  %v146 = vunpack.c.l.b16 %v37
  %v147 = vunpack.c.l.b16 %v38
  %v148 = vunpack.c.l.b16 %v39
  %v149 = vunpack.c.l.b16 %v40
  %v150 = vunpack.c.l.b16 %v41
  %v151 = vunpack.c.l.b16 %v42
  %v152 = vunpack.c.l.b16 %v43
  %v153 = vunpack.c.l.b16 %v44
  %v154 = vunpack.c.l.b16 %v45
  %v155 = vunpack.c.l.b16 %v46
  %v156 = vunpack.c.l.b16 %v47
  %v157 = vunpack.c.l.b16 %v48
  %v158 = vunpack.c.l.b16 %v49
  %v159 = vunpack.c.l.b16 %v50
  %v160 = vunpack.c.l.b16 %v51
  %v161 = vunpack.c.l.b16 %v52
  %v162 = vunpack.c.l.b16 %v53
  %v163 = vunpack.c.l.b16 %v54
  %v164 = vunpack.c.l.b16 %v55
  %v165 = vunpack.c.l.b16 %v56
  %v166 = vunpack.c.l.b16 %v57
  %v167 = vunpack.c.l.b16 %v58
  %v168 = vunpack.c.l.b16 %v59
  %v169 = vunpack.c.l.b16 %v60
  %v170 = vunpack.c.l.b16 %v61
  %v171 = vpack.c.b16 %v136, %v135
  %v172 = vpack.c.b16 %v138, %v137
  %v173 = vpack.c.b16 %v140, %v139
  %v174 = vpack.c.b16 %v142, %v141
  %v175 = vpack.c.b16 %v144, %v143
  %v176 = vpack.c.b16 %v146, %v145
  %v177 = vpack.c.b16 %v148, %v147
  %v178 = vpack.c.b16 %v150, %v149
  %v179 = vpack.c.b16 %v152, %v151
  %v180 = vpack.c.b16 %v154, %v153
  %v181 = vpack.c.b16 %v156, %v155
  %v182 = vpack.c.b16 %v158, %v157
  %v183 = vpack.c.b16 %v160, %v159
  %v184 = vpack.c.b16 %v162, %v161
  %v185 = vpack.c.b16 %v164, %v163
  %v186 = vpack.c.b16 %v166, %v165
  %v187 = vpack.c.b16 %v168, %v167
  %v188 = vpack.c.b16 %v170, %v169
  %vm207 = vcmask 261120
  %v209 = vsel %vm207, %v91, 0
  %v212 = vsel %vm207, %v94, 0
  %214 = vmatprep.subr.bf16.mxu0 0
  %215 = vmatpush1.bf16.msra.mxu0 %v171
  %216 = vmatprep.subr.bf16.mxu0 0
  %217 = vmatpush1.bf16.msra.mxu0 %v172
  %218 = vmatprep.subr.bf16.mxu0 0
  %219 = vmatpush1.bf16.msra.mxu0 %v173
  %220 = vmatprep.subr.bf16.mxu0 0
  %221 = vmatpush1.bf16.msra.mxu0 %v174
  %222 = vmatprep.subr.bf16.mxu0 0
  %223 = vmatpush1.bf16.msra.mxu0 %v175
  %224 = vmatprep.subr.bf16.mxu0 0
  %225 = vmatpush1.bf16.msra.mxu0 %v176
  %226 = vmatprep.subr.bf16.mxu0 0
  %227 = vmatpush1.bf16.msra.mxu0 %v177
  %228 = vmatprep.subr.bf16.mxu0 0
  %229 = vmatpush1.bf16.msra.mxu0 %v178
  %230 = vmatprep.subr.bf16.mxu0 0
  %231 = vmatpush1.bf16.msra.mxu0 %v179
  %232 = vmatprep.subr.bf16.mxu0 0
  %233 = vmatpush1.bf16.msra.mxu0 %v180
  %234 = vmatprep.subr.bf16.mxu0 0
  %235 = vmatpush1.bf16.msra.mxu0 %v181
  %236 = vmatprep.subr.bf16.mxu0 0
  %237 = vmatpush1.bf16.msra.mxu0 %v182
  %238 = vmatprep.subr.bf16.mxu0 0
  %239 = vmatpush1.bf16.msra.mxu0 %v183
  %240 = vmatprep.subr.bf16.mxu0 0
  %241 = vmatpush1.bf16.msra.mxu0 %v184
  %242 = vmatprep.subr.bf16.mxu0 0
  %243 = vmatpush1.bf16.msra.mxu0 %v185
  %244 = vmatprep.subr.bf16.mxu0 0
  %245 = vmatpush1.bf16.msra.mxu0 %v186
  %246 = vmatprep.mubr.bf16.mxu0 %v90
  %247 = vmatmul.mubr.bf16.gmra.mrb[0].mxu0 %v89
  %v248 = vpop.f32.mrb[0].mxu0
  %v249 = vadd.f32 %v67, %v248
  %v250 = vpop.f32.mrb[0].mxu0
  %v251 = vpop.f32.mrb[0].mxu0
  %v252 = vadd.f32 %v67, %v251
  %v253 = vpop.f32.mrb[0].mxu0
  %254 = vmatprep.mubr.bf16.mxu0 %v93
  %255 = vmatmul.mubr.bf16.gmra.mrb[0].mxu0 %v92
  %v256 = vpop.f32.mrb[0].mxu0
  %v257 = vadd.f32 %v67, %v256
  %v258 = vpop.f32.mrb[0].mxu0
  %v259 = vpop.f32.mrb[0].mxu0
  %v260 = vadd.f32 %v67, %v259
  %v261 = vpop.f32.mrb[0].mxu0
  %262 = vdwg.mxu0
  %263 = vmatprep.subr.bf16.mxu0 0
  %264 = vmatpush1.bf16.msra.mxu0 %v187
  %265 = vmatprep.subr.bf16.mxu0 0
  %266 = vmatpush1.bf16.msra.mxu0 %v188
  %267 = vmatprep.subr.bf16.mxu0 0
  %268 = vmatpush1.bf16.msra.mxu0 0
  %269 = vmatprep.subr.bf16.mxu0 0
  %270 = vmatpush1.bf16.msra.mxu0 0
  %271 = vmatprep.subr.bf16.mxu0 0
  %272 = vmatpush1.bf16.msra.mxu0 0
  %273 = vmatprep.subr.bf16.mxu0 0
  %274 = vmatpush1.bf16.msra.mxu0 0
  %275 = vmatprep.subr.bf16.mxu0 0
  %276 = vmatpush1.bf16.msra.mxu0 0
  %277 = vmatprep.subr.bf16.mxu0 0
  %278 = vmatpush1.bf16.msra.mxu0 0
  %279 = vmatprep.subr.bf16.mxu0 0
  %280 = vmatpush1.bf16.msra.mxu0 0
  %281 = vmatprep.subr.bf16.mxu0 0
  %282 = vmatpush1.bf16.msra.mxu0 0
  %283 = vmatprep.subr.bf16.mxu0 0
  %284 = vmatpush1.bf16.msra.mxu0 0
  %285 = vmatprep.subr.bf16.mxu0 0
  %286 = vmatpush1.bf16.msra.mxu0 0
  %287 = vmatprep.subr.bf16.mxu0 0
  %288 = vmatpush1.bf16.msra.mxu0 0
  %289 = vmatprep.subr.bf16.mxu0 0
  %290 = vmatpush1.bf16.msra.mxu0 0
  %291 = vmatprep.subr.bf16.mxu0 0
  %292 = vmatpush1.bf16.msra.mxu0 0
  %293 = vmatprep.subr.bf16.mxu0 0
  %294 = vmatpush1.bf16.msra.mxu0 0
  %295 = vmatprep.mubr.bf16.mxu0 0
  %296 = vmatmul.mubr.bf16.gmra.mrb[0].mxu0 %v209
  %v297 = vpop.f32.mrb[0].mxu0
  %v298 = vadd.f32 %v249, %v297
  %v299 = vpop.f32.mrb[0].mxu0
  %v300 = vpop.f32.mrb[0].mxu0
  %v301 = vadd.f32 %v252, %v300
  %v302 = vpop.f32.mrb[0].mxu0
  %303 = vmatprep.mubr.bf16.mxu0 0
  %304 = vmatmul.mubr.bf16.gmra.mrb[0].mxu0 %v212
  %v305 = vpop.f32.mrb[0].mxu0
  %v306 = vadd.f32 %v257, %v305
  %v307 = vpop.f32.mrb[0].mxu0
  %v308 = vpop.f32.mrb[0].mxu0
  %v309 = vadd.f32 %v260, %v308
  %v310 = vpop.f32.mrb[0].mxu0
  %311 = vdwg.mxu0
  %v312 = vld [vmem:[%s3] sm:$0xf]
  %v313 = vld [vmem:[%s3 + $0x4] sm:$0xf]
  %v314 = vld [vmem:[%s3 + $0x8] sm:$0xf]
  %v315 = vld [vmem:[%s3 + $0xc] sm:$0xf]
  %v316 = vunpack.c.l.bf16 %v312
  %v317 = vunpack.c.l.bf16 %v313
  %v318 = vunpack.c.l.bf16 %v314
  %v319 = vunpack.c.l.bf16 %v315
  %v320 = vadd.f32 %v298, %v316
  %v321 = vadd.f32 %v301, %v317
  %v322 = vadd.f32 %v306, %v318
  %v323 = vadd.f32 %v309, %v319
  %v324 = vmax.f32 %v320, 0.0
  %v325 = vmax.f32 %v321, 0.0
  %v326 = vmax.f32 %v322, 0.0
  %v327 = vmax.f32 %v323, 0.0
  %v328 = vpack.c.bf16 %v325, %v324
  %v329 = vpack.c.bf16 %v327, %v326
  %v332 = vunpack.c.l.b16 %v328
  %v333 = vunpack.c.h.b16 %v328
  %v334 = vunpack.c.l.b16 %v329
  %v335 = vunpack.c.h.b16 %v329
  %v336 = vpack.c.b16 %v332, %v332
  %v337 = vpack.c.b16 %v333, %v333
  %v338 = vpack.c.b16 %v334, %v334
  %v339 = vpack.c.b16 %v335, %v335
  %344 = vst [vmem:[%s4] sm:$0xf] %v336
  %345 = vst [vmem:[%s4 + $0x4] sm:$0xf] %v337
  %346 = vst [vmem:[%s4 + $0x8] sm:$0xf] %v338
  %347 = vst [vmem:[%s4 + $0xc] sm:$0xf] %v339
  // Predicated region
  $region18: #{_lambda_.27} parent=0 // pred_check
    _
  $region19: #{_lambda_.27} parent=0 // pred_check_branch
    %349 = sbr.rel (0) target = $region21
  $region20: #{_lambda_.27} parent=0 // pred_region
    _
  $region21: #{_lambda_.27} parent=0 // pred_fallthru
    _
  // Predicated region
  $region22: #{_lambda_.27} parent=0 // pred_check
    _
  $region23: #{_lambda_.27} parent=0 // pred_check_branch
    %351 = sbr.rel (0) target = $region25
  $region24: #{_lambda_.27} parent=0 // pred_region
    _
  $region25: #{_lambda_.27} parent=0 // pred_fallthru
    _

// kernel: _lambda_.28
$region0: #{_lambda_.28}
  #allocation0 [shape = 'u32[]', space=smem, size = 0x4, offset = 0x4, fixed_abs, tag = 'smem constant byte address 0x4 - core index']
  #allocation1 [shape = 'u32[144,128]{1,0:T(1,128)}', space=vmem, size = 0x12000, scoped, tag = 'internal scratch']
  %s0 = inlined_call_operand.vmem [shape: bf16[32,288], index: 0, kind: input, shape index: {}]
  %s1 = inlined_call_operand.vmem [shape: bf16[288,128], index: 1, kind: input, shape index: {}]
  %s2 = inlined_call_operand.vmem [shape: f32[1,128], index: 2, kind: input, shape index: {}]
  %s3 = inlined_call_operand.vmem [shape: bf16[32,128], index: 3, kind: output, shape index: {}]
  %s4 = sld [smem:[#allocation0]]
  $region22: #{_lambda_.28} parent=0
    _
  %s6 = ssub.s32 1, %s4
  %s7 = scalar_select 0, %s6, %s4
  // Predicated region
  $region2: #{_lambda_.28} parent=0 // pred_check
    _
  $region3: #{_lambda_.28} parent=0 // pred_check_branch
    %9 = sbr.rel (0) target = $region5
  $region4: #{_lambda_.28} parent=0 // pred_region
    _
  $region5: #{_lambda_.28} parent=0 // pred_fallthru
    _
  // Predicated region
  $region6: #{_lambda_.28} parent=0 // pred_check
    _
  $region7: #{_lambda_.28} parent=0 // pred_check_branch
    %11 = sbr.rel (0) target = $region9
  $region8: #{_lambda_.28} parent=0 // pred_region
    _
  $region9: #{_lambda_.28} parent=0 // pred_fallthru
    _
  // Predicated region
  $region10: #{_lambda_.28} parent=0 // pred_check
    _
  $region11: #{_lambda_.28} parent=0 // pred_check_branch
    %13 = sbr.rel (0) target = $region13
  $region12: #{_lambda_.28} parent=0 // pred_region
    _
  $region13: #{_lambda_.28} parent=0 // pred_fallthru
    _
  %v15 = vld [vmem:[%s0] sm:$0xff]
  %v16 = vld [vmem:[%s0 + $0x8] sm:$0xf]
  %v17 = vld [vmem:[%s0 + $0xc] sm:$0xff]
  %v18 = vld [vmem:[%s0 + $0x14] sm:$0xf]
  %v19 = vld [vmem:[%s0 + $0x18] sm:$0xff]
  %v20 = vld [vmem:[%s0 + $0x20] sm:$0xf]
  %v21 = vld [vmem:[%s0 + $0x24] sm:$0xff]
  %v22 = vld [vmem:[%s0 + $0x2c] sm:$0xf]
  %v23 = vld [vmem:[%s1] sm:$0xf]
  %v24 = vld [vmem:[%s1 + $0x4] sm:$0xf]
  %v25 = vld [vmem:[%s1 + $0x8] sm:$0xf]
  %v26 = vld [vmem:[%s1 + $0xc] sm:$0xf]
  %v27 = vld [vmem:[%s1 + $0x10] sm:$0xf]
  %v28 = vld [vmem:[%s1 + $0x14] sm:$0xf]
  %v29 = vld [vmem:[%s1 + $0x18] sm:$0xf]
  %v30 = vld [vmem:[%s1 + $0x1c] sm:$0xf]
  %v31 = vld [vmem:[%s1 + $0x20] sm:$0xf]
  %v32 = vld [vmem:[%s1 + $0x24] sm:$0xf]
  %v33 = vld [vmem:[%s1 + $0x28] sm:$0xf]
  %v34 = vld [vmem:[%s1 + $0x2c] sm:$0xf]
  %v35 = vld [vmem:[%s1 + $0x30] sm:$0xf]
  %v36 = vld [vmem:[%s1 + $0x34] sm:$0xf]
  %v37 = vld [vmem:[%s1 + $0x38] sm:$0xf]
  %v38 = vld [vmem:[%s1 + $0x3c] sm:$0xf]
  %v39 = vld [vmem:[%s1 + $0x40] sm:$0xf]
  %v40 = vld [vmem:[%s1 + $0x44] sm:$0xf]
  %v41 = vld [vmem:[%s1 + $0x48] sm:$0xf]
  %v42 = vld [vmem:[%s1 + $0x4c] sm:$0xf]
  %v43 = vld [vmem:[%s1 + $0x50] sm:$0xf]
  %v44 = vld [vmem:[%s1 + $0x54] sm:$0xf]
  %v45 = vld [vmem:[%s1 + $0x58] sm:$0xf]
  %v46 = vld [vmem:[%s1 + $0x5c] sm:$0xf]
  %v47 = vld [vmem:[%s1 + $0x60] sm:$0xf]
  %v48 = vld [vmem:[%s1 + $0x64] sm:$0xf]
  %v49 = vld [vmem:[%s1 + $0x68] sm:$0xf]
  %v50 = vld [vmem:[%s1 + $0x6c] sm:$0xf]
  %v51 = vld [vmem:[%s1 + $0x70] sm:$0xf]
  %v52 = vld [vmem:[%s1 + $0x74] sm:$0xf]
  %v53 = vld [vmem:[%s1 + $0x78] sm:$0xf]
  %v54 = vld [vmem:[%s1 + $0x7c] sm:$0xf]
  %v55 = vld [vmem:[%s1 + $0x80] sm:$0xf]
  %v56 = vld [vmem:[%s1 + $0x84] sm:$0xf]
  %v57 = vld [vmem:[%s1 + $0x88] sm:$0xf]
  %v58 = vld [vmem:[%s1 + $0x8c] sm:$0xf]
  %v59 = vld [vmem:[%s2] sm:$0x1]
  %v61 = vlaneseq
  %v62 = vshrl.u32 %v61, 7
  %v63 = vsub.s32 0, %v62
  %v64 = vrot.slane %v59, %v63
  %v74 = vunpack.c.l.b16 %v15
  %v75 = vunpack.c.h.b16 %v15
  %v76 = vunpack.c.l.b16 %v16
  %v77 = vunpack.c.l.b16 %v17
  %v78 = vunpack.c.h.b16 %v17
  %v79 = vunpack.c.l.b16 %v18
  %v80 = vunpack.c.l.b16 %v19
  %v81 = vunpack.c.h.b16 %v19
  %v82 = vunpack.c.l.b16 %v20
  %v83 = vunpack.c.l.b16 %v21
  %v84 = vunpack.c.h.b16 %v21
  %v85 = vunpack.c.l.b16 %v22
  %v86 = vpack.c.b16 %v77, %v74
  %v87 = vpack.c.b16 %v78, %v75
  %v88 = vpack.c.b16 %v79, %v76
  %v89 = vpack.c.b16 %v83, %v80
  %v90 = vpack.c.b16 %v84, %v81
  %v91 = vpack.c.b16 %v85, %v82
  %v132 = vunpack.c.l.b16 %v23
  %v133 = vunpack.c.l.b16 %v24
  %v134 = vunpack.c.l.b16 %v25
  %v135 = vunpack.c.l.b16 %v26
  %v136 = vunpack.c.l.b16 %v27
  %v137 = vunpack.c.l.b16 %v28
  %v138 = vunpack.c.l.b16 %v29
  %v139 = vunpack.c.l.b16 %v30
  %v140 = vunpack.c.l.b16 %v31
  %v141 = vunpack.c.l.b16 %v32
  %v142 = vunpack.c.l.b16 %v33
  %v143 = vunpack.c.l.b16 %v34
  %v144 = vunpack.c.l.b16 %v35
  %v145 = vunpack.c.l.b16 %v36
  %v146 = vunpack.c.l.b16 %v37
  %v147 = vunpack.c.l.b16 %v38
  %v148 = vunpack.c.l.b16 %v39
  %v149 = vunpack.c.l.b16 %v40
  %v150 = vunpack.c.l.b16 %v41
  %v151 = vunpack.c.l.b16 %v42
  %v152 = vunpack.c.l.b16 %v43
  %v153 = vunpack.c.l.b16 %v44
  %v154 = vunpack.c.l.b16 %v45
  %v155 = vunpack.c.l.b16 %v46
  %v156 = vunpack.c.l.b16 %v47
  %v157 = vunpack.c.l.b16 %v48
  %v158 = vunpack.c.l.b16 %v49
  %v159 = vunpack.c.l.b16 %v50
  %v160 = vunpack.c.l.b16 %v51
  %v161 = vunpack.c.l.b16 %v52
  %v162 = vunpack.c.l.b16 %v53
  %v163 = vunpack.c.l.b16 %v54
  %v164 = vunpack.c.l.b16 %v55
  %v165 = vunpack.c.l.b16 %v56
  %v166 = vunpack.c.l.b16 %v57
  %v167 = vunpack.c.l.b16 %v58
  %v168 = vpack.c.b16 %v133, %v132
  %v169 = vpack.c.b16 %v135, %v134
  %v170 = vpack.c.b16 %v137, %v136
  %v171 = vpack.c.b16 %v139, %v138
  %v172 = vpack.c.b16 %v141, %v140
  %v173 = vpack.c.b16 %v143, %v142
  %v174 = vpack.c.b16 %v145, %v144
  %v175 = vpack.c.b16 %v147, %v146
  %v176 = vpack.c.b16 %v149, %v148
  %v177 = vpack.c.b16 %v151, %v150
  %v178 = vpack.c.b16 %v153, %v152
  %v179 = vpack.c.b16 %v155, %v154
  %v180 = vpack.c.b16 %v157, %v156
  %v181 = vpack.c.b16 %v159, %v158
  %v182 = vpack.c.b16 %v161, %v160
  %v183 = vpack.c.b16 %v163, %v162
  %v184 = vpack.c.b16 %v165, %v164
  %v185 = vpack.c.b16 %v167, %v166
  %vm204 = vcmask 261120
  %v206 = vsel %vm204, %v88, 0
  %v209 = vsel %vm204, %v91, 0
  %211 = vmatprep.subr.bf16.mxu0 0
  %212 = vmatpush1.bf16.msra.mxu0 %v168
  %213 = vmatprep.subr.bf16.mxu0 0
  %214 = vmatpush1.bf16.msra.mxu0 %v169
  %215 = vmatprep.subr.bf16.mxu0 0
  %216 = vmatpush1.bf16.msra.mxu0 %v170
  %217 = vmatprep.subr.bf16.mxu0 0
  %218 = vmatpush1.bf16.msra.mxu0 %v171
  %219 = vmatprep.subr.bf16.mxu0 0
  %220 = vmatpush1.bf16.msra.mxu0 %v172
  %221 = vmatprep.subr.bf16.mxu0 0
  %222 = vmatpush1.bf16.msra.mxu0 %v173
  %223 = vmatprep.subr.bf16.mxu0 0
  %224 = vmatpush1.bf16.msra.mxu0 %v174
  %225 = vmatprep.subr.bf16.mxu0 0
  %226 = vmatpush1.bf16.msra.mxu0 %v175
  %227 = vmatprep.subr.bf16.mxu0 0
  %228 = vmatpush1.bf16.msra.mxu0 %v176
  %229 = vmatprep.subr.bf16.mxu0 0
  %230 = vmatpush1.bf16.msra.mxu0 %v177
  %231 = vmatprep.subr.bf16.mxu0 0
  %232 = vmatpush1.bf16.msra.mxu0 %v178
  %233 = vmatprep.subr.bf16.mxu0 0
  %234 = vmatpush1.bf16.msra.mxu0 %v179
  %235 = vmatprep.subr.bf16.mxu0 0
  %236 = vmatpush1.bf16.msra.mxu0 %v180
  %237 = vmatprep.subr.bf16.mxu0 0
  %238 = vmatpush1.bf16.msra.mxu0 %v181
  %239 = vmatprep.subr.bf16.mxu0 0
  %240 = vmatpush1.bf16.msra.mxu0 %v182
  %241 = vmatprep.subr.bf16.mxu0 0
  %242 = vmatpush1.bf16.msra.mxu0 %v183
  %243 = vmatprep.mubr.bf16.mxu0 %v87
  %244 = vmatmul.mubr.bf16.gmra.mrb[0].mxu0 %v86
  %v245 = vpop.f32.mrb[0].mxu0
  %v246 = vadd.f32 %v64, %v245
  %v247 = vpop.f32.mrb[0].mxu0
  %v248 = vpop.f32.mrb[0].mxu0
  %v249 = vadd.f32 %v64, %v248
  %v250 = vpop.f32.mrb[0].mxu0
  %251 = vmatprep.mubr.bf16.mxu0 %v90
  %252 = vmatmul.mubr.bf16.gmra.mrb[0].mxu0 %v89
  %v253 = vpop.f32.mrb[0].mxu0
  %v254 = vadd.f32 %v64, %v253
  %v255 = vpop.f32.mrb[0].mxu0
  %v256 = vpop.f32.mrb[0].mxu0
  %v257 = vadd.f32 %v64, %v256
  %v258 = vpop.f32.mrb[0].mxu0
  %259 = vdwg.mxu0
  %260 = vmatprep.subr.bf16.mxu0 0
  %261 = vmatpush1.bf16.msra.mxu0 %v184
  %262 = vmatprep.subr.bf16.mxu0 0
  %263 = vmatpush1.bf16.msra.mxu0 %v185
  %264 = vmatprep.subr.bf16.mxu0 0
  %265 = vmatpush1.bf16.msra.mxu0 0
  %266 = vmatprep.subr.bf16.mxu0 0
  %267 = vmatpush1.bf16.msra.mxu0 0
  %268 = vmatprep.subr.bf16.mxu0 0
  %269 = vmatpush1.bf16.msra.mxu0 0
  %270 = vmatprep.subr.bf16.mxu0 0
  %271 = vmatpush1.bf16.msra.mxu0 0
  %272 = vmatprep.subr.bf16.mxu0 0
  %273 = vmatpush1.bf16.msra.mxu0 0
  %274 = vmatprep.subr.bf16.mxu0 0
  %275 = vmatpush1.bf16.msra.mxu0 0
  %276 = vmatprep.subr.bf16.mxu0 0
  %277 = vmatpush1.bf16.msra.mxu0 0
  %278 = vmatprep.subr.bf16.mxu0 0
  %279 = vmatpush1.bf16.msra.mxu0 0
  %280 = vmatprep.subr.bf16.mxu0 0
  %281 = vmatpush1.bf16.msra.mxu0 0
  %282 = vmatprep.subr.bf16.mxu0 0
  %283 = vmatpush1.bf16.msra.mxu0 0
  %284 = vmatprep.subr.bf16.mxu0 0
  %285 = vmatpush1.bf16.msra.mxu0 0
  %286 = vmatprep.subr.bf16.mxu0 0
  %287 = vmatpush1.bf16.msra.mxu0 0
  %288 = vmatprep.subr.bf16.mxu0 0
  %289 = vmatpush1.bf16.msra.mxu0 0
  %290 = vmatprep.subr.bf16.mxu0 0
  %291 = vmatpush1.bf16.msra.mxu0 0
  %292 = vmatprep.mubr.bf16.mxu0 0
  %293 = vmatmul.mubr.bf16.gmra.mrb[0].mxu0 %v206
  %v294 = vpop.f32.mrb[0].mxu0
  %v295 = vadd.f32 %v246, %v294
  %v296 = vpop.f32.mrb[0].mxu0
  %v297 = vpop.f32.mrb[0].mxu0
  %v298 = vadd.f32 %v249, %v297
  %v299 = vpop.f32.mrb[0].mxu0
  %300 = vmatprep.mubr.bf16.mxu0 0
  %301 = vmatmul.mubr.bf16.gmra.mrb[0].mxu0 %v209
  %v302 = vpop.f32.mrb[0].mxu0
  %v303 = vadd.f32 %v254, %v302
  %v304 = vpop.f32.mrb[0].mxu0
  %v305 = vpop.f32.mrb[0].mxu0
  %v306 = vadd.f32 %v257, %v305
  %v307 = vpop.f32.mrb[0].mxu0
  %308 = vdwg.mxu0
  %v309 = vmax.f32 %v295, 0.0
  %v310 = vmax.f32 %v298, 0.0
  %v311 = vmax.f32 %v303, 0.0
  %v312 = vmax.f32 %v306, 0.0
  %v313 = vpack.c.bf16 %v310, %v309
  %v314 = vpack.c.bf16 %v312, %v311
  %v317 = vunpack.c.l.b16 %v313
  %v318 = vunpack.c.h.b16 %v313
  %v319 = vunpack.c.l.b16 %v314
  %v320 = vunpack.c.h.b16 %v314
  %v321 = vpack.c.b16 %v317, %v317
  %v322 = vpack.c.b16 %v318, %v318
  %v323 = vpack.c.b16 %v319, %v319
  %v324 = vpack.c.b16 %v320, %v320
  %329 = vst [vmem:[%s3] sm:$0xf] %v321
  %330 = vst [vmem:[%s3 + $0x4] sm:$0xf] %v322
  %331 = vst [vmem:[%s3 + $0x8] sm:$0xf] %v323
  %332 = vst [vmem:[%s3 + $0xc] sm:$0xf] %v324
  // Predicated region
  $region14: #{_lambda_.28} parent=0 // pred_check
    _
  $region15: #{_lambda_.28} parent=0 // pred_check_branch
    %334 = sbr.rel (0) target = $region17
  $region16: #{_lambda_.28} parent=0 // pred_region
    _
  $region17: #{_lambda_.28} parent=0 // pred_fallthru
    _
  // Predicated region
  $region18: #{_lambda_.28} parent=0 // pred_check
    _
  $region19: #{_lambda_.28} parent=0 // pred_check_branch
    %336 = sbr.rel (0) target = $region21
  $region20: #{_lambda_.28} parent=0 // pred_region
    _
  $region21: #{_lambda_.28} parent=0 // pred_fallthru
    _

// kernel: _lambda_.30
$region0: #{_lambda_.30}
  #allocation0 [shape = 'u32[]', space=smem, size = 0x4, offset = 0x4, fixed_abs, tag = 'smem constant byte address 0x4 - core index']
  #allocation1 [shape = 'u32[144,128]{1,0:T(1,128)}', space=vmem, size = 0x12000, scoped, tag = 'internal scratch']
  %s0 = inlined_call_operand.vmem [shape: bf16[16,288], index: 0, kind: input, shape index: {}]
  %s1 = inlined_call_operand.vmem [shape: bf16[288,128], index: 1, kind: input, shape index: {}]
  %s2 = inlined_call_operand.vmem [shape: f32[1,128], index: 2, kind: input, shape index: {}]
  %s3 = inlined_call_operand.vmem [shape: bf16[16,128], index: 3, kind: output, shape index: {}]
  %s4 = sld [smem:[#allocation0]]
  $region22: #{_lambda_.30} parent=0
    _
  %s6 = ssub.s32 1, %s4
  %s7 = scalar_select 0, %s6, %s4
  // Predicated region
  $region2: #{_lambda_.30} parent=0 // pred_check
    _
  $region3: #{_lambda_.30} parent=0 // pred_check_branch
    %9 = sbr.rel (0) target = $region5
  $region4: #{_lambda_.30} parent=0 // pred_region
    _
  $region5: #{_lambda_.30} parent=0 // pred_fallthru
    _
  // Predicated region
  $region6: #{_lambda_.30} parent=0 // pred_check
    _
  $region7: #{_lambda_.30} parent=0 // pred_check_branch
    %11 = sbr.rel (0) target = $region9
  $region8: #{_lambda_.30} parent=0 // pred_region
    _
  $region9: #{_lambda_.30} parent=0 // pred_fallthru
    _
  // Predicated region
  $region10: #{_lambda_.30} parent=0 // pred_check
    _
  $region11: #{_lambda_.30} parent=0 // pred_check_branch
    %13 = sbr.rel (0) target = $region13
  $region12: #{_lambda_.30} parent=0 // pred_region
    _
  $region13: #{_lambda_.30} parent=0 // pred_fallthru
    _
  %v15 = vld [vmem:[%s0] sm:$0xff]
  %v16 = vld [vmem:[%s0 + $0x8] sm:$0xf]
  %v17 = vld [vmem:[%s0 + $0xc] sm:$0xff]
  %v18 = vld [vmem:[%s0 + $0x14] sm:$0xf]
  %v19 = vld [vmem:[%s1] sm:$0xf]
  %v20 = vld [vmem:[%s1 + $0x4] sm:$0xf]
  %v21 = vld [vmem:[%s1 + $0x8] sm:$0xf]
  %v22 = vld [vmem:[%s1 + $0xc] sm:$0xf]
  %v23 = vld [vmem:[%s1 + $0x10] sm:$0xf]
  %v24 = vld [vmem:[%s1 + $0x14] sm:$0xf]
  %v25 = vld [vmem:[%s1 + $0x18] sm:$0xf]
  %v26 = vld [vmem:[%s1 + $0x1c] sm:$0xf]
  %v27 = vld [vmem:[%s1 + $0x20] sm:$0xf]
  %v28 = vld [vmem:[%s1 + $0x24] sm:$0xf]
  %v29 = vld [vmem:[%s1 + $0x28] sm:$0xf]
  %v30 = vld [vmem:[%s1 + $0x2c] sm:$0xf]
  %v31 = vld [vmem:[%s1 + $0x30] sm:$0xf]
  %v32 = vld [vmem:[%s1 + $0x34] sm:$0xf]
  %v33 = vld [vmem:[%s1 + $0x38] sm:$0xf]
  %v34 = vld [vmem:[%s1 + $0x3c] sm:$0xf]
  %v35 = vld [vmem:[%s1 + $0x40] sm:$0xf]
  %v36 = vld [vmem:[%s1 + $0x44] sm:$0xf]
  %v37 = vld [vmem:[%s1 + $0x48] sm:$0xf]
  %v38 = vld [vmem:[%s1 + $0x4c] sm:$0xf]
  %v39 = vld [vmem:[%s1 + $0x50] sm:$0xf]
  %v40 = vld [vmem:[%s1 + $0x54] sm:$0xf]
  %v41 = vld [vmem:[%s1 + $0x58] sm:$0xf]
  %v42 = vld [vmem:[%s1 + $0x5c] sm:$0xf]
  %v43 = vld [vmem:[%s1 + $0x60] sm:$0xf]
  %v44 = vld [vmem:[%s1 + $0x64] sm:$0xf]
  %v45 = vld [vmem:[%s1 + $0x68] sm:$0xf]
  %v46 = vld [vmem:[%s1 + $0x6c] sm:$0xf]
  %v47 = vld [vmem:[%s1 + $0x70] sm:$0xf]
  %v48 = vld [vmem:[%s1 + $0x74] sm:$0xf]
  %v49 = vld [vmem:[%s1 + $0x78] sm:$0xf]
  %v50 = vld [vmem:[%s1 + $0x7c] sm:$0xf]
  %v51 = vld [vmem:[%s1 + $0x80] sm:$0xf]
  %v52 = vld [vmem:[%s1 + $0x84] sm:$0xf]
  %v53 = vld [vmem:[%s1 + $0x88] sm:$0xf]
  %v54 = vld [vmem:[%s1 + $0x8c] sm:$0xf]
  %v55 = vld [vmem:[%s2] sm:$0x1]
  %v57 = vlaneseq
  %v58 = vshrl.u32 %v57, 7
  %v59 = vsub.s32 0, %v58
  %v60 = vrot.slane %v55, %v59
  %v66 = vunpack.c.l.b16 %v15
  %v67 = vunpack.c.h.b16 %v15
  %v68 = vunpack.c.l.b16 %v16
  %v69 = vunpack.c.l.b16 %v17
  %v70 = vunpack.c.h.b16 %v17
  %v71 = vunpack.c.l.b16 %v18
  %v72 = vpack.c.b16 %v69, %v66
  %v73 = vpack.c.b16 %v70, %v67
  %v74 = vpack.c.b16 %v71, %v68
  %v113 = vunpack.c.l.b16 %v19
  %v114 = vunpack.c.l.b16 %v20
  %v115 = vunpack.c.l.b16 %v21
  %v116 = vunpack.c.l.b16 %v22
  %v117 = vunpack.c.l.b16 %v23
  %v118 = vunpack.c.l.b16 %v24
  %v119 = vunpack.c.l.b16 %v25
  %v120 = vunpack.c.l.b16 %v26
  %v121 = vunpack.c.l.b16 %v27
  %v122 = vunpack.c.l.b16 %v28
  %v123 = vunpack.c.l.b16 %v29
  %v124 = vunpack.c.l.b16 %v30
  %v125 = vunpack.c.l.b16 %v31
  %v126 = vunpack.c.l.b16 %v32
  %v127 = vunpack.c.l.b16 %v33
  %v128 = vunpack.c.l.b16 %v34
  %v129 = vunpack.c.l.b16 %v35
  %v130 = vunpack.c.l.b16 %v36
  %v131 = vunpack.c.l.b16 %v37
  %v132 = vunpack.c.l.b16 %v38
  %v133 = vunpack.c.l.b16 %v39
  %v134 = vunpack.c.l.b16 %v40
  %v135 = vunpack.c.l.b16 %v41
  %v136 = vunpack.c.l.b16 %v42
  %v137 = vunpack.c.l.b16 %v43
  %v138 = vunpack.c.l.b16 %v44
  %v139 = vunpack.c.l.b16 %v45
  %v140 = vunpack.c.l.b16 %v46
  %v141 = vunpack.c.l.b16 %v47
  %v142 = vunpack.c.l.b16 %v48
  %v143 = vunpack.c.l.b16 %v49
  %v144 = vunpack.c.l.b16 %v50
  %v145 = vunpack.c.l.b16 %v51
  %v146 = vunpack.c.l.b16 %v52
  %v147 = vunpack.c.l.b16 %v53
  %v148 = vunpack.c.l.b16 %v54
  %v149 = vpack.c.b16 %v114, %v113
  %v150 = vpack.c.b16 %v116, %v115
  %v151 = vpack.c.b16 %v118, %v117
  %v152 = vpack.c.b16 %v120, %v119
  %v153 = vpack.c.b16 %v122, %v121
  %v154 = vpack.c.b16 %v124, %v123
  %v155 = vpack.c.b16 %v126, %v125
  %v156 = vpack.c.b16 %v128, %v127
  %v157 = vpack.c.b16 %v130, %v129
  %v158 = vpack.c.b16 %v132, %v131
  %v159 = vpack.c.b16 %v134, %v133
  %v160 = vpack.c.b16 %v136, %v135
  %v161 = vpack.c.b16 %v138, %v137
  %v162 = vpack.c.b16 %v140, %v139
  %v163 = vpack.c.b16 %v142, %v141
  %v164 = vpack.c.b16 %v144, %v143
  %v165 = vpack.c.b16 %v146, %v145
  %v166 = vpack.c.b16 %v148, %v147
  %vm185 = vcmask 261120
  %v187 = vsel %vm185, %v74, 0
  %189 = vmatprep.subr.bf16.mxu0 0
  %190 = vmatpush1.bf16.msra.mxu0 %v149
  %191 = vmatprep.subr.bf16.mxu0 0
  %192 = vmatpush1.bf16.msra.mxu0 %v150
  %193 = vmatprep.subr.bf16.mxu0 0
  %194 = vmatpush1.bf16.msra.mxu0 %v151
  %195 = vmatprep.subr.bf16.mxu0 0
  %196 = vmatpush1.bf16.msra.mxu0 %v152
  %197 = vmatprep.subr.bf16.mxu0 0
  %198 = vmatpush1.bf16.msra.mxu0 %v153
  %199 = vmatprep.subr.bf16.mxu0 0
  %200 = vmatpush1.bf16.msra.mxu0 %v154
  %201 = vmatprep.subr.bf16.mxu0 0
  %202 = vmatpush1.bf16.msra.mxu0 %v155
  %203 = vmatprep.subr.bf16.mxu0 0
  %204 = vmatpush1.bf16.msra.mxu0 %v156
  %205 = vmatprep.subr.bf16.mxu0 0
  %206 = vmatpush1.bf16.msra.mxu0 %v157
  %207 = vmatprep.subr.bf16.mxu0 0
  %208 = vmatpush1.bf16.msra.mxu0 %v158
  %209 = vmatprep.subr.bf16.mxu0 0
  %210 = vmatpush1.bf16.msra.mxu0 %v159
  %211 = vmatprep.subr.bf16.mxu0 0
  %212 = vmatpush1.bf16.msra.mxu0 %v160
  %213 = vmatprep.subr.bf16.mxu0 0
  %214 = vmatpush1.bf16.msra.mxu0 %v161
  %215 = vmatprep.subr.bf16.mxu0 0
  %216 = vmatpush1.bf16.msra.mxu0 %v162
  %217 = vmatprep.subr.bf16.mxu0 0
  %218 = vmatpush1.bf16.msra.mxu0 %v163
  %219 = vmatprep.subr.bf16.mxu0 0
  %220 = vmatpush1.bf16.msra.mxu0 %v164
  %221 = vmatprep.mubr.bf16.mxu0 %v73
  %222 = vmatmul.mubr.bf16.gmra.mrb[0].mxu0 %v72
  %v223 = vpop.f32.mrb[0].mxu0
  %v224 = vadd.f32 %v60, %v223
  %v225 = vpop.f32.mrb[0].mxu0
  %v226 = vpop.f32.mrb[0].mxu0
  %v227 = vadd.f32 %v60, %v226
  %v228 = vpop.f32.mrb[0].mxu0
  %229 = vdwg.mxu0
  %230 = vmatprep.subr.bf16.mxu0 0
  %231 = vmatpush1.bf16.msra.mxu0 %v165
  %232 = vmatprep.subr.bf16.mxu0 0
  %233 = vmatpush1.bf16.msra.mxu0 %v166
  %234 = vmatprep.subr.bf16.mxu0 0
  %235 = vmatpush1.bf16.msra.mxu0 0
  %236 = vmatprep.subr.bf16.mxu0 0
  %237 = vmatpush1.bf16.msra.mxu0 0
  %238 = vmatprep.subr.bf16.mxu0 0
  %239 = vmatpush1.bf16.msra.mxu0 0
  %240 = vmatprep.subr.bf16.mxu0 0
  %241 = vmatpush1.bf16.msra.mxu0 0
  %242 = vmatprep.subr.bf16.mxu0 0
  %243 = vmatpush1.bf16.msra.mxu0 0
  %244 = vmatprep.subr.bf16.mxu0 0
  %245 = vmatpush1.bf16.msra.mxu0 0
  %246 = vmatprep.subr.bf16.mxu0 0
  %247 = vmatpush1.bf16.msra.mxu0 0
  %248 = vmatprep.subr.bf16.mxu0 0
  %249 = vmatpush1.bf16.msra.mxu0 0
  %250 = vmatprep.subr.bf16.mxu0 0
  %251 = vmatpush1.bf16.msra.mxu0 0
  %252 = vmatprep.subr.bf16.mxu0 0
  %253 = vmatpush1.bf16.msra.mxu0 0
  %254 = vmatprep.subr.bf16.mxu0 0
  %255 = vmatpush1.bf16.msra.mxu0 0
  %256 = vmatprep.subr.bf16.mxu0 0
  %257 = vmatpush1.bf16.msra.mxu0 0
  %258 = vmatprep.subr.bf16.mxu0 0
  %259 = vmatpush1.bf16.msra.mxu0 0
  %260 = vmatprep.subr.bf16.mxu0 0
  %261 = vmatpush1.bf16.msra.mxu0 0
  %262 = vmatprep.mubr.bf16.mxu0 0
  %263 = vmatmul.mubr.bf16.gmra.mrb[0].mxu0 %v187
  %v264 = vpop.f32.mrb[0].mxu0
  %v265 = vadd.f32 %v224, %v264
  %v266 = vpop.f32.mrb[0].mxu0
  %v267 = vpop.f32.mrb[0].mxu0
  %v268 = vadd.f32 %v227, %v267
  %v269 = vpop.f32.mrb[0].mxu0
  %270 = vdwg.mxu0
  %v271 = vmax.f32 %v265, 0.0
  %v272 = vmax.f32 %v268, 0.0
  %v273 = vpack.c.bf16 %v272, %v271
  %v275 = vunpack.c.l.b16 %v273
  %v276 = vunpack.c.h.b16 %v273
  %v277 = vpack.c.b16 %v275, %v275
  %v278 = vpack.c.b16 %v276, %v276
  %281 = vst [vmem:[%s3] sm:$0xf] %v277
  %282 = vst [vmem:[%s3 + $0x4] sm:$0xf] %v278
  // Predicated region
  $region14: #{_lambda_.30} parent=0 // pred_check
    _
  $region15: #{_lambda_.30} parent=0 // pred_check_branch
    %284 = sbr.rel (0) target = $region17
  $region16: #{_lambda_.30} parent=0 // pred_region
    _
  $region17: #{_lambda_.30} parent=0 // pred_fallthru
    _
  // Predicated region
  $region18: #{_lambda_.30} parent=0 // pred_check
    _
  $region19: #{_lambda_.30} parent=0 // pred_check_branch
    %286 = sbr.rel (0) target = $region21
  $region20: #{_lambda_.30} parent=0 // pred_region
    _
  $region21: #{_lambda_.30} parent=0 // pred_fallthru
    _

// kernel: _lambda_.31
$region0: #{_lambda_.31}
  #allocation0 [shape = 'u32[]', space=smem, size = 0x4, offset = 0x4, fixed_abs, tag = 'smem constant byte address 0x4 - core index']
  #allocation1 [shape = 'u32[144,128]{1,0:T(1,128)}', space=vmem, size = 0x12000, scoped, tag = 'internal scratch']
  %s0 = inlined_call_operand.vmem [shape: bf16[16,32], index: 0, kind: input, shape index: {}]
  %s1 = inlined_call_operand.vmem [shape: bf16[32,128], index: 1, kind: input, shape index: {}]
  %s2 = inlined_call_operand.vmem [shape: f32[1,128], index: 2, kind: input, shape index: {}]
  %s3 = inlined_call_operand.vmem [shape: bf16[16,128], index: 3, kind: output, shape index: {}]
  %s4 = sld [smem:[#allocation0]]
  $region22: #{_lambda_.31} parent=0
    _
  %s6 = ssub.s32 1, %s4
  %s7 = scalar_select 0, %s6, %s4
  // Predicated region
  $region2: #{_lambda_.31} parent=0 // pred_check
    _
  $region3: #{_lambda_.31} parent=0 // pred_check_branch
    %9 = sbr.rel (0) target = $region5
  $region4: #{_lambda_.31} parent=0 // pred_region
    _
  $region5: #{_lambda_.31} parent=0 // pred_fallthru
    _
  // Predicated region
  $region6: #{_lambda_.31} parent=0 // pred_check
    _
  $region7: #{_lambda_.31} parent=0 // pred_check_branch
    %11 = sbr.rel (0) target = $region9
  $region8: #{_lambda_.31} parent=0 // pred_region
    _
  $region9: #{_lambda_.31} parent=0 // pred_fallthru
    _
  // Predicated region
  $region10: #{_lambda_.31} parent=0 // pred_check
    _
  $region11: #{_lambda_.31} parent=0 // pred_check_branch
    %13 = sbr.rel (0) target = $region13
  $region12: #{_lambda_.31} parent=0 // pred_region
    _
  $region13: #{_lambda_.31} parent=0 // pred_fallthru
    _
  %v15 = vld [vmem:[%s0] sm:$0xf]
  %v16 = vld [vmem:[%s0 + $0x4] sm:$0xf]
  %v17 = vld [vmem:[%s1] sm:$0xf]
  %v18 = vld [vmem:[%s1 + $0x4] sm:$0xf]
  %v19 = vld [vmem:[%s1 + $0x8] sm:$0xf]
  %v20 = vld [vmem:[%s1 + $0xc] sm:$0xf]
  %v21 = vld [vmem:[%s2] sm:$0x1]
  %v23 = vlaneseq
  %v24 = vshrl.u32 %v23, 7
  %v25 = vsub.s32 0, %v24
  %v26 = vrot.slane %v21, %v25
  %v30 = vunpack.c.l.b16 %v15
  %v31 = vunpack.c.l.b16 %v16
  %v32 = vpack.c.b16 %v31, %v30
  %v37 = vunpack.c.l.b16 %v17
  %v38 = vunpack.c.l.b16 %v18
  %v39 = vunpack.c.l.b16 %v19
  %v40 = vunpack.c.l.b16 %v20
  %v41 = vpack.c.b16 %v38, %v37
  %v42 = vpack.c.b16 %v40, %v39
  %vm45 = vcmask 261120
  %v47 = vsel %vm45, %v32, 0
  %49 = vmatprep.subr.bf16.mxu0 0
  %50 = vmatpush1.bf16.msra.mxu0 %v41
  %51 = vmatprep.subr.bf16.mxu0 0
  %52 = vmatpush1.bf16.msra.mxu0 %v42
  %53 = vmatprep.subr.bf16.mxu0 0
  %54 = vmatpush1.bf16.msra.mxu0 0
  %55 = vmatprep.subr.bf16.mxu0 0
  %56 = vmatpush1.bf16.msra.mxu0 0
  %57 = vmatprep.subr.bf16.mxu0 0
  %58 = vmatpush1.bf16.msra.mxu0 0
  %59 = vmatprep.subr.bf16.mxu0 0
  %60 = vmatpush1.bf16.msra.mxu0 0
  %61 = vmatprep.subr.bf16.mxu0 0
  %62 = vmatpush1.bf16.msra.mxu0 0
  %63 = vmatprep.subr.bf16.mxu0 0
  %64 = vmatpush1.bf16.msra.mxu0 0
  %65 = vmatprep.subr.bf16.mxu0 0
  %66 = vmatpush1.bf16.msra.mxu0 0
  %67 = vmatprep.subr.bf16.mxu0 0
  %68 = vmatpush1.bf16.msra.mxu0 0
  %69 = vmatprep.subr.bf16.mxu0 0
  %70 = vmatpush1.bf16.msra.mxu0 0
  %71 = vmatprep.subr.bf16.mxu0 0
  %72 = vmatpush1.bf16.msra.mxu0 0
  %73 = vmatprep.subr.bf16.mxu0 0
  %74 = vmatpush1.bf16.msra.mxu0 0
  %75 = vmatprep.subr.bf16.mxu0 0
  %76 = vmatpush1.bf16.msra.mxu0 0
  %77 = vmatprep.subr.bf16.mxu0 0
  %78 = vmatpush1.bf16.msra.mxu0 0
  %79 = vmatprep.subr.bf16.mxu0 0
  %80 = vmatpush1.bf16.msra.mxu0 0
  %81 = vmatprep.mubr.bf16.mxu0 0
  %82 = vmatmul.mubr.bf16.gmra.mrb[0].mxu0 %v47
  %v83 = vpop.f32.mrb[0].mxu0
  %v84 = vadd.f32 %v26, %v83
  %v85 = vpop.f32.mrb[0].mxu0
  %v86 = vpop.f32.mrb[0].mxu0
  %v87 = vadd.f32 %v26, %v86
  %v88 = vpop.f32.mrb[0].mxu0
  %89 = vdwg.mxu0
  %v90 = vpack.c.bf16 %v87, %v84
  %v92 = vunpack.c.l.b16 %v90
  %v93 = vunpack.c.h.b16 %v90
  %v94 = vpack.c.b16 %v92, %v92
  %v95 = vpack.c.b16 %v93, %v93
  %98 = vst [vmem:[%s3] sm:$0xf] %v94
  %99 = vst [vmem:[%s3 + $0x4] sm:$0xf] %v95
  // Predicated region
  $region14: #{_lambda_.31} parent=0 // pred_check
    _
  $region15: #{_lambda_.31} parent=0 // pred_check_branch
    %101 = sbr.rel (0) target = $region17
  $region16: #{_lambda_.31} parent=0 // pred_region
    _
  $region17: #{_lambda_.31} parent=0 // pred_fallthru
    _
  // Predicated region
  $region18: #{_lambda_.31} parent=0 // pred_check
    _
  $region19: #{_lambda_.31} parent=0 // pred_check_branch
    %103 = sbr.rel (0) target = $region21
  $region20: #{_lambda_.31} parent=0 // pred_region
    _
  $region21: #{_lambda_.31} parent=0 // pred_fallthru
    _

// kernel: _lambda_.33
$region0: #{_lambda_.33}
  #allocation0 [shape = 'u32[]', space=smem, size = 0x4, offset = 0x4, fixed_abs, tag = 'smem constant byte address 0x4 - core index']
  #allocation1 [shape = 'u32[144,128]{1,0:T(1,128)}', space=vmem, size = 0x12000, scoped, tag = 'internal scratch']
  %s0 = inlined_call_operand.vmem [shape: bf16[16,576], index: 0, kind: input, shape index: {}]
  %s1 = inlined_call_operand.vmem [shape: bf16[576,128], index: 1, kind: input, shape index: {}]
  %s2 = inlined_call_operand.vmem [shape: f32[1,128], index: 2, kind: input, shape index: {}]
  %s3 = inlined_call_operand.vmem [shape: bf16[16,128], index: 3, kind: output, shape index: {}]
  %s4 = sld [smem:[#allocation0]]
  $region22: #{_lambda_.33} parent=0
    _
  %s6 = ssub.s32 1, %s4
  %s7 = scalar_select 0, %s6, %s4
  // Predicated region
  $region2: #{_lambda_.33} parent=0 // pred_check
    _
  $region3: #{_lambda_.33} parent=0 // pred_check_branch
    %9 = sbr.rel (0) target = $region5
  $region4: #{_lambda_.33} parent=0 // pred_region
    _
  $region5: #{_lambda_.33} parent=0 // pred_fallthru
    _
  // Predicated region
  $region6: #{_lambda_.33} parent=0 // pred_check
    _
  $region7: #{_lambda_.33} parent=0 // pred_check_branch
    %11 = sbr.rel (0) target = $region9
  $region8: #{_lambda_.33} parent=0 // pred_region
    _
  $region9: #{_lambda_.33} parent=0 // pred_fallthru
    _
  // Predicated region
  $region10: #{_lambda_.33} parent=0 // pred_check
    _
  $region11: #{_lambda_.33} parent=0 // pred_check_branch
    %13 = sbr.rel (0) target = $region13
  $region12: #{_lambda_.33} parent=0 // pred_region
    _
  $region13: #{_lambda_.33} parent=0 // pred_fallthru
    _
  %v15 = vld [vmem:[%s0] sm:$0xff]
  %v16 = vld [vmem:[%s0 + $0x8] sm:$0xff]
  %v17 = vld [vmem:[%s0 + $0x10] sm:$0xf]
  %v18 = vld [vmem:[%s0 + $0x14] sm:$0xff]
  %v19 = vld [vmem:[%s0 + $0x1c] sm:$0xff]
  %v20 = vld [vmem:[%s0 + $0x24] sm:$0xf]
  %v21 = vld [vmem:[%s1] sm:$0xf]
  %v22 = vld [vmem:[%s1 + $0x4] sm:$0xf]
  %v23 = vld [vmem:[%s1 + $0x8] sm:$0xf]
  %v24 = vld [vmem:[%s1 + $0xc] sm:$0xf]
  %v25 = vld [vmem:[%s1 + $0x10] sm:$0xf]
  %v26 = vld [vmem:[%s1 + $0x14] sm:$0xf]
  %v27 = vld [vmem:[%s1 + $0x18] sm:$0xf]
  %v28 = vld [vmem:[%s1 + $0x1c] sm:$0xf]
  %v29 = vld [vmem:[%s1 + $0x20] sm:$0xf]
  %v30 = vld [vmem:[%s1 + $0x24] sm:$0xf]
  %v31 = vld [vmem:[%s1 + $0x28] sm:$0xf]
  %v32 = vld [vmem:[%s1 + $0x2c] sm:$0xf]
  %v33 = vld [vmem:[%s1 + $0x30] sm:$0xf]
  %v34 = vld [vmem:[%s1 + $0x34] sm:$0xf]
  %v35 = vld [vmem:[%s1 + $0x38] sm:$0xf]
  %v36 = vld [vmem:[%s1 + $0x3c] sm:$0xf]
  %v37 = vld [vmem:[%s1 + $0x40] sm:$0xf]
  %v38 = vld [vmem:[%s1 + $0x44] sm:$0xf]
  %v39 = vld [vmem:[%s1 + $0x48] sm:$0xf]
  %v40 = vld [vmem:[%s1 + $0x4c] sm:$0xf]
  %v41 = vld [vmem:[%s1 + $0x50] sm:$0xf]
  %v42 = vld [vmem:[%s1 + $0x54] sm:$0xf]
  %v43 = vld [vmem:[%s1 + $0x58] sm:$0xf]
  %v44 = vld [vmem:[%s1 + $0x5c] sm:$0xf]
  %v45 = vld [vmem:[%s1 + $0x60] sm:$0xf]
  %v46 = vld [vmem:[%s1 + $0x64] sm:$0xf]
  %v47 = vld [vmem:[%s1 + $0x68] sm:$0xf]
  %v48 = vld [vmem:[%s1 + $0x6c] sm:$0xf]
  %v49 = vld [vmem:[%s1 + $0x70] sm:$0xf]
  %v50 = vld [vmem:[%s1 + $0x74] sm:$0xf]
  %v51 = vld [vmem:[%s1 + $0x78] sm:$0xf]
  %v52 = vld [vmem:[%s1 + $0x7c] sm:$0xf]
  %v53 = vld [vmem:[%s1 + $0x80] sm:$0xf]
  %v54 = vld [vmem:[%s1 + $0x84] sm:$0xf]
  %v55 = vld [vmem:[%s1 + $0x88] sm:$0xf]
  %v56 = vld [vmem:[%s1 + $0x8c] sm:$0xf]
  %v57 = vld [vmem:[%s1 + $0x90] sm:$0xf]
  %v58 = vld [vmem:[%s1 + $0x94] sm:$0xf]
  %v59 = vld [vmem:[%s1 + $0x98] sm:$0xf]
  %v60 = vld [vmem:[%s1 + $0x9c] sm:$0xf]
  %v61 = vld [vmem:[%s1 + $0xa0] sm:$0xf]
  %v62 = vld [vmem:[%s1 + $0xa4] sm:$0xf]
  %v63 = vld [vmem:[%s1 + $0xa8] sm:$0xf]
  %v64 = vld [vmem:[%s1 + $0xac] sm:$0xf]
  %v65 = vld [vmem:[%s1 + $0xb0] sm:$0xf]
  %v66 = vld [vmem:[%s1 + $0xb4] sm:$0xf]
  %v67 = vld [vmem:[%s1 + $0xb8] sm:$0xf]
  %v68 = vld [vmem:[%s1 + $0xbc] sm:$0xf]
  %v69 = vld [vmem:[%s1 + $0xc0] sm:$0xf]
  %v70 = vld [vmem:[%s1 + $0xc4] sm:$0xf]
  %v71 = vld [vmem:[%s1 + $0xc8] sm:$0xf]
  %v72 = vld [vmem:[%s1 + $0xcc] sm:$0xf]
  %v73 = vld [vmem:[%s1 + $0xd0] sm:$0xf]
  %v74 = vld [vmem:[%s1 + $0xd4] sm:$0xf]
  %v75 = vld [vmem:[%s1 + $0xd8] sm:$0xf]
  %v76 = vld [vmem:[%s1 + $0xdc] sm:$0xf]
  %v77 = vld [vmem:[%s1 + $0xe0] sm:$0xf]
  %v78 = vld [vmem:[%s1 + $0xe4] sm:$0xf]
  %v79 = vld [vmem:[%s1 + $0xe8] sm:$0xf]
  %v80 = vld [vmem:[%s1 + $0xec] sm:$0xf]
  %v81 = vld [vmem:[%s1 + $0xf0] sm:$0xf]
  %v82 = vld [vmem:[%s1 + $0xf4] sm:$0xf]
  %v83 = vld [vmem:[%s1 + $0xf8] sm:$0xf]
  %v84 = vld [vmem:[%s1 + $0xfc] sm:$0xf]
  %v85 = vld [vmem:[%s1 + $0x100] sm:$0xf]
  %v86 = vld [vmem:[%s1 + $0x104] sm:$0xf]
  %v87 = vld [vmem:[%s1 + $0x108] sm:$0xf]
  %v88 = vld [vmem:[%s1 + $0x10c] sm:$0xf]
  %v89 = vld [vmem:[%s1 + $0x110] sm:$0xf]
  %v90 = vld [vmem:[%s1 + $0x114] sm:$0xf]
  %v91 = vld [vmem:[%s1 + $0x118] sm:$0xf]
  %v92 = vld [vmem:[%s1 + $0x11c] sm:$0xf]
  %v93 = vld [vmem:[%s2] sm:$0x1]
  %v95 = vlaneseq
  %v96 = vshrl.u32 %v95, 7
  %v97 = vsub.s32 0, %v96
  %v98 = vrot.slane %v93, %v97
  %v106 = vunpack.c.l.b16 %v15
  %v107 = vunpack.c.h.b16 %v15
  %v108 = vunpack.c.l.b16 %v16
  %v109 = vunpack.c.h.b16 %v16
  %v110 = vunpack.c.l.b16 %v17
  %v111 = vunpack.c.l.b16 %v18
  %v112 = vunpack.c.h.b16 %v18
  %v113 = vunpack.c.l.b16 %v19
  %v114 = vunpack.c.h.b16 %v19
  %v115 = vunpack.c.l.b16 %v20
  %v116 = vpack.c.b16 %v111, %v106
  %v117 = vpack.c.b16 %v112, %v107
  %v118 = vpack.c.b16 %v113, %v108
  %v119 = vpack.c.b16 %v114, %v109
  %v120 = vpack.c.b16 %v115, %v110
  %v197 = vunpack.c.l.b16 %v21
  %v198 = vunpack.c.l.b16 %v22
  %v199 = vunpack.c.l.b16 %v23
  %v200 = vunpack.c.l.b16 %v24
  %v201 = vunpack.c.l.b16 %v25
  %v202 = vunpack.c.l.b16 %v26
  %v203 = vunpack.c.l.b16 %v27
  %v204 = vunpack.c.l.b16 %v28
  %v205 = vunpack.c.l.b16 %v29
  %v206 = vunpack.c.l.b16 %v30
  %v207 = vunpack.c.l.b16 %v31
  %v208 = vunpack.c.l.b16 %v32
  %v209 = vunpack.c.l.b16 %v33
  %v210 = vunpack.c.l.b16 %v34
  %v211 = vunpack.c.l.b16 %v35
  %v212 = vunpack.c.l.b16 %v36
  %v213 = vunpack.c.l.b16 %v37
  %v214 = vunpack.c.l.b16 %v38
  %v215 = vunpack.c.l.b16 %v39
  %v216 = vunpack.c.l.b16 %v40
  %v217 = vunpack.c.l.b16 %v41
  %v218 = vunpack.c.l.b16 %v42
  %v219 = vunpack.c.l.b16 %v43
  %v220 = vunpack.c.l.b16 %v44
  %v221 = vunpack.c.l.b16 %v45
  %v222 = vunpack.c.l.b16 %v46
  %v223 = vunpack.c.l.b16 %v47
  %v224 = vunpack.c.l.b16 %v48
  %v225 = vunpack.c.l.b16 %v49
  %v226 = vunpack.c.l.b16 %v50
  %v227 = vunpack.c.l.b16 %v51
  %v228 = vunpack.c.l.b16 %v52
  %v229 = vunpack.c.l.b16 %v53
  %v230 = vunpack.c.l.b16 %v54
  %v231 = vunpack.c.l.b16 %v55
  %v232 = vunpack.c.l.b16 %v56
  %v233 = vunpack.c.l.b16 %v57
  %v234 = vunpack.c.l.b16 %v58
  %v235 = vunpack.c.l.b16 %v59
  %v236 = vunpack.c.l.b16 %v60
  %v237 = vunpack.c.l.b16 %v61
  %v238 = vunpack.c.l.b16 %v62
  %v239 = vunpack.c.l.b16 %v63
  %v240 = vunpack.c.l.b16 %v64
  %v241 = vunpack.c.l.b16 %v65
  %v242 = vunpack.c.l.b16 %v66
  %v243 = vunpack.c.l.b16 %v67
  %v244 = vunpack.c.l.b16 %v68
  %v245 = vunpack.c.l.b16 %v69
  %v246 = vunpack.c.l.b16 %v70
  %v247 = vunpack.c.l.b16 %v71
  %v248 = vunpack.c.l.b16 %v72
  %v249 = vunpack.c.l.b16 %v73
  %v250 = vunpack.c.l.b16 %v74
  %v251 = vunpack.c.l.b16 %v75
  %v252 = vunpack.c.l.b16 %v76
  %v253 = vunpack.c.l.b16 %v77
  %v254 = vunpack.c.l.b16 %v78
  %v255 = vunpack.c.l.b16 %v79
  %v256 = vunpack.c.l.b16 %v80
  %v257 = vunpack.c.l.b16 %v81
  %v258 = vunpack.c.l.b16 %v82
  %v259 = vunpack.c.l.b16 %v83
  %v260 = vunpack.c.l.b16 %v84
  %v261 = vunpack.c.l.b16 %v85
  %v262 = vunpack.c.l.b16 %v86
  %v263 = vunpack.c.l.b16 %v87
  %v264 = vunpack.c.l.b16 %v88
  %v265 = vunpack.c.l.b16 %v89
  %v266 = vunpack.c.l.b16 %v90
  %v267 = vunpack.c.l.b16 %v91
  %v268 = vunpack.c.l.b16 %v92
  %v269 = vpack.c.b16 %v198, %v197
  %v270 = vpack.c.b16 %v200, %v199
  %v271 = vpack.c.b16 %v202, %v201
  %v272 = vpack.c.b16 %v204, %v203
  %v273 = vpack.c.b16 %v206, %v205
  %v274 = vpack.c.b16 %v208, %v207
  %v275 = vpack.c.b16 %v210, %v209
  %v276 = vpack.c.b16 %v212, %v211
  %v277 = vpack.c.b16 %v214, %v213
  %v278 = vpack.c.b16 %v216, %v215
  %v279 = vpack.c.b16 %v218, %v217
  %v280 = vpack.c.b16 %v220, %v219
  %v281 = vpack.c.b16 %v222, %v221
  %v282 = vpack.c.b16 %v224, %v223
  %v283 = vpack.c.b16 %v226, %v225
  %v284 = vpack.c.b16 %v228, %v227
  %v285 = vpack.c.b16 %v230, %v229
  %v286 = vpack.c.b16 %v232, %v231
  %v287 = vpack.c.b16 %v234, %v233
  %v288 = vpack.c.b16 %v236, %v235
  %v289 = vpack.c.b16 %v238, %v237
  %v290 = vpack.c.b16 %v240, %v239
  %v291 = vpack.c.b16 %v242, %v241
  %v292 = vpack.c.b16 %v244, %v243
  %v293 = vpack.c.b16 %v246, %v245
  %v294 = vpack.c.b16 %v248, %v247
  %v295 = vpack.c.b16 %v250, %v249
  %v296 = vpack.c.b16 %v252, %v251
  %v297 = vpack.c.b16 %v254, %v253
  %v298 = vpack.c.b16 %v256, %v255
  %v299 = vpack.c.b16 %v258, %v257
  %v300 = vpack.c.b16 %v260, %v259
  %v301 = vpack.c.b16 %v262, %v261
  %v302 = vpack.c.b16 %v264, %v263
  %v303 = vpack.c.b16 %v266, %v265
  %v304 = vpack.c.b16 %v268, %v267
  %vm341 = vcmask 523264
  %v343 = vsel %vm341, %v120, 0
  %345 = vmatprep.subr.bf16.mxu0 0
  %346 = vmatpush1.bf16.msra.mxu0 %v269
  %347 = vmatprep.subr.bf16.mxu0 0
  %348 = vmatpush1.bf16.msra.mxu0 %v270
  %349 = vmatprep.subr.bf16.mxu0 0
  %350 = vmatpush1.bf16.msra.mxu0 %v271
  %351 = vmatprep.subr.bf16.mxu0 0
  %352 = vmatpush1.bf16.msra.mxu0 %v272
  %353 = vmatprep.subr.bf16.mxu0 0
  %354 = vmatpush1.bf16.msra.mxu0 %v273
  %355 = vmatprep.subr.bf16.mxu0 0
  %356 = vmatpush1.bf16.msra.mxu0 %v274
  %357 = vmatprep.subr.bf16.mxu0 0
  %358 = vmatpush1.bf16.msra.mxu0 %v275
  %359 = vmatprep.subr.bf16.mxu0 0
  %360 = vmatpush1.bf16.msra.mxu0 %v276
  %361 = vmatprep.subr.bf16.mxu0 0
  %362 = vmatpush1.bf16.msra.mxu0 %v277
  %363 = vmatprep.subr.bf16.mxu0 0
  %364 = vmatpush1.bf16.msra.mxu0 %v278
  %365 = vmatprep.subr.bf16.mxu0 0
  %366 = vmatpush1.bf16.msra.mxu0 %v279
  %367 = vmatprep.subr.bf16.mxu0 0
  %368 = vmatpush1.bf16.msra.mxu0 %v280
  %369 = vmatprep.subr.bf16.mxu0 0
  %370 = vmatpush1.bf16.msra.mxu0 %v281
  %371 = vmatprep.subr.bf16.mxu0 0
  %372 = vmatpush1.bf16.msra.mxu0 %v282
  %373 = vmatprep.subr.bf16.mxu0 0
  %374 = vmatpush1.bf16.msra.mxu0 %v283
  %375 = vmatprep.subr.bf16.mxu0 0
  %376 = vmatpush1.bf16.msra.mxu0 %v284
  %377 = vmatprep.mubr.bf16.mxu0 %v117
  %378 = vmatmul.mubr.bf16.gmra.mrb[0].mxu0 %v116
  %v379 = vpop.f32.mrb[0].mxu0
  %v380 = vadd.f32 %v98, %v379
  %v381 = vpop.f32.mrb[0].mxu0
  %v382 = vpop.f32.mrb[0].mxu0
  %v383 = vadd.f32 %v98, %v382
  %v384 = vpop.f32.mrb[0].mxu0
  %385 = vdwg.mxu0
  %386 = vmatprep.subr.bf16.mxu0 0
  %387 = vmatpush1.bf16.msra.mxu0 %v285
  %388 = vmatprep.subr.bf16.mxu0 0
  %389 = vmatpush1.bf16.msra.mxu0 %v286
  %390 = vmatprep.subr.bf16.mxu0 0
  %391 = vmatpush1.bf16.msra.mxu0 %v287
  %392 = vmatprep.subr.bf16.mxu0 0
  %393 = vmatpush1.bf16.msra.mxu0 %v288
  %394 = vmatprep.subr.bf16.mxu0 0
  %395 = vmatpush1.bf16.msra.mxu0 %v289
  %396 = vmatprep.subr.bf16.mxu0 0
  %397 = vmatpush1.bf16.msra.mxu0 %v290
  %398 = vmatprep.subr.bf16.mxu0 0
  %399 = vmatpush1.bf16.msra.mxu0 %v291
  %400 = vmatprep.subr.bf16.mxu0 0
  %401 = vmatpush1.bf16.msra.mxu0 %v292
  %402 = vmatprep.subr.bf16.mxu0 0
  %403 = vmatpush1.bf16.msra.mxu0 %v293
  %404 = vmatprep.subr.bf16.mxu0 0
  %405 = vmatpush1.bf16.msra.mxu0 %v294
  %406 = vmatprep.subr.bf16.mxu0 0
  %407 = vmatpush1.bf16.msra.mxu0 %v295
  %408 = vmatprep.subr.bf16.mxu0 0
  %409 = vmatpush1.bf16.msra.mxu0 %v296
  %410 = vmatprep.subr.bf16.mxu0 0
  %411 = vmatpush1.bf16.msra.mxu0 %v297
  %412 = vmatprep.subr.bf16.mxu0 0
  %413 = vmatpush1.bf16.msra.mxu0 %v298
  %414 = vmatprep.subr.bf16.mxu0 0
  %415 = vmatpush1.bf16.msra.mxu0 %v299
  %416 = vmatprep.subr.bf16.mxu0 0
  %417 = vmatpush1.bf16.msra.mxu0 %v300
  %418 = vmatprep.mubr.bf16.mxu0 %v119
  %419 = vmatmul.mubr.bf16.gmra.mrb[0].mxu0 %v118
  %v420 = vpop.f32.mrb[0].mxu0
  %v421 = vadd.f32 %v380, %v420
  %v422 = vpop.f32.mrb[0].mxu0
  %v423 = vpop.f32.mrb[0].mxu0
  %v424 = vadd.f32 %v383, %v423
  %v425 = vpop.f32.mrb[0].mxu0
  %426 = vdwg.mxu0
  %427 = vmatprep.subr.bf16.mxu0 0
  %428 = vmatpush1.bf16.msra.mxu0 %v301
  %429 = vmatprep.subr.bf16.mxu0 0
  %430 = vmatpush1.bf16.msra.mxu0 %v302
  %431 = vmatprep.subr.bf16.mxu0 0
  %432 = vmatpush1.bf16.msra.mxu0 %v303
  %433 = vmatprep.subr.bf16.mxu0 0
  %434 = vmatpush1.bf16.msra.mxu0 %v304
  %435 = vmatprep.subr.bf16.mxu0 0
  %436 = vmatpush1.bf16.msra.mxu0 0
  %437 = vmatprep.subr.bf16.mxu0 0
  %438 = vmatpush1.bf16.msra.mxu0 0
  %439 = vmatprep.subr.bf16.mxu0 0
  %440 = vmatpush1.bf16.msra.mxu0 0
  %441 = vmatprep.subr.bf16.mxu0 0
  %442 = vmatpush1.bf16.msra.mxu0 0
  %443 = vmatprep.subr.bf16.mxu0 0
  %444 = vmatpush1.bf16.msra.mxu0 0
  %445 = vmatprep.subr.bf16.mxu0 0
  %446 = vmatpush1.bf16.msra.mxu0 0
  %447 = vmatprep.subr.bf16.mxu0 0
  %448 = vmatpush1.bf16.msra.mxu0 0
  %449 = vmatprep.subr.bf16.mxu0 0
  %450 = vmatpush1.bf16.msra.mxu0 0
  %451 = vmatprep.subr.bf16.mxu0 0
  %452 = vmatpush1.bf16.msra.mxu0 0
  %453 = vmatprep.subr.bf16.mxu0 0
  %454 = vmatpush1.bf16.msra.mxu0 0
  %455 = vmatprep.subr.bf16.mxu0 0
  %456 = vmatpush1.bf16.msra.mxu0 0
  %457 = vmatprep.subr.bf16.mxu0 0
  %458 = vmatpush1.bf16.msra.mxu0 0
  %459 = vmatprep.mubr.bf16.mxu0 0
  %460 = vmatmul.mubr.bf16.gmra.mrb[0].mxu0 %v343
  %v461 = vpop.f32.mrb[0].mxu0
  %v462 = vadd.f32 %v421, %v461
  %v463 = vpop.f32.mrb[0].mxu0
  %v464 = vpop.f32.mrb[0].mxu0
  %v465 = vadd.f32 %v424, %v464
  %v466 = vpop.f32.mrb[0].mxu0
  %467 = vdwg.mxu0
  %v468 = vmax.f32 %v462, 0.0
  %v469 = vmax.f32 %v465, 0.0
  %v470 = vpack.c.bf16 %v469, %v468
  %v472 = vunpack.c.l.b16 %v470
  %v473 = vunpack.c.h.b16 %v470
  %v474 = vpack.c.b16 %v472, %v472
  %v475 = vpack.c.b16 %v473, %v473
  %478 = vst [vmem:[%s3] sm:$0xf] %v474
  %479 = vst [vmem:[%s3 + $0x4] sm:$0xf] %v475
  // Predicated region
  $region14: #{_lambda_.33} parent=0 // pred_check
    _
  $region15: #{_lambda_.33} parent=0 // pred_check_branch
    %481 = sbr.rel (0) target = $region17
  $region16: #{_lambda_.33} parent=0 // pred_region
    _
  $region17: #{_lambda_.33} parent=0 // pred_fallthru
    _
  // Predicated region
  $region18: #{_lambda_.33} parent=0 // pred_check
    _
  $region19: #{_lambda_.33} parent=0 // pred_check_branch
    %483 = sbr.rel (0) target = $region21
  $region20: #{_lambda_.33} parent=0 // pred_region
    _
  $region21: #{_lambda_.33} parent=0 // pred_fallthru
    _

// kernel: _lambda_.32
$region0: #{_lambda_.32}
  #allocation0 [shape = 'u32[]', space=smem, size = 0x4, offset = 0x4, fixed_abs, tag = 'smem constant byte address 0x4 - core index']
  #allocation1 [shape = 'u32[144,128]{1,0:T(1,128)}', space=vmem, size = 0x12000, scoped, tag = 'internal scratch']
  %s0 = inlined_call_operand.vmem [shape: bf16[16,576], index: 0, kind: input, shape index: {}]
  %s1 = inlined_call_operand.vmem [shape: bf16[576,128], index: 1, kind: input, shape index: {}]
  %s2 = inlined_call_operand.vmem [shape: f32[1,128], index: 2, kind: input, shape index: {}]
  %s3 = inlined_call_operand.vmem [shape: bf16[16,128], index: 3, kind: input, shape index: {}]
  %s4 = inlined_call_operand.vmem [shape: bf16[16,128], index: 4, kind: output, shape index: {}]
  %s5 = sld [smem:[#allocation0]]
  $region26: #{_lambda_.32} parent=0
    _
  %s7 = ssub.s32 1, %s5
  %s8 = scalar_select 0, %s7, %s5
  // Predicated region
  $region2: #{_lambda_.32} parent=0 // pred_check
    _
  $region3: #{_lambda_.32} parent=0 // pred_check_branch
    %10 = sbr.rel (0) target = $region5
  $region4: #{_lambda_.32} parent=0 // pred_region
    _
  $region5: #{_lambda_.32} parent=0 // pred_fallthru
    _
  // Predicated region
  $region6: #{_lambda_.32} parent=0 // pred_check
    _
  $region7: #{_lambda_.32} parent=0 // pred_check_branch
    %12 = sbr.rel (0) target = $region9
  $region8: #{_lambda_.32} parent=0 // pred_region
    _
  $region9: #{_lambda_.32} parent=0 // pred_fallthru
    _
  // Predicated region
  $region10: #{_lambda_.32} parent=0 // pred_check
    _
  $region11: #{_lambda_.32} parent=0 // pred_check_branch
    %14 = sbr.rel (0) target = $region13
  $region12: #{_lambda_.32} parent=0 // pred_region
    _
  $region13: #{_lambda_.32} parent=0 // pred_fallthru
    _
  // Predicated region
  $region14: #{_lambda_.32} parent=0 // pred_check
    _
  $region15: #{_lambda_.32} parent=0 // pred_check_branch
    %16 = sbr.rel (0) target = $region17
  $region16: #{_lambda_.32} parent=0 // pred_region
    _
  $region17: #{_lambda_.32} parent=0 // pred_fallthru
    _
  %v18 = vld [vmem:[%s0] sm:$0xff]
  %v19 = vld [vmem:[%s0 + $0x8] sm:$0xff]
  %v20 = vld [vmem:[%s0 + $0x10] sm:$0xf]
  %v21 = vld [vmem:[%s0 + $0x14] sm:$0xff]
  %v22 = vld [vmem:[%s0 + $0x1c] sm:$0xff]
  %v23 = vld [vmem:[%s0 + $0x24] sm:$0xf]
  %v24 = vld [vmem:[%s1] sm:$0xf]
  %v25 = vld [vmem:[%s1 + $0x4] sm:$0xf]
  %v26 = vld [vmem:[%s1 + $0x8] sm:$0xf]
  %v27 = vld [vmem:[%s1 + $0xc] sm:$0xf]
  %v28 = vld [vmem:[%s1 + $0x10] sm:$0xf]
  %v29 = vld [vmem:[%s1 + $0x14] sm:$0xf]
  %v30 = vld [vmem:[%s1 + $0x18] sm:$0xf]
  %v31 = vld [vmem:[%s1 + $0x1c] sm:$0xf]
  %v32 = vld [vmem:[%s1 + $0x20] sm:$0xf]
  %v33 = vld [vmem:[%s1 + $0x24] sm:$0xf]
  %v34 = vld [vmem:[%s1 + $0x28] sm:$0xf]
  %v35 = vld [vmem:[%s1 + $0x2c] sm:$0xf]
  %v36 = vld [vmem:[%s1 + $0x30] sm:$0xf]
  %v37 = vld [vmem:[%s1 + $0x34] sm:$0xf]
  %v38 = vld [vmem:[%s1 + $0x38] sm:$0xf]
  %v39 = vld [vmem:[%s1 + $0x3c] sm:$0xf]
  %v40 = vld [vmem:[%s1 + $0x40] sm:$0xf]
  %v41 = vld [vmem:[%s1 + $0x44] sm:$0xf]
  %v42 = vld [vmem:[%s1 + $0x48] sm:$0xf]
  %v43 = vld [vmem:[%s1 + $0x4c] sm:$0xf]
  %v44 = vld [vmem:[%s1 + $0x50] sm:$0xf]
  %v45 = vld [vmem:[%s1 + $0x54] sm:$0xf]
  %v46 = vld [vmem:[%s1 + $0x58] sm:$0xf]
  %v47 = vld [vmem:[%s1 + $0x5c] sm:$0xf]
  %v48 = vld [vmem:[%s1 + $0x60] sm:$0xf]
  %v49 = vld [vmem:[%s1 + $0x64] sm:$0xf]
  %v50 = vld [vmem:[%s1 + $0x68] sm:$0xf]
  %v51 = vld [vmem:[%s1 + $0x6c] sm:$0xf]
  %v52 = vld [vmem:[%s1 + $0x70] sm:$0xf]
  %v53 = vld [vmem:[%s1 + $0x74] sm:$0xf]
  %v54 = vld [vmem:[%s1 + $0x78] sm:$0xf]
  %v55 = vld [vmem:[%s1 + $0x7c] sm:$0xf]
  %v56 = vld [vmem:[%s1 + $0x80] sm:$0xf]
  %v57 = vld [vmem:[%s1 + $0x84] sm:$0xf]
  %v58 = vld [vmem:[%s1 + $0x88] sm:$0xf]
  %v59 = vld [vmem:[%s1 + $0x8c] sm:$0xf]
  %v60 = vld [vmem:[%s1 + $0x90] sm:$0xf]
  %v61 = vld [vmem:[%s1 + $0x94] sm:$0xf]
  %v62 = vld [vmem:[%s1 + $0x98] sm:$0xf]
  %v63 = vld [vmem:[%s1 + $0x9c] sm:$0xf]
  %v64 = vld [vmem:[%s1 + $0xa0] sm:$0xf]
  %v65 = vld [vmem:[%s1 + $0xa4] sm:$0xf]
  %v66 = vld [vmem:[%s1 + $0xa8] sm:$0xf]
  %v67 = vld [vmem:[%s1 + $0xac] sm:$0xf]
  %v68 = vld [vmem:[%s1 + $0xb0] sm:$0xf]
  %v69 = vld [vmem:[%s1 + $0xb4] sm:$0xf]
  %v70 = vld [vmem:[%s1 + $0xb8] sm:$0xf]
  %v71 = vld [vmem:[%s1 + $0xbc] sm:$0xf]
  %v72 = vld [vmem:[%s1 + $0xc0] sm:$0xf]
  %v73 = vld [vmem:[%s1 + $0xc4] sm:$0xf]
  %v74 = vld [vmem:[%s1 + $0xc8] sm:$0xf]
  %v75 = vld [vmem:[%s1 + $0xcc] sm:$0xf]
  %v76 = vld [vmem:[%s1 + $0xd0] sm:$0xf]
  %v77 = vld [vmem:[%s1 + $0xd4] sm:$0xf]
  %v78 = vld [vmem:[%s1 + $0xd8] sm:$0xf]
  %v79 = vld [vmem:[%s1 + $0xdc] sm:$0xf]
  %v80 = vld [vmem:[%s1 + $0xe0] sm:$0xf]
  %v81 = vld [vmem:[%s1 + $0xe4] sm:$0xf]
  %v82 = vld [vmem:[%s1 + $0xe8] sm:$0xf]
  %v83 = vld [vmem:[%s1 + $0xec] sm:$0xf]
  %v84 = vld [vmem:[%s1 + $0xf0] sm:$0xf]
  %v85 = vld [vmem:[%s1 + $0xf4] sm:$0xf]
  %v86 = vld [vmem:[%s1 + $0xf8] sm:$0xf]
  %v87 = vld [vmem:[%s1 + $0xfc] sm:$0xf]
  %v88 = vld [vmem:[%s1 + $0x100] sm:$0xf]
  %v89 = vld [vmem:[%s1 + $0x104] sm:$0xf]
  %v90 = vld [vmem:[%s1 + $0x108] sm:$0xf]
  %v91 = vld [vmem:[%s1 + $0x10c] sm:$0xf]
  %v92 = vld [vmem:[%s1 + $0x110] sm:$0xf]
  %v93 = vld [vmem:[%s1 + $0x114] sm:$0xf]
  %v94 = vld [vmem:[%s1 + $0x118] sm:$0xf]
  %v95 = vld [vmem:[%s1 + $0x11c] sm:$0xf]
  %v96 = vld [vmem:[%s2] sm:$0x1]
  %v98 = vlaneseq
  %v99 = vshrl.u32 %v98, 7
  %v100 = vsub.s32 0, %v99
  %v101 = vrot.slane %v96, %v100
  %v109 = vunpack.c.l.b16 %v18
  %v110 = vunpack.c.h.b16 %v18
  %v111 = vunpack.c.l.b16 %v19
  %v112 = vunpack.c.h.b16 %v19
  %v113 = vunpack.c.l.b16 %v20
  %v114 = vunpack.c.l.b16 %v21
  %v115 = vunpack.c.h.b16 %v21
  %v116 = vunpack.c.l.b16 %v22
  %v117 = vunpack.c.h.b16 %v22
  %v118 = vunpack.c.l.b16 %v23
  %v119 = vpack.c.b16 %v114, %v109
  %v120 = vpack.c.b16 %v115, %v110
  %v121 = vpack.c.b16 %v116, %v111
  %v122 = vpack.c.b16 %v117, %v112
  %v123 = vpack.c.b16 %v118, %v113
  %v200 = vunpack.c.l.b16 %v24
  %v201 = vunpack.c.l.b16 %v25
  %v202 = vunpack.c.l.b16 %v26
  %v203 = vunpack.c.l.b16 %v27
  %v204 = vunpack.c.l.b16 %v28
  %v205 = vunpack.c.l.b16 %v29
  %v206 = vunpack.c.l.b16 %v30
  %v207 = vunpack.c.l.b16 %v31
  %v208 = vunpack.c.l.b16 %v32
  %v209 = vunpack.c.l.b16 %v33
  %v210 = vunpack.c.l.b16 %v34
  %v211 = vunpack.c.l.b16 %v35
  %v212 = vunpack.c.l.b16 %v36
  %v213 = vunpack.c.l.b16 %v37
  %v214 = vunpack.c.l.b16 %v38
  %v215 = vunpack.c.l.b16 %v39
  %v216 = vunpack.c.l.b16 %v40
  %v217 = vunpack.c.l.b16 %v41
  %v218 = vunpack.c.l.b16 %v42
  %v219 = vunpack.c.l.b16 %v43
  %v220 = vunpack.c.l.b16 %v44
  %v221 = vunpack.c.l.b16 %v45
  %v222 = vunpack.c.l.b16 %v46
  %v223 = vunpack.c.l.b16 %v47
  %v224 = vunpack.c.l.b16 %v48
  %v225 = vunpack.c.l.b16 %v49
  %v226 = vunpack.c.l.b16 %v50
  %v227 = vunpack.c.l.b16 %v51
  %v228 = vunpack.c.l.b16 %v52
  %v229 = vunpack.c.l.b16 %v53
  %v230 = vunpack.c.l.b16 %v54
  %v231 = vunpack.c.l.b16 %v55
  %v232 = vunpack.c.l.b16 %v56
  %v233 = vunpack.c.l.b16 %v57
  %v234 = vunpack.c.l.b16 %v58
  %v235 = vunpack.c.l.b16 %v59
  %v236 = vunpack.c.l.b16 %v60
  %v237 = vunpack.c.l.b16 %v61
  %v238 = vunpack.c.l.b16 %v62
  %v239 = vunpack.c.l.b16 %v63
  %v240 = vunpack.c.l.b16 %v64
  %v241 = vunpack.c.l.b16 %v65
  %v242 = vunpack.c.l.b16 %v66
  %v243 = vunpack.c.l.b16 %v67
  %v244 = vunpack.c.l.b16 %v68
  %v245 = vunpack.c.l.b16 %v69
  %v246 = vunpack.c.l.b16 %v70
  %v247 = vunpack.c.l.b16 %v71
  %v248 = vunpack.c.l.b16 %v72
  %v249 = vunpack.c.l.b16 %v73
  %v250 = vunpack.c.l.b16 %v74
  %v251 = vunpack.c.l.b16 %v75
  %v252 = vunpack.c.l.b16 %v76
  %v253 = vunpack.c.l.b16 %v77
  %v254 = vunpack.c.l.b16 %v78
  %v255 = vunpack.c.l.b16 %v79
  %v256 = vunpack.c.l.b16 %v80
  %v257 = vunpack.c.l.b16 %v81
  %v258 = vunpack.c.l.b16 %v82
  %v259 = vunpack.c.l.b16 %v83
  %v260 = vunpack.c.l.b16 %v84
  %v261 = vunpack.c.l.b16 %v85
  %v262 = vunpack.c.l.b16 %v86
  %v263 = vunpack.c.l.b16 %v87
  %v264 = vunpack.c.l.b16 %v88
  %v265 = vunpack.c.l.b16 %v89
  %v266 = vunpack.c.l.b16 %v90
  %v267 = vunpack.c.l.b16 %v91
  %v268 = vunpack.c.l.b16 %v92
  %v269 = vunpack.c.l.b16 %v93
  %v270 = vunpack.c.l.b16 %v94
  %v271 = vunpack.c.l.b16 %v95
  %v272 = vpack.c.b16 %v201, %v200
  %v273 = vpack.c.b16 %v203, %v202
  %v274 = vpack.c.b16 %v205, %v204
  %v275 = vpack.c.b16 %v207, %v206
  %v276 = vpack.c.b16 %v209, %v208
  %v277 = vpack.c.b16 %v211, %v210
  %v278 = vpack.c.b16 %v213, %v212
  %v279 = vpack.c.b16 %v215, %v214
  %v280 = vpack.c.b16 %v217, %v216
  %v281 = vpack.c.b16 %v219, %v218
  %v282 = vpack.c.b16 %v221, %v220
  %v283 = vpack.c.b16 %v223, %v222
  %v284 = vpack.c.b16 %v225, %v224
  %v285 = vpack.c.b16 %v227, %v226
  %v286 = vpack.c.b16 %v229, %v228
  %v287 = vpack.c.b16 %v231, %v230
  %v288 = vpack.c.b16 %v233, %v232
  %v289 = vpack.c.b16 %v235, %v234
  %v290 = vpack.c.b16 %v237, %v236
  %v291 = vpack.c.b16 %v239, %v238
  %v292 = vpack.c.b16 %v241, %v240
  %v293 = vpack.c.b16 %v243, %v242
  %v294 = vpack.c.b16 %v245, %v244
  %v295 = vpack.c.b16 %v247, %v246
  %v296 = vpack.c.b16 %v249, %v248
  %v297 = vpack.c.b16 %v251, %v250
  %v298 = vpack.c.b16 %v253, %v252
  %v299 = vpack.c.b16 %v255, %v254
  %v300 = vpack.c.b16 %v257, %v256
  %v301 = vpack.c.b16 %v259, %v258
  %v302 = vpack.c.b16 %v261, %v260
  %v303 = vpack.c.b16 %v263, %v262
  %v304 = vpack.c.b16 %v265, %v264
  %v305 = vpack.c.b16 %v267, %v266
  %v306 = vpack.c.b16 %v269, %v268
  %v307 = vpack.c.b16 %v271, %v270
  %vm344 = vcmask 523264
  %v346 = vsel %vm344, %v123, 0
  %348 = vmatprep.subr.bf16.mxu0 0
  %349 = vmatpush1.bf16.msra.mxu0 %v272
  %350 = vmatprep.subr.bf16.mxu0 0
  %351 = vmatpush1.bf16.msra.mxu0 %v273
  %352 = vmatprep.subr.bf16.mxu0 0
  %353 = vmatpush1.bf16.msra.mxu0 %v274
  %354 = vmatprep.subr.bf16.mxu0 0
  %355 = vmatpush1.bf16.msra.mxu0 %v275
  %356 = vmatprep.subr.bf16.mxu0 0
  %357 = vmatpush1.bf16.msra.mxu0 %v276
  %358 = vmatprep.subr.bf16.mxu0 0
  %359 = vmatpush1.bf16.msra.mxu0 %v277
  %360 = vmatprep.subr.bf16.mxu0 0
  %361 = vmatpush1.bf16.msra.mxu0 %v278
  %362 = vmatprep.subr.bf16.mxu0 0
  %363 = vmatpush1.bf16.msra.mxu0 %v279
  %364 = vmatprep.subr.bf16.mxu0 0
  %365 = vmatpush1.bf16.msra.mxu0 %v280
  %366 = vmatprep.subr.bf16.mxu0 0
  %367 = vmatpush1.bf16.msra.mxu0 %v281
  %368 = vmatprep.subr.bf16.mxu0 0
  %369 = vmatpush1.bf16.msra.mxu0 %v282
  %370 = vmatprep.subr.bf16.mxu0 0
  %371 = vmatpush1.bf16.msra.mxu0 %v283
  %372 = vmatprep.subr.bf16.mxu0 0
  %373 = vmatpush1.bf16.msra.mxu0 %v284
  %374 = vmatprep.subr.bf16.mxu0 0
  %375 = vmatpush1.bf16.msra.mxu0 %v285
  %376 = vmatprep.subr.bf16.mxu0 0
  %377 = vmatpush1.bf16.msra.mxu0 %v286
  %378 = vmatprep.subr.bf16.mxu0 0
  %379 = vmatpush1.bf16.msra.mxu0 %v287
  %380 = vmatprep.mubr.bf16.mxu0 %v120
  %381 = vmatmul.mubr.bf16.gmra.mrb[0].mxu0 %v119
  %v382 = vpop.f32.mrb[0].mxu0
  %v383 = vadd.f32 %v101, %v382
  %v384 = vpop.f32.mrb[0].mxu0
  %v385 = vpop.f32.mrb[0].mxu0
  %v386 = vadd.f32 %v101, %v385
  %v387 = vpop.f32.mrb[0].mxu0
  %388 = vdwg.mxu0
  %389 = vmatprep.subr.bf16.mxu0 0
  %390 = vmatpush1.bf16.msra.mxu0 %v288
  %391 = vmatprep.subr.bf16.mxu0 0
  %392 = vmatpush1.bf16.msra.mxu0 %v289
  %393 = vmatprep.subr.bf16.mxu0 0
  %394 = vmatpush1.bf16.msra.mxu0 %v290
  %395 = vmatprep.subr.bf16.mxu0 0
  %396 = vmatpush1.bf16.msra.mxu0 %v291
  %397 = vmatprep.subr.bf16.mxu0 0
  %398 = vmatpush1.bf16.msra.mxu0 %v292
  %399 = vmatprep.subr.bf16.mxu0 0
  %400 = vmatpush1.bf16.msra.mxu0 %v293
  %401 = vmatprep.subr.bf16.mxu0 0
  %402 = vmatpush1.bf16.msra.mxu0 %v294
  %403 = vmatprep.subr.bf16.mxu0 0
  %404 = vmatpush1.bf16.msra.mxu0 %v295
  %405 = vmatprep.subr.bf16.mxu0 0
  %406 = vmatpush1.bf16.msra.mxu0 %v296
  %407 = vmatprep.subr.bf16.mxu0 0
  %408 = vmatpush1.bf16.msra.mxu0 %v297
  %409 = vmatprep.subr.bf16.mxu0 0
  %410 = vmatpush1.bf16.msra.mxu0 %v298
  %411 = vmatprep.subr.bf16.mxu0 0
  %412 = vmatpush1.bf16.msra.mxu0 %v299
  %413 = vmatprep.subr.bf16.mxu0 0
  %414 = vmatpush1.bf16.msra.mxu0 %v300
  %415 = vmatprep.subr.bf16.mxu0 0
  %416 = vmatpush1.bf16.msra.mxu0 %v301
  %417 = vmatprep.subr.bf16.mxu0 0
  %418 = vmatpush1.bf16.msra.mxu0 %v302
  %419 = vmatprep.subr.bf16.mxu0 0
  %420 = vmatpush1.bf16.msra.mxu0 %v303
  %421 = vmatprep.mubr.bf16.mxu0 %v122
  %422 = vmatmul.mubr.bf16.gmra.mrb[0].mxu0 %v121
  %v423 = vpop.f32.mrb[0].mxu0
  %v424 = vadd.f32 %v383, %v423
  %v425 = vpop.f32.mrb[0].mxu0
  %v426 = vpop.f32.mrb[0].mxu0
  %v427 = vadd.f32 %v386, %v426
  %v428 = vpop.f32.mrb[0].mxu0
  %429 = vdwg.mxu0
  %430 = vmatprep.subr.bf16.mxu0 0
  %431 = vmatpush1.bf16.msra.mxu0 %v304
  %432 = vmatprep.subr.bf16.mxu0 0
  %433 = vmatpush1.bf16.msra.mxu0 %v305
  %434 = vmatprep.subr.bf16.mxu0 0
  %435 = vmatpush1.bf16.msra.mxu0 %v306
  %436 = vmatprep.subr.bf16.mxu0 0
  %437 = vmatpush1.bf16.msra.mxu0 %v307
  %438 = vmatprep.subr.bf16.mxu0 0
  %439 = vmatpush1.bf16.msra.mxu0 0
  %440 = vmatprep.subr.bf16.mxu0 0
  %441 = vmatpush1.bf16.msra.mxu0 0
  %442 = vmatprep.subr.bf16.mxu0 0
  %443 = vmatpush1.bf16.msra.mxu0 0
  %444 = vmatprep.subr.bf16.mxu0 0
  %445 = vmatpush1.bf16.msra.mxu0 0
  %446 = vmatprep.subr.bf16.mxu0 0
  %447 = vmatpush1.bf16.msra.mxu0 0
  %448 = vmatprep.subr.bf16.mxu0 0
  %449 = vmatpush1.bf16.msra.mxu0 0
  %450 = vmatprep.subr.bf16.mxu0 0
  %451 = vmatpush1.bf16.msra.mxu0 0
  %452 = vmatprep.subr.bf16.mxu0 0
  %453 = vmatpush1.bf16.msra.mxu0 0
  %454 = vmatprep.subr.bf16.mxu0 0
  %455 = vmatpush1.bf16.msra.mxu0 0
  %456 = vmatprep.subr.bf16.mxu0 0
  %457 = vmatpush1.bf16.msra.mxu0 0
  %458 = vmatprep.subr.bf16.mxu0 0
  %459 = vmatpush1.bf16.msra.mxu0 0
  %460 = vmatprep.subr.bf16.mxu0 0
  %461 = vmatpush1.bf16.msra.mxu0 0
  %462 = vmatprep.mubr.bf16.mxu0 0
  %463 = vmatmul.mubr.bf16.gmra.mrb[0].mxu0 %v346
  %v464 = vpop.f32.mrb[0].mxu0
  %v465 = vadd.f32 %v424, %v464
  %v466 = vpop.f32.mrb[0].mxu0
  %v467 = vpop.f32.mrb[0].mxu0
  %v468 = vadd.f32 %v427, %v467
  %v469 = vpop.f32.mrb[0].mxu0
  %470 = vdwg.mxu0
  %v471 = vld [vmem:[%s3] sm:$0xf]
  %v472 = vld [vmem:[%s3 + $0x4] sm:$0xf]
  %v473 = vunpack.c.l.bf16 %v471
  %v474 = vunpack.c.l.bf16 %v472
  %v475 = vadd.f32 %v465, %v473
  %v476 = vadd.f32 %v468, %v474
  %v477 = vmax.f32 %v475, 0.0
  %v478 = vmax.f32 %v476, 0.0
  %v479 = vpack.c.bf16 %v478, %v477
  %v481 = vunpack.c.l.b16 %v479
  %v482 = vunpack.c.h.b16 %v479
  %v483 = vpack.c.b16 %v481, %v481
  %v484 = vpack.c.b16 %v482, %v482
  %487 = vst [vmem:[%s4] sm:$0xf] %v483
  %488 = vst [vmem:[%s4 + $0x4] sm:$0xf] %v484
  // Predicated region
  $region18: #{_lambda_.32} parent=0 // pred_check
    _
  $region19: #{_lambda_.32} parent=0 // pred_check_branch
    %490 = sbr.rel (0) target = $region21
  $region20: #{_lambda_.32} parent=0 // pred_region
    _
  $region21: #{_lambda_.32} parent=0 // pred_fallthru
    _
  // Predicated region
  $region22: #{_lambda_.32} parent=0 // pred_check
    _
  $region23: #{_lambda_.32} parent=0 // pred_check_branch
    %492 = sbr.rel (0) target = $region25
  $region24: #{_lambda_.32} parent=0 // pred_region
    _
  $region25: #{_lambda_.32} parent=0 // pred_fallthru
    _

// kernel: _lambda_.35
$region0: #{_lambda_.35}
  #allocation0 [shape = 'u32[]', space=smem, size = 0x4, offset = 0x4, fixed_abs, tag = 'smem constant byte address 0x4 - core index']
  #allocation1 [shape = 'u32[144,128]{1,0:T(1,128)}', space=vmem, size = 0x12000, scoped, tag = 'internal scratch']
  %s0 = inlined_call_operand.vmem [shape: bf16[512,176], index: 0, kind: input, shape index: {}]
  %s1 = inlined_call_operand.vmem [shape: bf16[176,128], index: 1, kind: input, shape index: {}]
  %s2 = inlined_call_operand.vmem [shape: f32[1,128], index: 2, kind: input, shape index: {}]
  %s3 = inlined_call_operand.vmem [shape: f32[512,128], index: 3, kind: output, shape index: {}]
  %s4 = sld [smem:[#allocation0]]
  $region45: #{_lambda_.35} parent=0
    _
  %s6 = ssub.s32 1, %s4
  %s7 = scalar_select 0, %s6, %s4
  loop: start=0, step=1, limit=4
  $region2: #{_lambda_.35} parent=0 // loop_pre_header
    _
  $region3: #{_lambda_.35} parent=0 // loop_header
    %s9 = sphi 0, %s13
    %p10 = scmp.ge.s32.totalorder %s9, 4
    %s16 = sphi 0, %s28
    %s17 = sphi 0, %s24
    %s18 = sphi 0, %s16
    %s19 = sphi 0, %s17
    %s20 = sphi 0, %s18
    %s21 = sphi 0, %s19
    %s31 = sphi 0, %s33
    %s34 = sphi 0, %s31
    %s35 = sphi 0, %s34
    %s51 = sphi 0, %s35
    %s57 = sphi 0, %s59
    %s60 = sphi 0, %s57
    %s61 = sphi 0, %s60
    %s77 = sphi 0, %s61
    %s83 = sphi 0, %s85
    %s86 = sphi 0, %s83
    %s87 = sphi 0, %s86
    %s103 = sphi 0, %s87
    %s111 = sphi 0, %s113
    %s114 = sphi 0, %s111
    %s115 = sphi 0, %s114
    %s131 = sphi 0, %s115
  $region4: #{_lambda_.35} parent=0 // loop_header_branch
    %12 = sbr.rel (%p10) target = $region8
  $region5: #{_lambda_.35} parent=0 // loop_body
    %s14 = ssub.s32 %s9, 1
    %s15 = ssub.s32 %s9, 2
    %s22 = sadd.s32 1, %s17
    %p23 = scmp.ge.s32.totalorder %s22, 1
    %s24 = scalar_select %p23, 0, %s22
    %s25 = sadd.s32 1, %s16
    %s26 = scalar_select %p23, %s25, %s16
    %p27 = scmp.ge.s32.totalorder %s26, 2
    %s28 = scalar_select %p27, 0, %s26
    %s29 = ssub.s32 %s16, %s28
    %p30 = scmp.eq.s32.totalorder %s29, 0
    %s32 = sadd.s32 %s31, 1
    %s33 = scalar_select %p30, %s31, %s32
    %p36 = pneg %p30
    %p37 = scmp.eq.s32.totalorder %s9, 1
    %p38 = por %p36, %p37
    %p39 = scmp.ne.s32.totalorder %s31, %s34
    %p40 = scmp.eq.s32.totalorder %s9, 0
    %p41 = por %p39, %p40
    %p42 = scmp.ne.s32.totalorder %s31, %s34
    %p43 = scmp.eq.s32.totalorder %s14, 1
    %p44 = por %p42, %p43
    %p45 = scmp.ne.s32.totalorder %s34, %s35
    %p46 = scmp.eq.s32.totalorder %s14, 0
    %p47 = por %p45, %p46
    %p48 = scmp.ne.s32.totalorder %s34, %s35
    %p49 = scmp.eq.s32.totalorder %s15, 1
    %p50 = por %p48, %p49
    %p52 = scmp.ne.s32.totalorder %s35, %s51
    %p53 = scmp.eq.s32.totalorder %s15, 0
    %p54 = por %p52, %p53
    %s55 = ssub.s32 %s17, %s24
    %p56 = scmp.eq.s32.totalorder %s55, 0
    %s58 = sadd.s32 %s57, 1
    %s59 = scalar_select %p56, %s57, %s58
    %p62 = pneg %p56
    %p63 = scmp.eq.s32.totalorder %s9, 1
    %p64 = por %p62, %p63
    %p65 = scmp.ne.s32.totalorder %s57, %s60
    %p66 = scmp.eq.s32.totalorder %s9, 0
    %p67 = por %p65, %p66
    %p68 = scmp.ne.s32.totalorder %s57, %s60
    %p69 = scmp.eq.s32.totalorder %s14, 1
    %p70 = por %p68, %p69
    %p71 = scmp.ne.s32.totalorder %s60, %s61
    %p72 = scmp.eq.s32.totalorder %s14, 0
    %p73 = por %p71, %p72
    %p74 = scmp.ne.s32.totalorder %s60, %s61
    %p75 = scmp.eq.s32.totalorder %s15, 1
    %p76 = por %p74, %p75
    %p78 = scmp.ne.s32.totalorder %s61, %s77
    %p79 = scmp.eq.s32.totalorder %s15, 0
    %p80 = por %p78, %p79
    %s81 = ssub.s32 %s17, %s24
    %p82 = scmp.eq.s32.totalorder %s81, 0
    %s84 = sadd.s32 %s83, 1
    %s85 = scalar_select %p82, %s83, %s84
    %p88 = pneg %p82
    %p89 = scmp.eq.s32.totalorder %s9, 1
    %p90 = por %p88, %p89
    %p91 = scmp.ne.s32.totalorder %s83, %s86
    %p92 = scmp.eq.s32.totalorder %s9, 0
    %p93 = por %p91, %p92
    %p94 = scmp.ne.s32.totalorder %s83, %s86
    %p95 = scmp.eq.s32.totalorder %s14, 1
    %p96 = por %p94, %p95
    %p97 = scmp.ne.s32.totalorder %s86, %s87
    %p98 = scmp.eq.s32.totalorder %s14, 0
    %p99 = por %p97, %p98
    %p100 = scmp.ne.s32.totalorder %s86, %s87
    %p101 = scmp.eq.s32.totalorder %s15, 1
    %p102 = por %p100, %p101
    %p104 = scmp.ne.s32.totalorder %s87, %s103
    %p105 = scmp.eq.s32.totalorder %s15, 0
    %p106 = por %p104, %p105
    %s107 = ssub.s32 %s16, %s28
    %s108 = ssub.s32 %s17, %s24
    %s109 = sor.u32 %s107, %s108
    %p110 = scmp.eq.s32.totalorder %s109, 0
    %s112 = sadd.s32 %s111, 1
    %s113 = scalar_select %p110, %s111, %s112
    %p116 = pneg %p110
    %p117 = scmp.eq.s32.totalorder %s9, 1
    %p118 = por %p116, %p117
    %p119 = scmp.ne.s32.totalorder %s111, %s114
    %p120 = scmp.eq.s32.totalorder %s9, 0
    %p121 = por %p119, %p120
    %p122 = scmp.ne.s32.totalorder %s111, %s114
    %p123 = scmp.eq.s32.totalorder %s14, 1
    %p124 = por %p122, %p123
    %p125 = scmp.ne.s32.totalorder %s114, %s115
    %p126 = scmp.eq.s32.totalorder %s14, 0
    %p127 = por %p125, %p126
    %p128 = scmp.ne.s32.totalorder %s114, %s115
    %p129 = scmp.eq.s32.totalorder %s15, 1
    %p130 = por %p128, %p129
    %p132 = scmp.ne.s32.totalorder %s115, %s131
    %p133 = scmp.eq.s32.totalorder %s15, 0
    %p134 = por %p132, %p133
    %p135 = scmp.le.s32.totalorder 1, %s9
    %p136 = scmp.lt.s32.totalorder %s9, 3
    %p137 = pnand %p135, %p136
    %p138 = pneg %p137
    // Predicated region
    $region9: #{_lambda_.35} parent=5 // pred_check
      _
    $region10: #{_lambda_.35} parent=5 // pred_check_branch
      %140 = sbr.rel (%p137) target = $region12
    $region11: #{_lambda_.35} parent=5 // pred_region
      %s141 = ssub.s32 %s9, 1
      // Predicated region
      $region13: #{_lambda_.35} parent=11 // pred_check
        %p142 = pneg %p73
      $region14: #{_lambda_.35} parent=11 // pred_check_branch
        %144 = sbr.rel (%p142) target = $region16
      $region15: #{_lambda_.35} parent=11 // pred_region
        %p145 = scmp.lt.s32.totalorder %s19, 0
        %s146 = scalar_select %p145, %s19, 0
        %s147 = smul.addr %s146, 4
        %s148 = scalar_lea.vmem %s1, %s147
      $region16: #{_lambda_.35} parent=11 // pred_fallthru
        _
      // Predicated region
      $region17: #{_lambda_.35} parent=11 // pred_check
        %p149 = pneg %p99
      $region18: #{_lambda_.35} parent=11 // pred_check_branch
        %151 = sbr.rel (%p149) target = $region20
      $region19: #{_lambda_.35} parent=11 // pred_region
        %p152 = scmp.lt.s32.totalorder %s19, 0
        %s153 = scalar_select %p152, %s19, 0
        %s154 = scalar_lea.vmem %s2, %s153
      $region20: #{_lambda_.35} parent=11 // pred_fallthru
        _
    $region12: #{_lambda_.35} parent=5 // pred_fallthru
      _
    %p155 = scmp.lt.s32.totalorder %s9, 2
    // Predicated region
    $region21: #{_lambda_.35} parent=5 // pred_check
      %p156 = pneg %p155
    $region22: #{_lambda_.35} parent=5 // pred_check_branch
      %158 = sbr.rel (%p156) target = $region24
    $region23: #{_lambda_.35} parent=5 // pred_region
      // Predicated region
      $region25: #{_lambda_.35} parent=23 // pred_check
        %p159 = pneg %p41
      $region26: #{_lambda_.35} parent=23 // pred_check_branch
        %161 = sbr.rel (%p159) target = $region28
      $region27: #{_lambda_.35} parent=23 // pred_region
        %s162 = smul.u32 32, %s16
        %p163 = scmp.lt.s32.totalorder %s162, 63
        %s164 = scalar_select %p163, %s162, 63
        %s165 = smul.addr %s164, 2
        %s166 = smul.addr %s165, 4
        %s167 = scalar_lea.vmem %s0, %s166
        %s168 = smul.u32 32, %s16
      $region28: #{_lambda_.35} parent=23 // pred_fallthru
        _
    $region24: #{_lambda_.35} parent=5 // pred_fallthru
      _
    %p169 = scmp.le.s32.totalorder 1, %s9
    %p170 = scmp.lt.s32.totalorder %s9, 3
    %p171 = pnand %p169, %p170
    %p172 = pneg %p171
    // Predicated region
    $region29: #{_lambda_.35} parent=5 // pred_check
      _
    $region30: #{_lambda_.35} parent=5 // pred_check_branch
      %174 = sbr.rel (%p171) target = $region32
    $region31: #{_lambda_.35} parent=5 // pred_region
      %s175 = ssub.s32 %s9, 1
      %s176 = smul.u32 32, %s18
      %p177 = scmp.lt.s32.totalorder %s176, 63
      %s178 = scalar_select %p177, %s176, 63
      %s179 = smul.addr %s178, 2
      %s180 = smul.addr %s179, 4
      %s181 = scalar_lea.vmem %s0, %s180
      %p182 = pneg %p47
      %p183 = pneg %p44
      %p184 = scmp.lt.s32.totalorder %s19, 0
      %s185 = scalar_select %p184, %s19, 0
      %s186 = smul.addr %s185, 4
      %s187 = scalar_lea.vmem %s1, %s186
      %p188 = pneg %p73
      %p189 = pneg %p70
      %p190 = scmp.lt.s32.totalorder %s19, 0
      %s191 = scalar_select %p190, %s19, 0
      %s192 = scalar_lea.vmem %s2, %s191
      %p193 = pneg %p99
      %p194 = pneg %p96
      %p195 = pneg %p127
      %p196 = pneg %p124
      %s197 = smul.u32 32, %s18
      %p198 = scmp.lt.s32.totalorder %s197, 63
      %s199 = scalar_select %p198, %s197, 63
      %p200 = scmp.lt.s32.totalorder %s19, 0
      %s201 = scalar_select %p200, %s19, 0
      %s202 = sadd.s32 %s201, %s199
      %s203 = smul.addr %s202, 8
      %s204 = scalar_lea.vmem %s3, %s203
      %s205 = smul.u32 32, %s18
      %p206 = scmp.lt.s32.totalorder %s205, 63
      %s207 = scalar_select %p206, %s205, 63
      %s208 = smul.addr %s207, 2
      %s209 = smul.addr %s208, 4
      %s210 = scalar_lea.vmem %s0, %s209
      %s211 = smul.u32 32, %s18
      %p212 = scmp.lt.s32.totalorder %s19, 0
      %s213 = scalar_select %p212, %s19, 0
      %s214 = smul.addr %s213, 4
      %s215 = scalar_lea.vmem %s1, %s214
      %p216 = scmp.lt.s32.totalorder %s19, 0
      %s217 = scalar_select %p216, %s19, 0
      %s218 = scalar_lea.vmem %s2, %s217
      %s219 = smul.u32 32, %s18
      %p220 = scmp.lt.s32.totalorder %s219, 63
      %s221 = scalar_select %p220, %s219, 63
      %p222 = scmp.lt.s32.totalorder %s19, 0
      %s223 = scalar_select %p222, %s19, 0
      %s224 = sadd.s32 %s223, %s221
      %s225 = smul.addr %s224, 8
      %s226 = scalar_lea.vmem %s3, %s225
      %s227 = smul.u32 32, %s18
      %v229 = vld [vmem:[%s210] sm:$0xff]
      %v230 = vld [vmem:[%s210 + $0x8] sm:$0xff]
      %v231 = vld [vmem:[%s210 + $0x10] sm:$0xff]
      %v232 = vld [vmem:[%s210 + $0x18] sm:$0xff]
      %v233 = vld [vmem:[%s210 + $0x20] sm:$0xff]
      %v234 = vld [vmem:[%s210 + $0x28] sm:$0xff]
      %v235 = vld [vmem:[%s210 + $0x30] sm:$0xff]
      %v236 = vld [vmem:[%s210 + $0x38] sm:$0xff]
      %v237 = vld [vmem:[%s210 + $0x40] sm:$0xff]
      %v238 = vld [vmem:[%s210 + $0x48] sm:$0xff]
      %v239 = vld [vmem:[%s210 + $0x50] sm:$0xff]
      %v240 = vld [vmem:[%s210 + $0x58] sm:$0xff]
      %v241 = vld [vmem:[%s210 + $0x60] sm:$0xff]
      %v242 = vld [vmem:[%s210 + $0x68] sm:$0xff]
      %v243 = vld [vmem:[%s210 + $0x70] sm:$0xff]
      %v244 = vld [vmem:[%s210 + $0x78] sm:$0xff]
      %v245 = vld [vmem:[%s210 + $0x80] sm:$0xff]
      %v246 = vld [vmem:[%s210 + $0x88] sm:$0xff]
      %v247 = vld [vmem:[%s210 + $0x90] sm:$0xff]
      %v248 = vld [vmem:[%s210 + $0x98] sm:$0xff]
      %v249 = vld [vmem:[%s210 + $0xa0] sm:$0xff]
      %v250 = vld [vmem:[%s210 + $0xa8] sm:$0xff]
      %v251 = vld [vmem:[%s210 + $0xb0] sm:$0xff]
      %v252 = vld [vmem:[%s210 + $0xb8] sm:$0xff]
      %v253 = vld [vmem:[%s210 + $0xc0] sm:$0xff]
      %v254 = vld [vmem:[%s210 + $0xc8] sm:$0xff]
      %v255 = vld [vmem:[%s210 + $0xd0] sm:$0xff]
      %v256 = vld [vmem:[%s210 + $0xd8] sm:$0xff]
      %v257 = vld [vmem:[%s210 + $0xe0] sm:$0xff]
      %v258 = vld [vmem:[%s210 + $0xe8] sm:$0xff]
      %v259 = vld [vmem:[%s210 + $0xf0] sm:$0xff]
      %v260 = vld [vmem:[%s210 + $0xf8] sm:$0xff]
      %v261 = vld [vmem:[%s215] sm:$0xf]
      %v262 = vld [vmem:[%s215 + $0x4] sm:$0xf]
      %v263 = vld [vmem:[%s215 + $0x8] sm:$0xf]
      %v264 = vld [vmem:[%s215 + $0xc] sm:$0xf]
      %v265 = vld [vmem:[%s215 + $0x10] sm:$0xf]
      %v266 = vld [vmem:[%s215 + $0x14] sm:$0xf]
      %v267 = vld [vmem:[%s215 + $0x18] sm:$0xf]
      %v268 = vld [vmem:[%s215 + $0x1c] sm:$0xf]
      %v269 = vld [vmem:[%s215 + $0x20] sm:$0xf]
      %v270 = vld [vmem:[%s215 + $0x24] sm:$0xf]
      %v271 = vld [vmem:[%s215 + $0x28] sm:$0xf]
      %v272 = vld [vmem:[%s215 + $0x2c] sm:$0xf]
      %v273 = vld [vmem:[%s215 + $0x30] sm:$0xf]
      %v274 = vld [vmem:[%s215 + $0x34] sm:$0xf]
      %v275 = vld [vmem:[%s215 + $0x38] sm:$0xf]
      %v276 = vld [vmem:[%s215 + $0x3c] sm:$0xf]
      %v277 = vld [vmem:[%s215 + $0x40] sm:$0xf]
      %v278 = vld [vmem:[%s215 + $0x44] sm:$0xf]
      %v279 = vld [vmem:[%s215 + $0x48] sm:$0xf]
      %v280 = vld [vmem:[%s215 + $0x4c] sm:$0xf]
      %v281 = vld [vmem:[%s215 + $0x50] sm:$0xf]
      %v282 = vld [vmem:[%s215 + $0x54] sm:$0xf]
      %v283 = vld [vmem:[%s218] sm:$0x1]
      %v285 = vlaneseq
      %v286 = vshrl.u32 %v285, 7
      %v287 = vsub.s32 0, %v286
      %v288 = vrot.slane %v283, %v287
      %v322 = vunpack.c.l.b16 %v229
      %v323 = vunpack.c.h.b16 %v229
      %v324 = vunpack.c.l.b16 %v230
      %v325 = vunpack.c.h.b16 %v230
      %v326 = vunpack.c.l.b16 %v231
      %v327 = vunpack.c.h.b16 %v231
      %v328 = vunpack.c.l.b16 %v232
      %v329 = vunpack.c.h.b16 %v232
      %v330 = vunpack.c.l.b16 %v233
      %v331 = vunpack.c.h.b16 %v233
      %v332 = vunpack.c.l.b16 %v234
      %v333 = vunpack.c.h.b16 %v234
      %v334 = vunpack.c.l.b16 %v235
      %v335 = vunpack.c.h.b16 %v235
      %v336 = vunpack.c.l.b16 %v236
      %v337 = vunpack.c.h.b16 %v236
      %v338 = vunpack.c.l.b16 %v237
      %v339 = vunpack.c.h.b16 %v237
      %v340 = vunpack.c.l.b16 %v238
      %v341 = vunpack.c.h.b16 %v238
      %v342 = vunpack.c.l.b16 %v239
      %v343 = vunpack.c.h.b16 %v239
      %v344 = vunpack.c.l.b16 %v240
      %v345 = vunpack.c.h.b16 %v240
      %v346 = vunpack.c.l.b16 %v241
      %v347 = vunpack.c.h.b16 %v241
      %v348 = vunpack.c.l.b16 %v242
      %v349 = vunpack.c.h.b16 %v242
      %v350 = vunpack.c.l.b16 %v243
      %v351 = vunpack.c.h.b16 %v243
      %v352 = vunpack.c.l.b16 %v244
      %v353 = vunpack.c.h.b16 %v244
      %v354 = vunpack.c.l.b16 %v245
      %v355 = vunpack.c.h.b16 %v245
      %v356 = vunpack.c.l.b16 %v246
      %v357 = vunpack.c.h.b16 %v246
      %v358 = vunpack.c.l.b16 %v247
      %v359 = vunpack.c.h.b16 %v247
      %v360 = vunpack.c.l.b16 %v248
      %v361 = vunpack.c.h.b16 %v248
      %v362 = vunpack.c.l.b16 %v249
      %v363 = vunpack.c.h.b16 %v249
      %v364 = vunpack.c.l.b16 %v250
      %v365 = vunpack.c.h.b16 %v250
      %v366 = vunpack.c.l.b16 %v251
      %v367 = vunpack.c.h.b16 %v251
      %v368 = vunpack.c.l.b16 %v252
      %v369 = vunpack.c.h.b16 %v252
      %v370 = vunpack.c.l.b16 %v253
      %v371 = vunpack.c.h.b16 %v253
      %v372 = vunpack.c.l.b16 %v254
      %v373 = vunpack.c.h.b16 %v254
      %v374 = vunpack.c.l.b16 %v255
      %v375 = vunpack.c.h.b16 %v255
      %v376 = vunpack.c.l.b16 %v256
      %v377 = vunpack.c.h.b16 %v256
      %v378 = vunpack.c.l.b16 %v257
      %v379 = vunpack.c.h.b16 %v257
      %v380 = vunpack.c.l.b16 %v258
      %v381 = vunpack.c.h.b16 %v258
      %v382 = vunpack.c.l.b16 %v259
      %v383 = vunpack.c.h.b16 %v259
      %v384 = vunpack.c.l.b16 %v260
      %v385 = vunpack.c.h.b16 %v260
      %v386 = vpack.c.b16 %v324, %v322
      %v387 = vpack.c.b16 %v325, %v323
      %v388 = vpack.c.b16 %v328, %v326
      %v389 = vpack.c.b16 %v329, %v327
      %v390 = vpack.c.b16 %v332, %v330
      %v391 = vpack.c.b16 %v333, %v331
      %v392 = vpack.c.b16 %v336, %v334
      %v393 = vpack.c.b16 %v337, %v335
      %v394 = vpack.c.b16 %v340, %v338
      %v395 = vpack.c.b16 %v341, %v339
      %v396 = vpack.c.b16 %v344, %v342
      %v397 = vpack.c.b16 %v345, %v343
      %v398 = vpack.c.b16 %v348, %v346
      %v399 = vpack.c.b16 %v349, %v347
      %v400 = vpack.c.b16 %v352, %v350
      %v401 = vpack.c.b16 %v353, %v351
      %v402 = vpack.c.b16 %v356, %v354
      %v403 = vpack.c.b16 %v357, %v355
      %v404 = vpack.c.b16 %v360, %v358
      %v405 = vpack.c.b16 %v361, %v359
      %v406 = vpack.c.b16 %v364, %v362
      %v407 = vpack.c.b16 %v365, %v363
      %v408 = vpack.c.b16 %v368, %v366
      %v409 = vpack.c.b16 %v369, %v367
      %v410 = vpack.c.b16 %v372, %v370
      %v411 = vpack.c.b16 %v373, %v371
      %v412 = vpack.c.b16 %v376, %v374
      %v413 = vpack.c.b16 %v377, %v375
      %v414 = vpack.c.b16 %v380, %v378
      %v415 = vpack.c.b16 %v381, %v379
      %v416 = vpack.c.b16 %v384, %v382
      %v417 = vpack.c.b16 %v385, %v383
      %v456 = vunpack.c.l.b16 %v261
      %v457 = vunpack.c.l.b16 %v262
      %v458 = vunpack.c.l.b16 %v263
      %v459 = vunpack.c.l.b16 %v264
      %v460 = vunpack.c.l.b16 %v265
      %v461 = vunpack.c.l.b16 %v266
      %v462 = vunpack.c.l.b16 %v267
      %v463 = vunpack.c.l.b16 %v268
      %v464 = vunpack.c.l.b16 %v269
      %v465 = vunpack.c.l.b16 %v270
      %v466 = vunpack.c.l.b16 %v271
      %v467 = vunpack.c.l.b16 %v272
      %v468 = vunpack.c.l.b16 %v273
      %v469 = vunpack.c.l.b16 %v274
      %v470 = vunpack.c.l.b16 %v275
      %v471 = vunpack.c.l.b16 %v276
      %v472 = vunpack.c.l.b16 %v277
      %v473 = vunpack.c.l.b16 %v278
      %v474 = vunpack.c.l.b16 %v279
      %v475 = vunpack.c.l.b16 %v280
      %v476 = vunpack.c.l.b16 %v281
      %v477 = vunpack.c.l.b16 %v282
      %v478 = vpack.c.b16 %v457, %v456
      %v479 = vpack.c.b16 %v459, %v458
      %v480 = vpack.c.b16 %v461, %v460
      %v481 = vpack.c.b16 %v463, %v462
      %v482 = vpack.c.b16 %v465, %v464
      %v483 = vpack.c.b16 %v467, %v466
      %v484 = vpack.c.b16 %v469, %v468
      %v485 = vpack.c.b16 %v471, %v470
      %v486 = vpack.c.b16 %v473, %v472
      %v487 = vpack.c.b16 %v475, %v474
      %v488 = vpack.c.b16 %v477, %v476
      %vm500 = vcmask 392192
      %v502 = vsel %vm500, %v387, 0
      %v505 = vsel %vm500, %v389, 0
      %v508 = vsel %vm500, %v391, 0
      %v511 = vsel %vm500, %v393, 0
      %v514 = vsel %vm500, %v395, 0
      %v517 = vsel %vm500, %v397, 0
      %v520 = vsel %vm500, %v399, 0
      %v523 = vsel %vm500, %v401, 0
      %v526 = vsel %vm500, %v403, 0
      %v529 = vsel %vm500, %v405, 0
      %v532 = vsel %vm500, %v407, 0
      %v535 = vsel %vm500, %v409, 0
      %v538 = vsel %vm500, %v411, 0
      %v541 = vsel %vm500, %v413, 0
      %v544 = vsel %vm500, %v415, 0
      %v547 = vsel %vm500, %v417, 0
      %549 = vmatprep.subr.bf16.mxu0 0
      %550 = vmatpush1.bf16.msra.mxu0 %v478
      %551 = vmatprep.subr.bf16.mxu0 0
      %552 = vmatpush1.bf16.msra.mxu0 %v479
      %553 = vmatprep.subr.bf16.mxu0 0
      %554 = vmatpush1.bf16.msra.mxu0 %v480
      %555 = vmatprep.subr.bf16.mxu0 0
      %556 = vmatpush1.bf16.msra.mxu0 %v481
      %557 = vmatprep.subr.bf16.mxu0 0
      %558 = vmatpush1.bf16.msra.mxu0 %v482
      %559 = vmatprep.subr.bf16.mxu0 0
      %560 = vmatpush1.bf16.msra.mxu0 %v483
      %561 = vmatprep.subr.bf16.mxu0 0
      %562 = vmatpush1.bf16.msra.mxu0 %v484
      %563 = vmatprep.subr.bf16.mxu0 0
      %564 = vmatpush1.bf16.msra.mxu0 %v485
      %565 = vmatprep.subr.bf16.mxu0 0
      %566 = vmatpush1.bf16.msra.mxu0 %v486
      %567 = vmatprep.subr.bf16.mxu0 0
      %568 = vmatpush1.bf16.msra.mxu0 %v487
      %569 = vmatprep.subr.bf16.mxu0 0
      %570 = vmatpush1.bf16.msra.mxu0 %v488
      %571 = vmatprep.subr.bf16.mxu0 0
      %572 = vmatpush1.bf16.msra.mxu0 0
      %573 = vmatprep.subr.bf16.mxu0 0
      %574 = vmatpush1.bf16.msra.mxu0 0
      %575 = vmatprep.subr.bf16.mxu0 0
      %576 = vmatpush1.bf16.msra.mxu0 0
      %577 = vmatprep.subr.bf16.mxu0 0
      %578 = vmatpush1.bf16.msra.mxu0 0
      %579 = vmatprep.subr.bf16.mxu0 0
      %580 = vmatpush1.bf16.msra.mxu0 0
      %581 = vmatprep.mubr.bf16.mxu0 %v502
      %582 = vmatmul.mubr.bf16.gmra.mrb[0].mxu0 %v386
      %v583 = vpop.f32.mrb[0].mxu0
      %v584 = vadd.f32 %v288, %v583
      %v585 = vpop.f32.mrb[0].mxu0
      %v586 = vpop.f32.mrb[0].mxu0
      %v587 = vadd.f32 %v288, %v586
      %v588 = vpop.f32.mrb[0].mxu0
      %589 = vmatprep.mubr.bf16.mxu0 %v505
      %590 = vmatmul.mubr.bf16.gmra.mrb[0].mxu0 %v388
      %v591 = vpop.f32.mrb[0].mxu0
      %v592 = vadd.f32 %v288, %v591
      %v593 = vpop.f32.mrb[0].mxu0
      %v594 = vpop.f32.mrb[0].mxu0
      %v595 = vadd.f32 %v288, %v594
      %v596 = vpop.f32.mrb[0].mxu0
      %597 = vmatprep.mubr.bf16.mxu0 %v508
      %598 = vmatmul.mubr.bf16.gmra.mrb[0].mxu0 %v390
      %v599 = vpop.f32.mrb[0].mxu0
      %v600 = vadd.f32 %v288, %v599
      %v601 = vpop.f32.mrb[0].mxu0
      %v602 = vpop.f32.mrb[0].mxu0
      %v603 = vadd.f32 %v288, %v602
      %v604 = vpop.f32.mrb[0].mxu0
      %605 = vmatprep.mubr.bf16.mxu0 %v511
      %606 = vmatmul.mubr.bf16.gmra.mrb[0].mxu0 %v392
      %v607 = vpop.f32.mrb[0].mxu0
      %v608 = vadd.f32 %v288, %v607
      %v609 = vpop.f32.mrb[0].mxu0
      %v610 = vpop.f32.mrb[0].mxu0
      %v611 = vadd.f32 %v288, %v610
      %v612 = vpop.f32.mrb[0].mxu0
      %613 = vmatprep.mubr.bf16.mxu0 %v514
      %614 = vmatmul.mubr.bf16.gmra.mrb[0].mxu0 %v394
      %v615 = vpop.f32.mrb[0].mxu0
      %v616 = vadd.f32 %v288, %v615
      %v617 = vpop.f32.mrb[0].mxu0
      %v618 = vpop.f32.mrb[0].mxu0
      %v619 = vadd.f32 %v288, %v618
      %v620 = vpop.f32.mrb[0].mxu0
      %621 = vmatprep.mubr.bf16.mxu0 %v517
      %622 = vmatmul.mubr.bf16.gmra.mrb[0].mxu0 %v396
      %v623 = vpop.f32.mrb[0].mxu0
      %v624 = vadd.f32 %v288, %v623
      %v625 = vpop.f32.mrb[0].mxu0
      %v626 = vpop.f32.mrb[0].mxu0
      %v627 = vadd.f32 %v288, %v626
      %v628 = vpop.f32.mrb[0].mxu0
      %629 = vmatprep.mubr.bf16.mxu0 %v520
      %630 = vmatmul.mubr.bf16.gmra.mrb[0].mxu0 %v398
      %v631 = vpop.f32.mrb[0].mxu0
      %v632 = vadd.f32 %v288, %v631
      %v633 = vpop.f32.mrb[0].mxu0
      %v634 = vpop.f32.mrb[0].mxu0
      %v635 = vadd.f32 %v288, %v634
      %v636 = vpop.f32.mrb[0].mxu0
      %637 = vmatprep.mubr.bf16.mxu0 %v523
      %638 = vmatmul.mubr.bf16.gmra.mrb[0].mxu0 %v400
      %v639 = vpop.f32.mrb[0].mxu0
      %v640 = vadd.f32 %v288, %v639
      %v641 = vpop.f32.mrb[0].mxu0
      %v642 = vpop.f32.mrb[0].mxu0
      %v643 = vadd.f32 %v288, %v642
      %v644 = vpop.f32.mrb[0].mxu0
      %645 = vmatprep.mubr.bf16.mxu0 %v526
      %646 = vmatmul.mubr.bf16.gmra.mrb[0].mxu0 %v402
      %v647 = vpop.f32.mrb[0].mxu0
      %v648 = vadd.f32 %v288, %v647
      %v649 = vpop.f32.mrb[0].mxu0
      %v650 = vpop.f32.mrb[0].mxu0
      %v651 = vadd.f32 %v288, %v650
      %v652 = vpop.f32.mrb[0].mxu0
      %653 = vmatprep.mubr.bf16.mxu0 %v529
      %654 = vmatmul.mubr.bf16.gmra.mrb[0].mxu0 %v404
      %v655 = vpop.f32.mrb[0].mxu0
      %v656 = vadd.f32 %v288, %v655
      %v657 = vpop.f32.mrb[0].mxu0
      %v658 = vpop.f32.mrb[0].mxu0
      %v659 = vadd.f32 %v288, %v658
      %v660 = vpop.f32.mrb[0].mxu0
      %661 = vmatprep.mubr.bf16.mxu0 %v532
      %662 = vmatmul.mubr.bf16.gmra.mrb[0].mxu0 %v406
      %v663 = vpop.f32.mrb[0].mxu0
      %v664 = vadd.f32 %v288, %v663
      %v665 = vpop.f32.mrb[0].mxu0
      %v666 = vpop.f32.mrb[0].mxu0
      %v667 = vadd.f32 %v288, %v666
      %v668 = vpop.f32.mrb[0].mxu0
      %669 = vmatprep.mubr.bf16.mxu0 %v535
      %670 = vmatmul.mubr.bf16.gmra.mrb[0].mxu0 %v408
      %v671 = vpop.f32.mrb[0].mxu0
      %v672 = vadd.f32 %v288, %v671
      %v673 = vpop.f32.mrb[0].mxu0
      %v674 = vpop.f32.mrb[0].mxu0
      %v675 = vadd.f32 %v288, %v674
      %v676 = vpop.f32.mrb[0].mxu0
      %677 = vmatprep.mubr.bf16.mxu0 %v538
      %678 = vmatmul.mubr.bf16.gmra.mrb[0].mxu0 %v410
      %v679 = vpop.f32.mrb[0].mxu0
      %v680 = vadd.f32 %v288, %v679
      %v681 = vpop.f32.mrb[0].mxu0
      %v682 = vpop.f32.mrb[0].mxu0
      %v683 = vadd.f32 %v288, %v682
      %v684 = vpop.f32.mrb[0].mxu0
      %685 = vmatprep.mubr.bf16.mxu0 %v541
      %686 = vmatmul.mubr.bf16.gmra.mrb[0].mxu0 %v412
      %v687 = vpop.f32.mrb[0].mxu0
      %v688 = vadd.f32 %v288, %v687
      %v689 = vpop.f32.mrb[0].mxu0
      %v690 = vpop.f32.mrb[0].mxu0
      %v691 = vadd.f32 %v288, %v690
      %v692 = vpop.f32.mrb[0].mxu0
      %693 = vmatprep.mubr.bf16.mxu0 %v544
      %694 = vmatmul.mubr.bf16.gmra.mrb[0].mxu0 %v414
      %v695 = vpop.f32.mrb[0].mxu0
      %v696 = vadd.f32 %v288, %v695
      %v697 = vpop.f32.mrb[0].mxu0
      %v698 = vpop.f32.mrb[0].mxu0
      %v699 = vadd.f32 %v288, %v698
      %v700 = vpop.f32.mrb[0].mxu0
      %701 = vmatprep.mubr.bf16.mxu0 %v547
      %702 = vmatmul.mubr.bf16.gmra.mrb[0].mxu0 %v416
      %v703 = vpop.f32.mrb[0].mxu0
      %v704 = vadd.f32 %v288, %v703
      %v705 = vpop.f32.mrb[0].mxu0
      %v706 = vpop.f32.mrb[0].mxu0
      %v707 = vadd.f32 %v288, %v706
      %v708 = vpop.f32.mrb[0].mxu0
      %709 = vdwg.mxu0
      %710 = vst [vmem:[%s226] sm:$0xff] %v584
      %711 = vst [vmem:[%s226 + $0x8] sm:$0xff] %v587
      %712 = vst [vmem:[%s226 + $0x10] sm:$0xff] %v592
      %713 = vst [vmem:[%s226 + $0x18] sm:$0xff] %v595
      %714 = vst [vmem:[%s226 + $0x20] sm:$0xff] %v600
      %715 = vst [vmem:[%s226 + $0x28] sm:$0xff] %v603
      %716 = vst [vmem:[%s226 + $0x30] sm:$0xff] %v608
      %717 = vst [vmem:[%s226 + $0x38] sm:$0xff] %v611
      %718 = vst [vmem:[%s226 + $0x40] sm:$0xff] %v616
      %719 = vst [vmem:[%s226 + $0x48] sm:$0xff] %v619
      %720 = vst [vmem:[%s226 + $0x50] sm:$0xff] %v624
      %721 = vst [vmem:[%s226 + $0x58] sm:$0xff] %v627
      %722 = vst [vmem:[%s226 + $0x60] sm:$0xff] %v632
      %723 = vst [vmem:[%s226 + $0x68] sm:$0xff] %v635
      %724 = vst [vmem:[%s226 + $0x70] sm:$0xff] %v640
      %725 = vst [vmem:[%s226 + $0x78] sm:$0xff] %v643
      %726 = vst [vmem:[%s226 + $0x80] sm:$0xff] %v648
      %727 = vst [vmem:[%s226 + $0x88] sm:$0xff] %v651
      %728 = vst [vmem:[%s226 + $0x90] sm:$0xff] %v656
      %729 = vst [vmem:[%s226 + $0x98] sm:$0xff] %v659
      %730 = vst [vmem:[%s226 + $0xa0] sm:$0xff] %v664
      %731 = vst [vmem:[%s226 + $0xa8] sm:$0xff] %v667
      %732 = vst [vmem:[%s226 + $0xb0] sm:$0xff] %v672
      %733 = vst [vmem:[%s226 + $0xb8] sm:$0xff] %v675
      %734 = vst [vmem:[%s226 + $0xc0] sm:$0xff] %v680
      %735 = vst [vmem:[%s226 + $0xc8] sm:$0xff] %v683
      %736 = vst [vmem:[%s226 + $0xd0] sm:$0xff] %v688
      %737 = vst [vmem:[%s226 + $0xd8] sm:$0xff] %v691
      %738 = vst [vmem:[%s226 + $0xe0] sm:$0xff] %v696
      %739 = vst [vmem:[%s226 + $0xe8] sm:$0xff] %v699
      %740 = vst [vmem:[%s226 + $0xf0] sm:$0xff] %v704
      %741 = vst [vmem:[%s226 + $0xf8] sm:$0xff] %v707
      %s742 = smul.u32 32, %s18
      %p743 = scmp.lt.s32.totalorder %s742, 63
      %s744 = scalar_select %p743, %s742, 63
      %p745 = scmp.lt.s32.totalorder %s19, 0
      %s746 = scalar_select %p745, %s19, 0
      %s747 = sadd.s32 %s746, %s744
      %s748 = smul.addr %s747, 8
      %s749 = scalar_lea.vmem %s3, %s748
      // Predicated region
      $region33: #{_lambda_.35} parent=31 // pred_check
        %p750 = pneg %p124
      $region34: #{_lambda_.35} parent=31 // pred_check_branch
        %752 = sbr.rel (%p750) target = $region36
      $region35: #{_lambda_.35} parent=31 // pred_region
        %s753 = smul.u32 32, %s18
      $region36: #{_lambda_.35} parent=31 // pred_fallthru
        _
    $region32: #{_lambda_.35} parent=5 // pred_fallthru
      _
    %p754 = scmp.le.s32.totalorder 2, %s9
    // Predicated region
    $region37: #{_lambda_.35} parent=5 // pred_check
      %p755 = pneg %p754
    $region38: #{_lambda_.35} parent=5 // pred_check_branch
      %757 = sbr.rel (%p755) target = $region40
    $region39: #{_lambda_.35} parent=5 // pred_region
      %s758 = ssub.s32 %s9, 2
      // Predicated region
      $region41: #{_lambda_.35} parent=39 // pred_check
        %p759 = pneg %p130
      $region42: #{_lambda_.35} parent=39 // pred_check_branch
        %761 = sbr.rel (%p759) target = $region44
      $region43: #{_lambda_.35} parent=39 // pred_region
        %s762 = smul.u32 32, %s20
        %p763 = scmp.lt.s32.totalorder %s762, 63
        %s764 = scalar_select %p763, %s762, 63
        %p765 = scmp.lt.s32.totalorder %s21, 0
        %s766 = scalar_select %p765, %s21, 0
        %s767 = sadd.s32 %s766, %s764
        %s768 = smul.addr %s767, 8
        %s769 = scalar_lea.vmem %s3, %s768
      $region44: #{_lambda_.35} parent=39 // pred_fallthru
        _
    $region40: #{_lambda_.35} parent=5 // pred_fallthru
      _
  $region6: #{_lambda_.35} parent=0 // loop_footer
    %s13 = sadd.s32 1, %s9
  $region7: #{_lambda_.35} parent=0 // loop_footer_branch
    %8 = sbr.rel target = $region3
  $region8: #{_lambda_.35} parent=0 // loop_exit
    _

</llo_original>
